<compile_context>
chip_gen: v6e
topology: v6e:2x2x1
jax: 0.10.0
libtpu: 0.0.40
codegen_flags: <defaults>
</compile_context>

<pallas_src>
import functools

import jax
import jax.numpy as jnp
from jax import lax
from jax.experimental import pallas as pl
from jax.experimental.pallas import tpu as pltpu

BN_EPS = 1e-5
LANE = 128


def _round_up(x, m):
    return (x + m - 1) // m * m


# ----------------------------- Pallas kernels -----------------------------

def _conv1_fused_kernel(*refs, stride, has_sc):
    """relu(bn1(x)) -> conv1(3x3) -> relu(bn2(.)), plus optional 1x1 shortcut.

    refs (has_sc=True):  x, s1, b1, w1, s2, b2, wsc, out1, sc, pad_scratch
    refs (has_sc=False): x, s1, b1, w1, s2, b2, out1, pad_scratch
    """
    if has_sc:
        (x_ref, s1_ref, b1_ref, w1_ref, s2_ref, b2_ref, wsc_ref,
         o1_ref, sc_ref, pad_ref) = refs
    else:
        (x_ref, s1_ref, b1_ref, w1_ref, s2_ref, b2_ref,
         o1_ref, pad_ref) = refs
        wsc_ref = sc_ref = None

    _, H, W, Cin = x_ref.shape
    _, So, Wo, Cout = o1_ref.shape
    h = pl.program_id(1)

    # Build the zero-padded, bn1+relu1 transformed activation once per image
    # in persistent VMEM scratch (replaces the standalone bn_relu pass and the
    # jnp.pad HBM copy).  Elementwise math in f32, GEMM operand stored bf16.
    @pl.when(h == 0)
    def _():
        pad_ref[...] = jnp.zeros_like(pad_ref)
        a = jnp.maximum(
            x_ref[0].astype(jnp.float32) * s1_ref[0] + b1_ref[0], 0.0)
        pad_ref[1:H + 1, 1:W + 1, :] = a.astype(pad_ref.dtype)

    # Rows of the padded activation needed for this strip of So output rows.
    hspan = (So - 1) * stride + 1
    wspan = (Wo - 1) * stride + 1
    nrows = hspan + 2
    row0 = pl.multiple_of(h * (So * stride), So * stride)
    tile = pad_ref[pl.ds(row0, nrows), :, :]            # (nrows, W+2, Cin) bf16

    # im2col: one (So*Wo, 9*Cin) x (9*Cin, Cout) MXU matmul instead of nine
    # K=Cin matmuls.
    cols = []
    for ky in range(3):
        for kx in range(3):
            patch = tile[ky:ky + hspan:stride, kx:kx + wspan:stride, :]
            cols.append(patch.reshape(So * Wo, Cin))
    im2col = jnp.concatenate(cols, axis=-1)             # (So*Wo, 9*Cin) bf16
    acc = jnp.dot(im2col, w1_ref[...],
                  preferred_element_type=jnp.float32)   # (So*Wo, Cout) f32

    # Fused bn2 + relu2 epilogue (f32), stored bf16 for the next GEMM.
    o1 = jnp.maximum(acc * s2_ref[0] + b2_ref[0], 0.0)
    o1_ref[...] = o1.reshape(1, So, Wo, Cout).astype(o1_ref.dtype)

    if has_sc:
        # The 1x1 stride-s shortcut samples a[r*s, c*s], i.e. exactly the
        # centre (ky=1, kx=1) im2col tap -> reuse it (no extra HBM read).
        sc = jnp.dot(cols[4], wsc_ref[...],
                     preferred_element_type=jnp.float32)
        sc_ref[...] = sc.reshape(1, So, Wo, Cout).astype(sc_ref.dtype)


def _conv2_residual_kernel(y_ref, w2_ref, res_ref, o_ref, pad_ref):
    """3x3 conv2 (stride 1, pad 1) as an im2col matmul + fused residual add."""
    _, Ho, Wo, C = y_ref.shape
    _, So, _, Cout = o_ref.shape
    h = pl.program_id(1)

    @pl.when(h == 0)
    def _():
        pad_ref[...] = jnp.zeros_like(pad_ref)
        pad_ref[1:Ho + 1, 1:Wo + 1, :] = y_ref[0]

    row0 = pl.multiple_of(h * So, So)
    tile = pad_ref[pl.ds(row0, So + 2), :, :]            # (So+2, Wo+2, C) bf16
    cols = []
    for ky in range(3):
        for kx in range(3):
            cols.append(tile[ky:ky + So, kx:kx + Wo, :].reshape(So * Wo, C))
    im2col = jnp.concatenate(cols, axis=-1)              # (So*Wo, 9*C) bf16
    acc = jnp.dot(im2col, w2_ref[...],
                  preferred_element_type=jnp.float32)    # (So*Wo, Cout) f32
    out = acc.reshape(1, So, Wo, Cout) + res_ref[...].astype(jnp.float32)
    o_ref[...] = out.astype(o_ref.dtype)


# ------------------------------- wrappers ---------------------------------

def _strip(ho):
    return 8 if ho % 8 == 0 else ho


def conv1_fused(x_bf, s1, b1, w1, s2, b2, wsc, *, stride):
    N, H, W, Cin = x_bf.shape
    Cout = w1.shape[-1]
    Ho = (H - 1) // stride + 1
    Wo = (W - 1) // stride + 1
    So = _strip(Ho)
    n_strips = Ho // So
    has_sc = wsc is not None

    in_specs = [
        pl.BlockSpec((1, H, W, Cin), lambda n, h: (n, 0, 0, 0)),
        pl.BlockSpec((1, Cin), lambda n, h: (0, 0)),
        pl.BlockSpec((1, Cin), lambda n, h: (0, 0)),
        pl.BlockSpec((9 * Cin, Cout), lambda n, h: (0, 0)),
        pl.BlockSpec((1, Cout), lambda n, h: (0, 0)),
        pl.BlockSpec((1, Cout), lambda n, h: (0, 0)),
    ]
    args = [x_bf, s1, b1, w1, s2, b2]
    out_block = pl.BlockSpec((1, So, Wo, Cout), lambda n, h: (n, h, 0, 0))
    if has_sc:
        in_specs.append(pl.BlockSpec((Cin, Cout), lambda n, h: (0, 0)))
        args.append(wsc)
        out_shape = (jax.ShapeDtypeStruct((N, Ho, Wo, Cout), jnp.bfloat16),
                     jax.ShapeDtypeStruct((N, Ho, Wo, Cout), jnp.float32))
        out_specs = (out_block, out_block)
    else:
        out_shape = jax.ShapeDtypeStruct((N, Ho, Wo, Cout), jnp.bfloat16)
        out_specs = out_block

    return pl.pallas_call(
        functools.partial(_conv1_fused_kernel, stride=stride, has_sc=has_sc),
        out_shape=out_shape,
        grid=(N, n_strips),
        in_specs=in_specs,
        out_specs=out_specs,
        scratch_shapes=[pltpu.VMEM((H + 2, W + 2, Cin), jnp.bfloat16)],
        compiler_params=pltpu.CompilerParams(
            dimension_semantics=("parallel", "arbitrary")),
    )(*args)


def conv2_residual(y_bf, w2, residual):
    N, Ho, Wo, C = y_bf.shape
    Cout = w2.shape[-1]
    So = _strip(Ho)
    n_strips = Ho // So
    return pl.pallas_call(
        _conv2_residual_kernel,
        out_shape=jax.ShapeDtypeStruct((N, Ho, Wo, Cout), jnp.float32),
        grid=(N, n_strips),
        in_specs=[
            pl.BlockSpec((1, Ho, Wo, C), lambda n, h: (n, 0, 0, 0)),
            pl.BlockSpec((9 * C, Cout), lambda n, h: (0, 0)),
            pl.BlockSpec((1, So, Wo, Cout), lambda n, h: (n, h, 0, 0)),
        ],
        out_specs=pl.BlockSpec((1, So, Wo, Cout), lambda n, h: (n, h, 0, 0)),
        scratch_shapes=[pltpu.VMEM((Ho + 2, Wo + 2, C), jnp.bfloat16)],
        compiler_params=pltpu.CompilerParams(
            dimension_semantics=("parallel", "arbitrary")),
    )(y_bf, w2, residual)


# ------------------------- parameter preparation --------------------------

def _fold_bn_raw(gamma, beta, mean, var):
    inv = gamma / jnp.sqrt(var + BN_EPS)
    return inv, beta - mean * inv


def _fold_bn(gamma, beta, mean, var, c_pad):
    scale, bias = _fold_bn_raw(gamma, beta, mean, var)
    c = scale.shape[0]
    return (jnp.pad(scale, (0, c_pad - c)).reshape(1, c_pad).astype(jnp.float32),
            jnp.pad(bias, (0, c_pad - c)).reshape(1, c_pad).astype(jnp.float32))


def _prep_w3x3(w_oihw, cin_pad, cout_pad):
    w = jnp.transpose(w_oihw, (2, 3, 1, 0))                # OIHW -> HWIO
    kh, kw, cin, cout = w.shape
    w = jnp.pad(w, ((0, 0), (0, 0), (0, cin_pad - cin), (0, cout_pad - cout)))
    return w.reshape(kh * kw * cin_pad, cout_pad).astype(jnp.bfloat16)


def _prep_w1x1(w_oihw, cin_pad, cout_pad):
    w = jnp.transpose(w_oihw, (2, 3, 1, 0))[0, 0]          # (Cin, Cout)
    cin, cout = w.shape
    w = jnp.pad(w, ((0, cin_pad - cin), (0, cout_pad - cout)))
    return w.astype(jnp.bfloat16)


def init_basic_block_params(key, in_planes, out_planes):
    ks = jax.random.split(key, 8)
    p = {}
    p["bn1_gamma"] = jax.random.uniform(ks[0], (in_planes,), jnp.float32, 0.5, 1.5)
    p["bn1_beta"]  = jax.random.normal(ks[1], (in_planes,), jnp.float32) * 0.1
    p["bn1_mean"]  = jax.random.normal(ks[2], (in_planes,), jnp.float32) * 0.1
    p["bn1_var"]   = jax.random.uniform(ks[3], (in_planes,), jnp.float32, 0.5, 1.5)
    p["bn2_gamma"] = jax.random.uniform(ks[4], (out_planes,), jnp.float32, 0.5, 1.5)
    p["bn2_beta"]  = jax.random.normal(ks[5], (out_planes,), jnp.float32) * 0.1
    p["bn2_mean"]  = jax.random.normal(ks[6], (out_planes,), jnp.float32) * 0.1
    p["bn2_var"]   = jax.random.uniform(ks[7], (out_planes,), jnp.float32, 0.5, 1.5)
    kw = jax.random.split(jax.random.fold_in(key, 123), 3)
    p["conv1_w"]  = jax.random.normal(kw[0], (out_planes, in_planes, 3, 3), jnp.float32) * 0.1
    p["conv2_w"]  = jax.random.normal(kw[1], (out_planes, out_planes, 3, 3), jnp.float32) * 0.1
    p["convsc_w"] = jax.random.normal(kw[2], (out_planes, in_planes, 1, 1), jnp.float32) * 0.1
    return p


# ------------------------------ forward pass -------------------------------

def basic_block_forward(x_nchw, params, *, in_planes, out_planes, stride,
                        drop_rate=0.0):
    equal_in_out = in_planes == out_planes
    cin_p = _round_up(in_planes, LANE)
    cout_p = _round_up(out_planes, LANE)

    # Layout / lane-padding glue (would be hoisted to the model boundary).
    x = jnp.transpose(x_nchw, (0, 2, 3, 1))                              # NHWC
    x = jnp.pad(x, ((0, 0), (0, 0), (0, 0), (0, cin_p - in_planes)))
    x_bf = x.astype(jnp.bfloat16)

    s1, b1 = _fold_bn(params["bn1_gamma"], params["bn1_beta"],
                      params["bn1_mean"], params["bn1_var"], cin_p)
    s2, b2 = _fold_bn(params["bn2_gamma"], params["bn2_beta"],
                      params["bn2_mean"], params["bn2_var"], cout_p)
    w1 = _prep_w3x3(params["conv1_w"], cin_p, cout_p)
    w2 = _prep_w3x3(params["conv2_w"], cout_p, cout_p)

    if equal_in_out:
        out1 = conv1_fused(x_bf, s1, b1, w1, s2, b2, None, stride=stride)
        residual = x                                   # original x, f32, padded
    else:
        wsc = _prep_w1x1(params["convsc_w"], cin_p, cout_p)
        out1, residual = conv1_fused(x_bf, s1, b1, w1, s2, b2, wsc,
                                     stride=stride)    # convShortcut(relu(bn1(x)))

    # TODO(synk): F.dropout (drop_rate > 0, training mode) not implemented;
    # only the dropRate=0 / eval path is supported.

    y = conv2_residual(out1, w2, residual)             # conv2 + residual add
    return jnp.transpose(y[..., :out_planes], (0, 3, 1, 2))              # NCHW


# ------------------------------ JAX reference ------------------------------

def ref_forward(x_nchw, params, *, in_planes, out_planes, stride):
    """Pure-JAX reference with the same bf16-GEMM / f32-epilogue scheme."""
    equal_in_out = in_planes == out_planes
    x = jnp.transpose(x_nchw, (0, 2, 3, 1))

    def conv(v_bf16, w_oihw, s, pad):
        w = jnp.transpose(w_oihw, (2, 3, 1, 0)).astype(jnp.bfloat16)
        return lax.conv_general_dilated(
            v_bf16, w, (s, s), [(pad, pad), (pad, pad)],
            dimension_numbers=("NHWC", "HWIO", "NHWC"),
            preferred_element_type=jnp.float32)

    s1, b1 = _fold_bn_raw(params["bn1_gamma"], params["bn1_beta"],
                          params["bn1_mean"], params["bn1_var"])
    s2, b2 = _fold_bn_raw(params["bn2_gamma"], params["bn2_beta"],
                          params["bn2_mean"], params["bn2_var"])

    xb = x.astype(jnp.bfloat16).astype(jnp.float32)
    a = jnp.maximum(xb * s1 + b1, 0.0)
    a_bf = a.astype(jnp.bfloat16)

    c1 = conv(a_bf, params["conv1_w"], stride, 1)
    o1 = jnp.maximum(c1 * s2 + b2, 0.0).astype(jnp.bfloat16)
    c2 = conv(o1, params["conv2_w"], 1, 1)

    sc = x if equal_in_out else conv(a_bf, params["convsc_w"], stride, 0)
    return jnp.transpose(c2 + sc, (0, 3, 1, 2))


# ---------------------------------- main -----------------------------------

if __name__ == "__main__":
    key = jax.random.PRNGKey(0)
    in_planes, out_planes, stride = 4, 8, 1   # equalInOut=False -> convShortcut
    N, H, W = 2, 16, 16

    kx, kp = jax.random.split(key)
    x = jax.random.normal(kx, (N, in_planes, H, W), jnp.float32)   # NCHW
    params = init_basic_block_params(kp, in_planes, out_planes)

    fwd = jax.jit(functools.partial(
        basic_block_forward, in_planes=in_planes, out_planes=out_planes,
        stride=stride))
    y = jax.block_until_ready(fwd(x, params))

    y_ref = ref_forward(x, params, in_planes=in_planes,
                        out_planes=out_planes, stride=stride)
    assert y.shape == (N, out_planes, H, W), y.shape
    err = float(jnp.max(jnp.abs(y - y_ref)))
    assert err < 5e-3, err
    print("KERNEL_OK")
</pallas_src>

<mosaic_0001>
module attributes {stable_mosaic.version = 11 : i64} {
  func.func @_conv1_fused_kernel(%arg0: i32, %arg1: i32, %arg2: memref<1x16x16x128xbf16, #tpu.memory_space<vmem>>, %arg3: memref<1x128xf32, #tpu.memory_space<vmem>>, %arg4: memref<1x128xf32, #tpu.memory_space<vmem>>, %arg5: memref<1152x128xbf16, #tpu.memory_space<vmem>>, %arg6: memref<1x128xf32, #tpu.memory_space<vmem>>, %arg7: memref<1x128xf32, #tpu.memory_space<vmem>>, %arg8: memref<128x128xbf16, #tpu.memory_space<vmem>>, %arg9: memref<1x8x16x128xbf16, #tpu.memory_space<vmem>>, %arg10: memref<1x8x16x128xf32, #tpu.memory_space<vmem>>, %arg11: memref<18x18x128xbf16, #tpu.memory_space<vmem>>) attributes {dimension_semantics = [#tpu.dimension_semantics<parallel>, #tpu.dimension_semantics<arbitrary>], iteration_bounds = array<i64: 2, 2>, scalar_prefetch = 0 : i64, scratch_operands = 1 : i64, tpu.core_type = #tpu.core_type<tc>, window_params = [{transform_indices = @transform_0, window_bounds = array<i64: 1, 16, 16, 128>}, {pipeline_mode = #tpu.pipeline_mode<synchronous>, transform_indices = @transform_1, window_bounds = array<i64: 1, 128>}, {pipeline_mode = #tpu.pipeline_mode<synchronous>, transform_indices = @transform_2, window_bounds = array<i64: 1, 128>}, {pipeline_mode = #tpu.pipeline_mode<synchronous>, transform_indices = @transform_3, window_bounds = array<i64: 1152, 128>}, {pipeline_mode = #tpu.pipeline_mode<synchronous>, transform_indices = @transform_4, window_bounds = array<i64: 1, 128>}, {pipeline_mode = #tpu.pipeline_mode<synchronous>, transform_indices = @transform_5, window_bounds = array<i64: 1, 128>}, {pipeline_mode = #tpu.pipeline_mode<synchronous>, transform_indices = @transform_6, window_bounds = array<i64: 128, 128>}, {transform_indices = @transform_7, window_bounds = array<i64: 1, 8, 16, 128>}, {transform_indices = @transform_8, window_bounds = array<i64: 1, 8, 16, 128>}]} {
    %c0_i32 = arith.constant 0 : i32
    %0 = arith.cmpi eq, %arg1, %c0_i32 : i32
    %1 = arith.extui %0 : i1 to i32
    %c0_i32_0 = arith.constant 0 : i32
    %2 = arith.cmpi ne, %1, %c0_i32_0 : i32
    scf.if %2 {
      %cst_20 = arith.constant 0.000000e+00 : bf16
      %47 = vector.broadcast %cst_20 : bf16 to vector<18x18x128xbf16>
      %c0_21 = arith.constant 0 : index
      %c0_22 = arith.constant 0 : index
      %c0_23 = arith.constant 0 : index
      %48 = vector.load %arg11[%c0_21, %c0_22, %c0_23] : memref<18x18x128xbf16, #tpu.memory_space<vmem>>, vector<18x18x128xbf16>
      tpu.vector_store %arg11[%c0_21, %c0_22, %c0_23], %47 {strides = array<i32>} : memref<18x18x128xbf16, #tpu.memory_space<vmem>>, vector<18x18x128xbf16>,
      %c0_24 = arith.constant 0 : index
      %c0_25 = arith.constant 0 : index
      %c0_26 = arith.constant 0 : index
      %c0_27 = arith.constant 0 : index
      %49 = vector.load %arg2[%c0_24, %c0_25, %c0_26, %c0_27] : memref<1x16x16x128xbf16, #tpu.memory_space<vmem>>, vector<1x16x16x128xbf16>
      %50 = vector.shape_cast %49 : vector<1x16x16x128xbf16> to vector<16x16x128xbf16>
      %51 = arith.extf %50 : vector<16x16x128xbf16> to vector<16x16x128xf32>
      %c0_28 = arith.constant 0 : index
      %c0_29 = arith.constant 0 : index
      %52 = vector.load %arg3[%c0_28, %c0_29] : memref<1x128xf32, #tpu.memory_space<vmem>>, vector<1x128xf32>
      %53 = vector.shape_cast %52 : vector<1x128xf32> to vector<128xf32>
      %54 = vector.shape_cast %53 : vector<128xf32> to vector<1x1x128xf32>
      %55 = vector.broadcast %54 : vector<1x1x128xf32> to vector<16x16x128xf32>
      %56 = arith.mulf %51, %55 : vector<16x16x128xf32>
      %c0_30 = arith.constant 0 : index
      %c0_31 = arith.constant 0 : index
      %57 = vector.load %arg4[%c0_30, %c0_31] : memref<1x128xf32, #tpu.memory_space<vmem>>, vector<1x128xf32>
      %58 = vector.shape_cast %57 : vector<1x128xf32> to vector<128xf32>
      %59 = vector.shape_cast %58 : vector<128xf32> to vector<1x1x128xf32>
      %60 = vector.broadcast %59 : vector<1x1x128xf32> to vector<16x16x128xf32>
      %61 = arith.addf %56, %60 : vector<16x16x128xf32>
      %cst_32 = arith.constant 0.000000e+00 : f32
      %62 = vector.broadcast %cst_32 : f32 to vector<16x16x128xf32>
      %63 = arith.maximumf %61, %62 : vector<16x16x128xf32>
      %64 = arith.truncf %63 : vector<16x16x128xf32> to vector<16x16x128xbf16>
      %c1 = arith.constant 1 : index
      %c1_33 = arith.constant 1 : index
      %c0_34 = arith.constant 0 : index
      %65 = vector.load %arg11[%c1, %c1_33, %c0_34] : memref<18x18x128xbf16, #tpu.memory_space<vmem>>, vector<16x16x128xbf16>
      tpu.vector_store %arg11[%c1, %c1_33, %c0_34], %64 {strides = array<i32>} : memref<18x18x128xbf16, #tpu.memory_space<vmem>>, vector<16x16x128xbf16>,
    } else {
    }
    %c8_i32 = arith.constant 8 : i32
    %3 = arith.muli %arg1, %c8_i32 : i32
    %4 = tpu.assume_multiple %3, 8 : i32
    %5 = arith.index_cast %4 : i32 to index
    %c0 = arith.constant 0 : index
    %c0_1 = arith.constant 0 : index
    %6 = vector.load %arg11[%5, %c0, %c0_1] : memref<18x18x128xbf16, #tpu.memory_space<vmem>>, vector<10x18x128xbf16>
    %7 = vector.extract_strided_slice %6 {offsets = [0, 0, 0], sizes = [8, 16, 128], strides = [1, 1, 1]} : vector<10x18x128xbf16> to vector<8x16x128xbf16>
    %8 = vector.shape_cast %7 : vector<8x16x128xbf16> to vector<128x128xbf16>
    %9 = vector.extract_strided_slice %6 {offsets = [0, 1, 0], sizes = [8, 16, 128], strides = [1, 1, 1]} : vector<10x18x128xbf16> to vector<8x16x128xbf16>
    %10 = vector.shape_cast %9 : vector<8x16x128xbf16> to vector<128x128xbf16>
    %11 = vector.extract_strided_slice %6 {offsets = [0, 2, 0], sizes = [8, 16, 128], strides = [1, 1, 1]} : vector<10x18x128xbf16> to vector<8x16x128xbf16>
    %12 = vector.shape_cast %11 : vector<8x16x128xbf16> to vector<128x128xbf16>
    %13 = vector.extract_strided_slice %6 {offsets = [1, 0, 0], sizes = [8, 16, 128], strides = [1, 1, 1]} : vector<10x18x128xbf16> to vector<8x16x128xbf16>
    %14 = vector.shape_cast %13 : vector<8x16x128xbf16> to vector<128x128xbf16>
    %15 = vector.extract_strided_slice %6 {offsets = [1, 1, 0], sizes = [8, 16, 128], strides = [1, 1, 1]} : vector<10x18x128xbf16> to vector<8x16x128xbf16>
    %16 = vector.shape_cast %15 : vector<8x16x128xbf16> to vector<128x128xbf16>
    %17 = vector.extract_strided_slice %6 {offsets = [1, 2, 0], sizes = [8, 16, 128], strides = [1, 1, 1]} : vector<10x18x128xbf16> to vector<8x16x128xbf16>
    %18 = vector.shape_cast %17 : vector<8x16x128xbf16> to vector<128x128xbf16>
    %19 = vector.extract_strided_slice %6 {offsets = [2, 0, 0], sizes = [8, 16, 128], strides = [1, 1, 1]} : vector<10x18x128xbf16> to vector<8x16x128xbf16>
    %20 = vector.shape_cast %19 : vector<8x16x128xbf16> to vector<128x128xbf16>
    %21 = vector.extract_strided_slice %6 {offsets = [2, 1, 0], sizes = [8, 16, 128], strides = [1, 1, 1]} : vector<10x18x128xbf16> to vector<8x16x128xbf16>
    %22 = vector.shape_cast %21 : vector<8x16x128xbf16> to vector<128x128xbf16>
    %23 = vector.extract_strided_slice %6 {offsets = [2, 2, 0], sizes = [8, 16, 128], strides = [1, 1, 1]} : vector<10x18x128xbf16> to vector<8x16x128xbf16>
    %24 = vector.shape_cast %23 : vector<8x16x128xbf16> to vector<128x128xbf16>
    %25 = tpu.concatenate %8, %10, %12, %14, %16, %18, %20, %22, %24 in 1 : vector<128x128xbf16>, vector<128x128xbf16>, vector<128x128xbf16>, vector<128x128xbf16>, vector<128x128xbf16>, vector<128x128xbf16>, vector<128x128xbf16>, vector<128x128xbf16>, vector<128x128xbf16> -> vector<128x1152xbf16>
    %c0_2 = arith.constant 0 : index
    %c0_3 = arith.constant 0 : index
    %26 = vector.load %arg5[%c0_2, %c0_3] : memref<1152x128xbf16, #tpu.memory_space<vmem>>, vector<1152x128xbf16>
    %cst = arith.constant dense<0.000000e+00> : vector<128x128xf32>
    %27 = tpu.matmul %25, %26, %cst {dimension_numbers = #tpu.dot_dimension_numbers<[1], [0], [0], [1], [0, 0, 1, 1], [], []>} : vector<128x1152xbf16>, vector<1152x128xbf16>, vector<128x128xf32> -> vector<128x128xf32>
    %c0_4 = arith.constant 0 : index
    %c0_5 = arith.constant 0 : index
    %28 = vector.load %arg6[%c0_4, %c0_5] : memref<1x128xf32, #tpu.memory_space<vmem>>, vector<1x128xf32>
    %29 = vector.shape_cast %28 : vector<1x128xf32> to vector<128xf32>
    %30 = vector.shape_cast %29 : vector<128xf32> to vector<1x128xf32>
    %31 = vector.broadcast %30 : vector<1x128xf32> to vector<128x128xf32>
    %32 = arith.mulf %27, %31 : vector<128x128xf32>
    %c0_6 = arith.constant 0 : index
    %c0_7 = arith.constant 0 : index
    %33 = vector.load %arg7[%c0_6, %c0_7] : memref<1x128xf32, #tpu.memory_space<vmem>>, vector<1x128xf32>
    %34 = vector.shape_cast %33 : vector<1x128xf32> to vector<128xf32>
    %35 = vector.shape_cast %34 : vector<128xf32> to vector<1x128xf32>
    %36 = vector.broadcast %35 : vector<1x128xf32> to vector<128x128xf32>
    %37 = arith.addf %32, %36 : vector<128x128xf32>
    %cst_8 = arith.constant 0.000000e+00 : f32
    %38 = vector.broadcast %cst_8 : f32 to vector<128x128xf32>
    %39 = arith.maximumf %37, %38 : vector<128x128xf32>
    %40 = vector.shape_cast %39 : vector<128x128xf32> to vector<1x8x16x128xf32>
    %41 = arith.truncf %40 : vector<1x8x16x128xf32> to vector<1x8x16x128xbf16>
    %c0_9 = arith.constant 0 : index
    %c0_10 = arith.constant 0 : index
    %c0_11 = arith.constant 0 : index
    %c0_12 = arith.constant 0 : index
    %42 = vector.load %arg9[%c0_9, %c0_10, %c0_11, %c0_12] : memref<1x8x16x128xbf16, #tpu.memory_space<vmem>>, vector<1x8x16x128xbf16>
    tpu.vector_store %arg9[%c0_9, %c0_10, %c0_11, %c0_12], %41 {strides = array<i32>} : memref<1x8x16x128xbf16, #tpu.memory_space<vmem>>, vector<1x8x16x128xbf16>,
    %c0_13 = arith.constant 0 : index
    %c0_14 = arith.constant 0 : index
    %43 = vector.load %arg8[%c0_13, %c0_14] : memref<128x128xbf16, #tpu.memory_space<vmem>>, vector<128x128xbf16>
    %cst_15 = arith.constant dense<0.000000e+00> : vector<128x128xf32>
    %44 = tpu.matmul %16, %43, %cst_15 {dimension_numbers = #tpu.dot_dimension_numbers<[1], [0], [0], [1], [0, 0, 1, 1], [], []>} : vector<128x128xbf16>, vector<128x128xbf16>, vector<128x128xf32> -> vector<128x128xf32>
    %45 = vector.shape_cast %44 : vector<128x128xf32> to vector<1x8x16x128xf32>
    %c0_16 = arith.constant 0 : index
    %c0_17 = arith.constant 0 : index
    %c0_18 = arith.constant 0 : index
    %c0_19 = arith.constant 0 : index
    %46 = vector.load %arg10[%c0_16, %c0_17, %c0_18, %c0_19] : memref<1x8x16x128xf32, #tpu.memory_space<vmem>>, vector<1x8x16x128xf32>
    tpu.vector_store %arg10[%c0_16, %c0_17, %c0_18, %c0_19], %45 {strides = array<i32>} : memref<1x8x16x128xf32, #tpu.memory_space<vmem>>, vector<1x8x16x128xf32>,
    return
  }
  func.func @transform_0(%arg0: i32, %arg1: i32) -> (i32, i32, i32, i32) {
    %c0_i32 = arith.constant 0 : i32
    %c0_i32_0 = arith.constant 0 : i32
    %c0_i32_1 = arith.constant 0 : i32
    %c0_i32_2 = arith.constant 0 : i32
    return %arg0, %c0_i32, %c0_i32_0, %c0_i32_1 : i32, i32, i32, i32
  }
  func.func @transform_1(%arg0: i32, %arg1: i32) -> (i32, i32) {
    %c0_i32 = arith.constant 0 : i32
    %c0_i32_0 = arith.constant 0 : i32
    %c0_i32_1 = arith.constant 0 : i32
    return %c0_i32, %c0_i32_0 : i32, i32
  }
  func.func @transform_2(%arg0: i32, %arg1: i32) -> (i32, i32) {
    %c0_i32 = arith.constant 0 : i32
    %c0_i32_0 = arith.constant 0 : i32
    %c0_i32_1 = arith.constant 0 : i32
    return %c0_i32, %c0_i32_0 : i32, i32
  }
  func.func @transform_3(%arg0: i32, %arg1: i32) -> (i32, i32) {
    %c0_i32 = arith.constant 0 : i32
    %c0_i32_0 = arith.constant 0 : i32
    %c0_i32_1 = arith.constant 0 : i32
    return %c0_i32, %c0_i32_0 : i32, i32
  }
  func.func @transform_4(%arg0: i32, %arg1: i32) -> (i32, i32) {
    %c0_i32 = arith.constant 0 : i32
    %c0_i32_0 = arith.constant 0 : i32
    %c0_i32_1 = arith.constant 0 : i32
    return %c0_i32, %c0_i32_0 : i32, i32
  }
  func.func @transform_5(%arg0: i32, %arg1: i32) -> (i32, i32) {
    %c0_i32 = arith.constant 0 : i32
    %c0_i32_0 = arith.constant 0 : i32
    %c0_i32_1 = arith.constant 0 : i32
    return %c0_i32, %c0_i32_0 : i32, i32
  }
  func.func @transform_6(%arg0: i32, %arg1: i32) -> (i32, i32) {
    %c0_i32 = arith.constant 0 : i32
    %c0_i32_0 = arith.constant 0 : i32
    %c0_i32_1 = arith.constant 0 : i32
    return %c0_i32, %c0_i32_0 : i32, i32
  }
  func.func @transform_7(%arg0: i32, %arg1: i32) -> (i32, i32, i32, i32) {
    %c0_i32 = arith.constant 0 : i32
    %c0_i32_0 = arith.constant 0 : i32
    %c0_i32_1 = arith.constant 0 : i32
    return %arg0, %arg1, %c0_i32, %c0_i32_0 : i32, i32, i32, i32
  }
  func.func @transform_8(%arg0: i32, %arg1: i32) -> (i32, i32, i32, i32) {
    %c0_i32 = arith.constant 0 : i32
    %c0_i32_0 = arith.constant 0 : i32
    %c0_i32_1 = arith.constant 0 : i32
    return %arg0, %arg1, %c0_i32, %c0_i32_0 : i32, i32, i32, i32
  }
}

module attributes {stable_mosaic.version = 11 : i64} {
  func.func @_conv2_residual_kernel(%arg0: i32, %arg1: i32, %arg2: memref<1x16x16x128xbf16, #tpu.memory_space<vmem>>, %arg3: memref<1152x128xbf16, #tpu.memory_space<vmem>>, %arg4: memref<1x8x16x128xf32, #tpu.memory_space<vmem>>, %arg5: memref<1x8x16x128xf32, #tpu.memory_space<vmem>>, %arg6: memref<18x18x128xbf16, #tpu.memory_space<vmem>>) attributes {dimension_semantics = [#tpu.dimension_semantics<parallel>, #tpu.dimension_semantics<arbitrary>], iteration_bounds = array<i64: 2, 2>, scalar_prefetch = 0 : i64, scratch_operands = 1 : i64, tpu.core_type = #tpu.core_type<tc>, window_params = [{transform_indices = @transform_0, window_bounds = array<i64: 1, 16, 16, 128>}, {pipeline_mode = #tpu.pipeline_mode<synchronous>, transform_indices = @transform_1, window_bounds = array<i64: 1152, 128>}, {transform_indices = @transform_2, window_bounds = array<i64: 1, 8, 16, 128>}, {transform_indices = @transform_3, window_bounds = array<i64: 1, 8, 16, 128>}]} {
    %c0_i32 = arith.constant 0 : i32
    %0 = arith.cmpi eq, %arg1, %c0_i32 : i32
    %1 = arith.extui %0 : i1 to i32
    %c0_i32_0 = arith.constant 0 : i32
    %2 = arith.cmpi ne, %1, %c0_i32_0 : i32
    scf.if %2 {
      %cst_12 = arith.constant 0.000000e+00 : bf16
      %32 = vector.broadcast %cst_12 : bf16 to vector<18x18x128xbf16>
      %c0_13 = arith.constant 0 : index
      %c0_14 = arith.constant 0 : index
      %c0_15 = arith.constant 0 : index
      %33 = vector.load %arg6[%c0_13, %c0_14, %c0_15] : memref<18x18x128xbf16, #tpu.memory_space<vmem>>, vector<18x18x128xbf16>
      tpu.vector_store %arg6[%c0_13, %c0_14, %c0_15], %32 {strides = array<i32>} : memref<18x18x128xbf16, #tpu.memory_space<vmem>>, vector<18x18x128xbf16>,
      %c0_16 = arith.constant 0 : index
      %c0_17 = arith.constant 0 : index
      %c0_18 = arith.constant 0 : index
      %c0_19 = arith.constant 0 : index
      %34 = vector.load %arg2[%c0_16, %c0_17, %c0_18, %c0_19] : memref<1x16x16x128xbf16, #tpu.memory_space<vmem>>, vector<1x16x16x128xbf16>
      %35 = vector.shape_cast %34 : vector<1x16x16x128xbf16> to vector<16x16x128xbf16>
      %c1 = arith.constant 1 : index
      %c1_20 = arith.constant 1 : index
      %c0_21 = arith.constant 0 : index
      %36 = vector.load %arg6[%c1, %c1_20, %c0_21] : memref<18x18x128xbf16, #tpu.memory_space<vmem>>, vector<16x16x128xbf16>
      tpu.vector_store %arg6[%c1, %c1_20, %c0_21], %35 {strides = array<i32>} : memref<18x18x128xbf16, #tpu.memory_space<vmem>>, vector<16x16x128xbf16>,
    } else {
    }
    %c8_i32 = arith.constant 8 : i32
    %3 = arith.muli %arg1, %c8_i32 : i32
    %4 = tpu.assume_multiple %3, 8 : i32
    %5 = arith.index_cast %4 : i32 to index
    %c0 = arith.constant 0 : index
    %c0_1 = arith.constant 0 : index
    %6 = vector.load %arg6[%5, %c0, %c0_1] : memref<18x18x128xbf16, #tpu.memory_space<vmem>>, vector<10x18x128xbf16>
    %7 = vector.extract_strided_slice %6 {offsets = [0, 0, 0], sizes = [8, 16, 128], strides = [1, 1, 1]} : vector<10x18x128xbf16> to vector<8x16x128xbf16>
    %8 = vector.shape_cast %7 : vector<8x16x128xbf16> to vector<128x128xbf16>
    %9 = vector.extract_strided_slice %6 {offsets = [0, 1, 0], sizes = [8, 16, 128], strides = [1, 1, 1]} : vector<10x18x128xbf16> to vector<8x16x128xbf16>
    %10 = vector.shape_cast %9 : vector<8x16x128xbf16> to vector<128x128xbf16>
    %11 = vector.extract_strided_slice %6 {offsets = [0, 2, 0], sizes = [8, 16, 128], strides = [1, 1, 1]} : vector<10x18x128xbf16> to vector<8x16x128xbf16>
    %12 = vector.shape_cast %11 : vector<8x16x128xbf16> to vector<128x128xbf16>
    %13 = vector.extract_strided_slice %6 {offsets = [1, 0, 0], sizes = [8, 16, 128], strides = [1, 1, 1]} : vector<10x18x128xbf16> to vector<8x16x128xbf16>
    %14 = vector.shape_cast %13 : vector<8x16x128xbf16> to vector<128x128xbf16>
    %15 = vector.extract_strided_slice %6 {offsets = [1, 1, 0], sizes = [8, 16, 128], strides = [1, 1, 1]} : vector<10x18x128xbf16> to vector<8x16x128xbf16>
    %16 = vector.shape_cast %15 : vector<8x16x128xbf16> to vector<128x128xbf16>
    %17 = vector.extract_strided_slice %6 {offsets = [1, 2, 0], sizes = [8, 16, 128], strides = [1, 1, 1]} : vector<10x18x128xbf16> to vector<8x16x128xbf16>
    %18 = vector.shape_cast %17 : vector<8x16x128xbf16> to vector<128x128xbf16>
    %19 = vector.extract_strided_slice %6 {offsets = [2, 0, 0], sizes = [8, 16, 128], strides = [1, 1, 1]} : vector<10x18x128xbf16> to vector<8x16x128xbf16>
    %20 = vector.shape_cast %19 : vector<8x16x128xbf16> to vector<128x128xbf16>
    %21 = vector.extract_strided_slice %6 {offsets = [2, 1, 0], sizes = [8, 16, 128], strides = [1, 1, 1]} : vector<10x18x128xbf16> to vector<8x16x128xbf16>
    %22 = vector.shape_cast %21 : vector<8x16x128xbf16> to vector<128x128xbf16>
    %23 = vector.extract_strided_slice %6 {offsets = [2, 2, 0], sizes = [8, 16, 128], strides = [1, 1, 1]} : vector<10x18x128xbf16> to vector<8x16x128xbf16>
    %24 = vector.shape_cast %23 : vector<8x16x128xbf16> to vector<128x128xbf16>
    %25 = tpu.concatenate %8, %10, %12, %14, %16, %18, %20, %22, %24 in 1 : vector<128x128xbf16>, vector<128x128xbf16>, vector<128x128xbf16>, vector<128x128xbf16>, vector<128x128xbf16>, vector<128x128xbf16>, vector<128x128xbf16>, vector<128x128xbf16>, vector<128x128xbf16> -> vector<128x1152xbf16>
    %c0_2 = arith.constant 0 : index
    %c0_3 = arith.constant 0 : index
    %26 = vector.load %arg3[%c0_2, %c0_3] : memref<1152x128xbf16, #tpu.memory_space<vmem>>, vector<1152x128xbf16>
    %cst = arith.constant dense<0.000000e+00> : vector<128x128xf32>
    %27 = tpu.matmul %25, %26, %cst {dimension_numbers = #tpu.dot_dimension_numbers<[1], [0], [0], [1], [0, 0, 1, 1], [], []>} : vector<128x1152xbf16>, vector<1152x128xbf16>, vector<128x128xf32> -> vector<128x128xf32>
    %28 = vector.shape_cast %27 : vector<128x128xf32> to vector<1x8x16x128xf32>
    %c0_4 = arith.constant 0 : index
    %c0_5 = arith.constant 0 : index
    %c0_6 = arith.constant 0 : index
    %c0_7 = arith.constant 0 : index
    %29 = vector.load %arg4[%c0_4, %c0_5, %c0_6, %c0_7] : memref<1x8x16x128xf32, #tpu.memory_space<vmem>>, vector<1x8x16x128xf32>
    %30 = arith.addf %28, %29 : vector<1x8x16x128xf32>
    %c0_8 = arith.constant 0 : index
    %c0_9 = arith.constant 0 : index
    %c0_10 = arith.constant 0 : index
    %c0_11 = arith.constant 0 : index
    %31 = vector.load %arg5[%c0_8, %c0_9, %c0_10, %c0_11] : memref<1x8x16x128xf32, #tpu.memory_space<vmem>>, vector<1x8x16x128xf32>
    tpu.vector_store %arg5[%c0_8, %c0_9, %c0_10, %c0_11], %30 {strides = array<i32>} : memref<1x8x16x128xf32, #tpu.memory_space<vmem>>, vector<1x8x16x128xf32>,
    return
  }
  func.func @transform_0(%arg0: i32, %arg1: i32) -> (i32, i32, i32, i32) {
    %c0_i32 = arith.constant 0 : i32
    %c0_i32_0 = arith.constant 0 : i32
    %c0_i32_1 = arith.constant 0 : i32
    %c0_i32_2 = arith.constant 0 : i32
    return %arg0, %c0_i32, %c0_i32_0, %c0_i32_1 : i32, i32, i32, i32
  }
  func.func @transform_1(%arg0: i32, %arg1: i32) -> (i32, i32) {
    %c0_i32 = arith.constant 0 : i32
    %c0_i32_0 = arith.constant 0 : i32
    %c0_i32_1 = arith.constant 0 : i32
    return %c0_i32, %c0_i32_0 : i32, i32
  }
  func.func @transform_2(%arg0: i32, %arg1: i32) -> (i32, i32, i32, i32) {
    %c0_i32 = arith.constant 0 : i32
    %c0_i32_0 = arith.constant 0 : i32
    %c0_i32_1 = arith.constant 0 : i32
    return %arg0, %arg1, %c0_i32, %c0_i32_0 : i32, i32, i32, i32
  }
  func.func @transform_3(%arg0: i32, %arg1: i32) -> (i32, i32, i32, i32) {
    %c0_i32 = arith.constant 0 : i32
    %c0_i32_0 = arith.constant 0 : i32
    %c0_i32_1 = arith.constant 0 : i32
    return %arg0, %arg1, %c0_i32, %c0_i32_0 : i32, i32, i32, i32
  }
}

</mosaic_0001>

<llo_original>
// kernel: basic_block_forward.3
$region0: #{basic_block_forward.3}
  #allocation0 [shape = 'u32[]', space=smem, size = 0x4, offset = 0x4, fixed_abs, tag = 'smem constant byte address 0x4 - core index']
  #allocation1 [shape = 'u32[144,128]{1,0:T(1,128)}', space=vmem, size = 0x12000, scoped, tag = 'internal scratch']
  #allocation2 [shape = 'bf16[18,18,128]{2,1,0:T(8,128)(2,1)}', space=vmem, size = 0x1b000, scoped, tag = 'scratch operand']
  %s0 = inlined_call_operand.vmem [shape: bf16[2,16,16,128], index: 0, kind: input, shape index: {}]
  %s1 = inlined_call_operand.vmem [shape: bf16[1152,128], index: 1, kind: input, shape index: {}]
  %s2 = inlined_call_operand.vmem [shape: f32[2,16,16,128], index: 2, kind: input, shape index: {}]
  %s3 = inlined_call_operand.vmem [shape: f32[2,16,16,128], index: 3, kind: output, shape index: {}]
  %s4 = sld [smem:[#allocation0]]
  $region49: #{basic_block_forward.3} parent=0
    _
  %s6 = ssub.s32 1, %s4
  %s7 = scalar_select 0, %s6, %s4
  loop: start=0, step=1, limit=6
  $region2: #{basic_block_forward.3} parent=0 // loop_pre_header
    _
  $region3: #{basic_block_forward.3} parent=0 // loop_header
    %s9 = sphi 0, %s13
    %p10 = scmp.ge.s32.totalorder %s9, 6
    %s16 = sphi 0, %s28
    %s17 = sphi 0, %s24
    %s18 = sphi 0, %s16
    %s19 = sphi 0, %s17
    %s20 = sphi 0, %s18
    %s21 = sphi 0, %s19
    %s31 = sphi 0, %s33
    %s34 = sphi 0, %s31
    %s35 = sphi 0, %s34
    %s51 = sphi 0, %s35
    %s55 = sphi 0, %s55
    %s57 = sphi 0, %s55
    %s58 = sphi 0, %s57
    %s72 = sphi 0, %s58
    %s80 = sphi 0, %s82
    %s83 = sphi 0, %s80
    %s84 = sphi 0, %s83
    %s100 = sphi 0, %s84
    %s108 = sphi 0, %s110
    %s111 = sphi 0, %s108
    %s112 = sphi 0, %s111
    %s128 = sphi 0, %s112
  $region4: #{basic_block_forward.3} parent=0 // loop_header_branch
    %12 = sbr.rel (%p10) target = $region8
  $region5: #{basic_block_forward.3} parent=0 // loop_body
    %s14 = ssub.s32 %s9, 1
    %s15 = ssub.s32 %s9, 2
    %s22 = sadd.s32 1, %s17
    %p23 = scmp.ge.s32.totalorder %s22, 2
    %s24 = scalar_select %p23, 0, %s22
    %s25 = sadd.s32 1, %s16
    %s26 = scalar_select %p23, %s25, %s16
    %p27 = scmp.ge.s32.totalorder %s26, 2
    %s28 = scalar_select %p27, 0, %s26
    %s29 = ssub.s32 %s16, %s28
    %p30 = scmp.eq.s32.totalorder %s29, 0
    %s32 = sadd.s32 %s31, 1
    %s33 = scalar_select %p30, %s31, %s32
    %p36 = pneg %p30
    %p37 = scmp.eq.s32.totalorder %s9, 3
    %p38 = por %p36, %p37
    %p39 = scmp.ne.s32.totalorder %s31, %s34
    %p40 = scmp.eq.s32.totalorder %s9, 0
    %p41 = por %p39, %p40
    %p42 = scmp.ne.s32.totalorder %s31, %s34
    %p43 = scmp.eq.s32.totalorder %s14, 3
    %p44 = por %p42, %p43
    %p45 = scmp.ne.s32.totalorder %s34, %s35
    %p46 = scmp.eq.s32.totalorder %s14, 0
    %p47 = por %p45, %p46
    %p48 = scmp.ne.s32.totalorder %s34, %s35
    %p49 = scmp.eq.s32.totalorder %s15, 3
    %p50 = por %p48, %p49
    %p52 = scmp.ne.s32.totalorder %s35, %s51
    %p53 = scmp.eq.s32.totalorder %s15, 0
    %p54 = por %p52, %p53
    %s56 = sadd.s32 %s55, 1
    %p59 = scmp.eq.s32.totalorder %s9, 3
    %p60 = scmp.ne.s32.totalorder %s55, %s57
    %p61 = scmp.eq.s32.totalorder %s9, 0
    %p62 = por %p60, %p61
    %p63 = scmp.ne.s32.totalorder %s55, %s57
    %p64 = scmp.eq.s32.totalorder %s14, 3
    %p65 = por %p63, %p64
    %p66 = scmp.ne.s32.totalorder %s57, %s58
    %p67 = scmp.eq.s32.totalorder %s14, 0
    %p68 = por %p66, %p67
    %p69 = scmp.ne.s32.totalorder %s57, %s58
    %p70 = scmp.eq.s32.totalorder %s15, 3
    %p71 = por %p69, %p70
    %p73 = scmp.ne.s32.totalorder %s58, %s72
    %p74 = scmp.eq.s32.totalorder %s15, 0
    %p75 = por %p73, %p74
    %s76 = ssub.s32 %s16, %s28
    %s77 = ssub.s32 %s17, %s24
    %s78 = sor.u32 %s76, %s77
    %p79 = scmp.eq.s32.totalorder %s78, 0
    %s81 = sadd.s32 %s80, 1
    %s82 = scalar_select %p79, %s80, %s81
    %p85 = pneg %p79
    %p86 = scmp.eq.s32.totalorder %s9, 3
    %p87 = por %p85, %p86
    %p88 = scmp.ne.s32.totalorder %s80, %s83
    %p89 = scmp.eq.s32.totalorder %s9, 0
    %p90 = por %p88, %p89
    %p91 = scmp.ne.s32.totalorder %s80, %s83
    %p92 = scmp.eq.s32.totalorder %s14, 3
    %p93 = por %p91, %p92
    %p94 = scmp.ne.s32.totalorder %s83, %s84
    %p95 = scmp.eq.s32.totalorder %s14, 0
    %p96 = por %p94, %p95
    %p97 = scmp.ne.s32.totalorder %s83, %s84
    %p98 = scmp.eq.s32.totalorder %s15, 3
    %p99 = por %p97, %p98
    %p101 = scmp.ne.s32.totalorder %s84, %s100
    %p102 = scmp.eq.s32.totalorder %s15, 0
    %p103 = por %p101, %p102
    %s104 = ssub.s32 %s16, %s28
    %s105 = ssub.s32 %s17, %s24
    %s106 = sor.u32 %s104, %s105
    %p107 = scmp.eq.s32.totalorder %s106, 0
    %s109 = sadd.s32 %s108, 1
    %s110 = scalar_select %p107, %s108, %s109
    %p113 = pneg %p107
    %p114 = scmp.eq.s32.totalorder %s9, 3
    %p115 = por %p113, %p114
    %p116 = scmp.ne.s32.totalorder %s108, %s111
    %p117 = scmp.eq.s32.totalorder %s9, 0
    %p118 = por %p116, %p117
    %p119 = scmp.ne.s32.totalorder %s108, %s111
    %p120 = scmp.eq.s32.totalorder %s14, 3
    %p121 = por %p119, %p120
    %p122 = scmp.ne.s32.totalorder %s111, %s112
    %p123 = scmp.eq.s32.totalorder %s14, 0
    %p124 = por %p122, %p123
    %p125 = scmp.ne.s32.totalorder %s111, %s112
    %p126 = scmp.eq.s32.totalorder %s15, 3
    %p127 = por %p125, %p126
    %p129 = scmp.ne.s32.totalorder %s112, %s128
    %p130 = scmp.eq.s32.totalorder %s15, 0
    %p131 = por %p129, %p130
    %p132 = scmp.le.s32.totalorder 1, %s9
    %p133 = scmp.lt.s32.totalorder %s9, 5
    %p134 = pnand %p132, %p133
    %p135 = pneg %p134
    // Predicated region
    $region9: #{basic_block_forward.3} parent=5 // pred_check
      _
    $region10: #{basic_block_forward.3} parent=5 // pred_check_branch
      %137 = sbr.rel (%p134) target = $region12
    $region11: #{basic_block_forward.3} parent=5 // pred_region
      %s138 = ssub.s32 %s9, 1
      // Predicated region
      $region13: #{basic_block_forward.3} parent=11 // pred_check
        %p139 = pneg %p68
      $region14: #{basic_block_forward.3} parent=11 // pred_check_branch
        %141 = sbr.rel (%p139) target = $region16
      $region15: #{basic_block_forward.3} parent=11 // pred_region
        _
      $region16: #{basic_block_forward.3} parent=11 // pred_fallthru
        _
    $region12: #{basic_block_forward.3} parent=5 // pred_fallthru
      _
    %p142 = scmp.lt.s32.totalorder %s9, 4
    // Predicated region
    $region17: #{basic_block_forward.3} parent=5 // pred_check
      %p143 = pneg %p142
    $region18: #{basic_block_forward.3} parent=5 // pred_check_branch
      %145 = sbr.rel (%p143) target = $region20
    $region19: #{basic_block_forward.3} parent=5 // pred_region
      // Predicated region
      $region21: #{basic_block_forward.3} parent=19 // pred_check
        %p146 = pneg %p41
      $region22: #{basic_block_forward.3} parent=19 // pred_check_branch
        %148 = sbr.rel (%p146) target = $region24
      $region23: #{basic_block_forward.3} parent=19 // pred_region
        %p149 = scmp.lt.s32.totalorder %s16, 1
        %s150 = scalar_select %p149, %s16, 1
        %s151 = smul.addr %s150, 32
        %s152 = smul.addr %s151, 4
        %s153 = scalar_lea.vmem %s0, %s152
      $region24: #{basic_block_forward.3} parent=19 // pred_fallthru
        _
      // Predicated region
      $region25: #{basic_block_forward.3} parent=19 // pred_check
        %p154 = pneg %p90
      $region26: #{basic_block_forward.3} parent=19 // pred_check_branch
        %156 = sbr.rel (%p154) target = $region28
      $region27: #{basic_block_forward.3} parent=19 // pred_region
        %s157 = smul.u32 8, %s17
        %p158 = scmp.lt.s32.totalorder %s16, 1
        %s159 = scalar_select %p158, %s16, 1
        %p160 = scmp.lt.s32.totalorder %s157, 15
        %s161 = scalar_select %p160, %s157, 15
        %s162 = smul.addr %s161, 2
        %s163 = smul.addr %s159, 32
        %s164 = sadd.s32 %s162, %s163
        %s165 = smul.addr %s164, 8
        %s166 = scalar_lea.vmem %s2, %s165
        %s167 = smul.u32 8, %s17
      $region28: #{basic_block_forward.3} parent=19 // pred_fallthru
        _
    $region20: #{basic_block_forward.3} parent=5 // pred_fallthru
      _
    %p168 = scmp.le.s32.totalorder 1, %s9
    %p169 = scmp.lt.s32.totalorder %s9, 5
    %p170 = pnand %p168, %p169
    %p171 = pneg %p170
    // Predicated region
    $region29: #{basic_block_forward.3} parent=5 // pred_check
      _
    $region30: #{basic_block_forward.3} parent=5 // pred_check_branch
      %173 = sbr.rel (%p170) target = $region32
    $region31: #{basic_block_forward.3} parent=5 // pred_region
      %s174 = ssub.s32 %s9, 1
      %p175 = scmp.lt.s32.totalorder %s18, 1
      %s176 = scalar_select %p175, %s18, 1
      %s177 = smul.addr %s176, 32
      %s178 = smul.addr %s177, 4
      %s179 = scalar_lea.vmem %s0, %s178
      %p180 = pneg %p47
      %p181 = pneg %p44
      %p182 = pneg %p68
      %p183 = pneg %p65
      %s184 = smul.u32 8, %s19
      %p185 = scmp.lt.s32.totalorder %s18, 1
      %s186 = scalar_select %p185, %s18, 1
      %p187 = scmp.lt.s32.totalorder %s184, 15
      %s188 = scalar_select %p187, %s184, 15
      %s189 = smul.addr %s188, 2
      %s190 = smul.addr %s186, 32
      %s191 = sadd.s32 %s189, %s190
      %s192 = smul.addr %s191, 8
      %s193 = scalar_lea.vmem %s2, %s192
      %p194 = pneg %p96
      %p195 = pneg %p93
      %p196 = pneg %p124
      %p197 = pneg %p121
      %s198 = smul.u32 8, %s19
      %p199 = scmp.lt.s32.totalorder %s18, 1
      %s200 = scalar_select %p199, %s18, 1
      %p201 = scmp.lt.s32.totalorder %s198, 15
      %s202 = scalar_select %p201, %s198, 15
      %s203 = smul.addr %s202, 2
      %s204 = smul.addr %s200, 32
      %s205 = sadd.s32 %s203, %s204
      %s206 = smul.addr %s205, 8
      %s207 = scalar_lea.vmem %s3, %s206
      %p208 = scmp.lt.s32.totalorder %s18, 1
      %s209 = scalar_select %p208, %s18, 1
      %s210 = smul.addr %s209, 32
      %s211 = smul.addr %s210, 4
      %s212 = scalar_lea.vmem %s0, %s211
      %s213 = smul.u32 8, %s19
      %p214 = scmp.lt.s32.totalorder %s18, 1
      %s215 = scalar_select %p214, %s18, 1
      %p216 = scmp.lt.s32.totalorder %s213, 15
      %s217 = scalar_select %p216, %s213, 15
      %s218 = smul.addr %s217, 2
      %s219 = smul.addr %s215, 32
      %s220 = sadd.s32 %s218, %s219
      %s221 = smul.addr %s220, 8
      %s222 = scalar_lea.vmem %s2, %s221
      %s223 = smul.u32 8, %s19
      %s224 = smul.u32 8, %s19
      %p225 = scmp.lt.s32.totalorder %s18, 1
      %s226 = scalar_select %p225, %s18, 1
      %p227 = scmp.lt.s32.totalorder %s224, 15
      %s228 = scalar_select %p227, %s224, 15
      %s229 = smul.addr %s228, 2
      %s230 = smul.addr %s226, 32
      %s231 = sadd.s32 %s229, %s230
      %s232 = smul.addr %s231, 8
      %s233 = scalar_lea.vmem %s3, %s232
      %s234 = smul.u32 8, %s19
      %p236 = scmp.eq.s32.totalorder %s19, 0
      // Predicated region
      $region33: #{basic_block_forward.3} parent=31 // pred_check
        %p237 = pneg %p236
      $region34: #{basic_block_forward.3} parent=31 // pred_check_branch
        %239 = sbr.rel (%p237) target = $region36
      $region35: #{basic_block_forward.3} parent=31 // pred_region
        %240 = vst [vmem:[#allocation2] sm:$0xf] 0
        %241 = vst [vmem:[#allocation2 + $0x4] sm:$0xf] 0
        %242 = vst [vmem:[#allocation2 + $0x8] sm:$0x1] 0
        %243 = vst [vmem:[#allocation2 + $0xc] sm:$0xf] 0
        %244 = vst [vmem:[#allocation2 + $0x10] sm:$0xf] 0
        %245 = vst [vmem:[#allocation2 + $0x14] sm:$0x1] 0
        %246 = vst [vmem:[#allocation2 + $0x18] sm:$0xf] 0
        %247 = vst [vmem:[#allocation2 + $0x1c] sm:$0xf] 0
        %248 = vst [vmem:[#allocation2 + $0x20] sm:$0x1] 0
        %249 = vst [vmem:[#allocation2 + $0x24] sm:$0xf] 0
        %250 = vst [vmem:[#allocation2 + $0x28] sm:$0xf] 0
        %251 = vst [vmem:[#allocation2 + $0x2c] sm:$0x1] 0
        %252 = vst [vmem:[#allocation2 + $0x30] sm:$0xf] 0
        %253 = vst [vmem:[#allocation2 + $0x34] sm:$0xf] 0
        %254 = vst [vmem:[#allocation2 + $0x38] sm:$0x1] 0
        %255 = vst [vmem:[#allocation2 + $0x3c] sm:$0xf] 0
        %256 = vst [vmem:[#allocation2 + $0x40] sm:$0xf] 0
        %257 = vst [vmem:[#allocation2 + $0x44] sm:$0x1] 0
        %258 = vst [vmem:[#allocation2 + $0x48] sm:$0xf] 0
        %259 = vst [vmem:[#allocation2 + $0x4c] sm:$0xf] 0
        %260 = vst [vmem:[#allocation2 + $0x50] sm:$0x1] 0
        %261 = vst [vmem:[#allocation2 + $0x54] sm:$0xf] 0
        %262 = vst [vmem:[#allocation2 + $0x58] sm:$0xf] 0
        %263 = vst [vmem:[#allocation2 + $0x5c] sm:$0x1] 0
        %264 = vst [vmem:[#allocation2 + $0x60] sm:$0xf] 0
        %265 = vst [vmem:[#allocation2 + $0x64] sm:$0xf] 0
        %266 = vst [vmem:[#allocation2 + $0x68] sm:$0x1] 0
        %267 = vst [vmem:[#allocation2 + $0x6c] sm:$0xf] 0
        %268 = vst [vmem:[#allocation2 + $0x70] sm:$0xf] 0
        %269 = vst [vmem:[#allocation2 + $0x74] sm:$0x1] 0
        %270 = vst [vmem:[#allocation2 + $0x78] sm:$0xf] 0
        %271 = vst [vmem:[#allocation2 + $0x7c] sm:$0xf] 0
        %272 = vst [vmem:[#allocation2 + $0x80] sm:$0x1] 0
        %273 = vst [vmem:[#allocation2 + $0x84] sm:$0xf] 0
        %274 = vst [vmem:[#allocation2 + $0x88] sm:$0xf] 0
        %275 = vst [vmem:[#allocation2 + $0x8c] sm:$0x1] 0
        %276 = vst [vmem:[#allocation2 + $0x90] sm:$0xf] 0
        %277 = vst [vmem:[#allocation2 + $0x94] sm:$0xf] 0
        %278 = vst [vmem:[#allocation2 + $0x98] sm:$0x1] 0
        %279 = vst [vmem:[#allocation2 + $0x9c] sm:$0xf] 0
        %280 = vst [vmem:[#allocation2 + $0xa0] sm:$0xf] 0
        %281 = vst [vmem:[#allocation2 + $0xa4] sm:$0x1] 0
        %282 = vst [vmem:[#allocation2 + $0xa8] sm:$0xf] 0
        %283 = vst [vmem:[#allocation2 + $0xac] sm:$0xf] 0
        %284 = vst [vmem:[#allocation2 + $0xb0] sm:$0x1] 0
        %285 = vst [vmem:[#allocation2 + $0xb4] sm:$0xf] 0
        %286 = vst [vmem:[#allocation2 + $0xb8] sm:$0xf] 0
        %287 = vst [vmem:[#allocation2 + $0xbc] sm:$0x1] 0
        %288 = vst [vmem:[#allocation2 + $0xc0] sm:$0xf] 0
        %289 = vst [vmem:[#allocation2 + $0xc4] sm:$0xf] 0
        %290 = vst [vmem:[#allocation2 + $0xc8] sm:$0x1] 0
        %291 = vst [vmem:[#allocation2 + $0xcc] sm:$0xf] 0
        %292 = vst [vmem:[#allocation2 + $0xd0] sm:$0xf] 0
        %293 = vst [vmem:[#allocation2 + $0xd4] sm:$0x1] 0
        %v294 = vld [vmem:[%s212] sm:$0xf]
        %v295 = vld [vmem:[%s212 + $0x4] sm:$0xf]
        %v296 = vld [vmem:[%s212 + $0x8] sm:$0xf]
        %v297 = vld [vmem:[%s212 + $0xc] sm:$0xf]
        %v298 = vld [vmem:[%s212 + $0x10] sm:$0xf]
        %v299 = vld [vmem:[%s212 + $0x14] sm:$0xf]
        %v300 = vld [vmem:[%s212 + $0x18] sm:$0xf]
        %v301 = vld [vmem:[%s212 + $0x1c] sm:$0xf]
        %v302 = vld [vmem:[%s212 + $0x20] sm:$0xf]
        %v303 = vld [vmem:[%s212 + $0x24] sm:$0xf]
        %v304 = vld [vmem:[%s212 + $0x28] sm:$0xf]
        %v305 = vld [vmem:[%s212 + $0x2c] sm:$0xf]
        %v306 = vld [vmem:[%s212 + $0x30] sm:$0xf]
        %v307 = vld [vmem:[%s212 + $0x34] sm:$0xf]
        %v308 = vld [vmem:[%s212 + $0x38] sm:$0xf]
        %v309 = vld [vmem:[%s212 + $0x3c] sm:$0xf]
        %v310 = vld [vmem:[%s212 + $0x40] sm:$0xf]
        %v311 = vld [vmem:[%s212 + $0x44] sm:$0xf]
        %v312 = vld [vmem:[%s212 + $0x48] sm:$0xf]
        %v313 = vld [vmem:[%s212 + $0x4c] sm:$0xf]
        %v314 = vld [vmem:[%s212 + $0x50] sm:$0xf]
        %v315 = vld [vmem:[%s212 + $0x54] sm:$0xf]
        %v316 = vld [vmem:[%s212 + $0x58] sm:$0xf]
        %v317 = vld [vmem:[%s212 + $0x5c] sm:$0xf]
        %v318 = vld [vmem:[%s212 + $0x60] sm:$0xf]
        %v319 = vld [vmem:[%s212 + $0x64] sm:$0xf]
        %v320 = vld [vmem:[%s212 + $0x68] sm:$0xf]
        %v321 = vld [vmem:[%s212 + $0x6c] sm:$0xf]
        %v322 = vld [vmem:[%s212 + $0x70] sm:$0xf]
        %v323 = vld [vmem:[%s212 + $0x74] sm:$0xf]
        %v324 = vld [vmem:[%s212 + $0x78] sm:$0xf]
        %v325 = vld [vmem:[%s212 + $0x7c] sm:$0xf]
        %vm326 = vsmask.f32 256
        %vm327 = vsmask.f32 4368
        %vm328 = vmor %vm326, %vm327
        %v330 = vshrl.u32 %v294, 16
        %v332 = vrot.slane %v330, 7
        %v333 = vshll.u32 %v294, 16
        %v335 = vor.u32 %v332, %v333
        %v336 = vrot.slane %v332, 4
        %v338 = vshrl.u32 %v295, 16
        %v340 = vrot.slane %v338, 7
        %v341 = vshll.u32 %v295, 16
        %v343 = vor.u32 %v340, %v341
        %v344 = vsel %vm328, %v336, %v343
        %v345 = vrot.slane %v340, 4
        %v347 = vshrl.u32 %v296, 16
        %v349 = vrot.slane %v347, 7
        %v350 = vshll.u32 %v296, 16
        %v352 = vor.u32 %v349, %v350
        %v353 = vrot.slane %v349, 4
        %v355 = vshrl.u32 %v297, 16
        %v357 = vrot.slane %v355, 7
        %v358 = vshll.u32 %v297, 16
        %v360 = vor.u32 %v357, %v358
        %v361 = vsel %vm328, %v353, %v360
        %v362 = vrot.slane %v357, 4
        %v364 = vshrl.u32 %v298, 16
        %v366 = vrot.slane %v364, 7
        %v367 = vshll.u32 %v298, 16
        %v369 = vor.u32 %v366, %v367
        %v370 = vrot.slane %v366, 4
        %v372 = vshrl.u32 %v299, 16
        %v374 = vrot.slane %v372, 7
        %v375 = vshll.u32 %v299, 16
        %v377 = vor.u32 %v374, %v375
        %v378 = vsel %vm328, %v370, %v377
        %v379 = vrot.slane %v374, 4
        %v381 = vshrl.u32 %v300, 16
        %v383 = vrot.slane %v381, 7
        %v384 = vshll.u32 %v300, 16
        %v386 = vor.u32 %v383, %v384
        %v387 = vrot.slane %v383, 4
        %v389 = vshrl.u32 %v301, 16
        %v391 = vrot.slane %v389, 7
        %v392 = vshll.u32 %v301, 16
        %v394 = vor.u32 %v391, %v392
        %v395 = vsel %vm328, %v387, %v394
        %v396 = vrot.slane %v391, 4
        %v398 = vshrl.u32 %v302, 16
        %v400 = vrot.slane %v398, 7
        %v401 = vshll.u32 %v302, 16
        %v403 = vor.u32 %v400, %v401
        %v404 = vrot.slane %v400, 4
        %v406 = vshrl.u32 %v303, 16
        %v408 = vrot.slane %v406, 7
        %v409 = vshll.u32 %v303, 16
        %v411 = vor.u32 %v408, %v409
        %v412 = vsel %vm328, %v404, %v411
        %v413 = vrot.slane %v408, 4
        %v415 = vshrl.u32 %v304, 16
        %v417 = vrot.slane %v415, 7
        %v418 = vshll.u32 %v304, 16
        %v420 = vor.u32 %v417, %v418
        %v421 = vrot.slane %v417, 4
        %v423 = vshrl.u32 %v305, 16
        %v425 = vrot.slane %v423, 7
        %v426 = vshll.u32 %v305, 16
        %v428 = vor.u32 %v425, %v426
        %v429 = vsel %vm328, %v421, %v428
        %v430 = vrot.slane %v425, 4
        %v432 = vshrl.u32 %v306, 16
        %v434 = vrot.slane %v432, 7
        %v435 = vshll.u32 %v306, 16
        %v437 = vor.u32 %v434, %v435
        %v438 = vrot.slane %v434, 4
        %v440 = vshrl.u32 %v307, 16
        %v442 = vrot.slane %v440, 7
        %v443 = vshll.u32 %v307, 16
        %v445 = vor.u32 %v442, %v443
        %v446 = vsel %vm328, %v438, %v445
        %v447 = vrot.slane %v442, 4
        %v449 = vshrl.u32 %v308, 16
        %v451 = vrot.slane %v449, 7
        %v452 = vshll.u32 %v308, 16
        %v454 = vor.u32 %v451, %v452
        %v455 = vrot.slane %v451, 4
        %v457 = vshrl.u32 %v309, 16
        %v459 = vrot.slane %v457, 7
        %v460 = vshll.u32 %v309, 16
        %v462 = vor.u32 %v459, %v460
        %v463 = vsel %vm328, %v455, %v462
        %v464 = vrot.slane %v459, 4
        %v466 = vshrl.u32 %v310, 16
        %v468 = vrot.slane %v466, 7
        %v469 = vshll.u32 %v310, 16
        %v471 = vor.u32 %v468, %v469
        %v472 = vrot.slane %v468, 4
        %v474 = vshrl.u32 %v311, 16
        %v476 = vrot.slane %v474, 7
        %v477 = vshll.u32 %v311, 16
        %v479 = vor.u32 %v476, %v477
        %v480 = vsel %vm328, %v472, %v479
        %v481 = vrot.slane %v476, 4
        %v483 = vshrl.u32 %v312, 16
        %v485 = vrot.slane %v483, 7
        %v486 = vshll.u32 %v312, 16
        %v488 = vor.u32 %v485, %v486
        %v489 = vrot.slane %v485, 4
        %v491 = vshrl.u32 %v313, 16
        %v493 = vrot.slane %v491, 7
        %v494 = vshll.u32 %v313, 16
        %v496 = vor.u32 %v493, %v494
        %v497 = vsel %vm328, %v489, %v496
        %v498 = vrot.slane %v493, 4
        %v500 = vshrl.u32 %v314, 16
        %v502 = vrot.slane %v500, 7
        %v503 = vshll.u32 %v314, 16
        %v505 = vor.u32 %v502, %v503
        %v506 = vrot.slane %v502, 4
        %v508 = vshrl.u32 %v315, 16
        %v510 = vrot.slane %v508, 7
        %v511 = vshll.u32 %v315, 16
        %v513 = vor.u32 %v510, %v511
        %v514 = vsel %vm328, %v506, %v513
        %v515 = vrot.slane %v510, 4
        %v517 = vshrl.u32 %v316, 16
        %v519 = vrot.slane %v517, 7
        %v520 = vshll.u32 %v316, 16
        %v522 = vor.u32 %v519, %v520
        %v523 = vrot.slane %v519, 4
        %v525 = vshrl.u32 %v317, 16
        %v527 = vrot.slane %v525, 7
        %v528 = vshll.u32 %v317, 16
        %v530 = vor.u32 %v527, %v528
        %v531 = vsel %vm328, %v523, %v530
        %v532 = vrot.slane %v527, 4
        %v534 = vshrl.u32 %v318, 16
        %v536 = vrot.slane %v534, 7
        %v537 = vshll.u32 %v318, 16
        %v539 = vor.u32 %v536, %v537
        %v540 = vrot.slane %v536, 4
        %v542 = vshrl.u32 %v319, 16
        %v544 = vrot.slane %v542, 7
        %v545 = vshll.u32 %v319, 16
        %v547 = vor.u32 %v544, %v545
        %v548 = vsel %vm328, %v540, %v547
        %v549 = vrot.slane %v544, 4
        %v551 = vshrl.u32 %v320, 16
        %v553 = vrot.slane %v551, 7
        %v554 = vshll.u32 %v320, 16
        %v556 = vor.u32 %v553, %v554
        %v557 = vrot.slane %v553, 4
        %v559 = vshrl.u32 %v321, 16
        %v561 = vrot.slane %v559, 7
        %v562 = vshll.u32 %v321, 16
        %v564 = vor.u32 %v561, %v562
        %v565 = vsel %vm328, %v557, %v564
        %v566 = vrot.slane %v561, 4
        %v568 = vshrl.u32 %v322, 16
        %v570 = vrot.slane %v568, 7
        %v571 = vshll.u32 %v322, 16
        %v573 = vor.u32 %v570, %v571
        %v574 = vrot.slane %v570, 4
        %v576 = vshrl.u32 %v323, 16
        %v578 = vrot.slane %v576, 7
        %v579 = vshll.u32 %v323, 16
        %v581 = vor.u32 %v578, %v579
        %v582 = vsel %vm328, %v574, %v581
        %v583 = vrot.slane %v578, 4
        %v585 = vshrl.u32 %v324, 16
        %v587 = vrot.slane %v585, 7
        %v588 = vshll.u32 %v324, 16
        %v590 = vor.u32 %v587, %v588
        %v591 = vrot.slane %v587, 4
        %v593 = vshrl.u32 %v325, 16
        %v595 = vrot.slane %v593, 7
        %v596 = vshll.u32 %v325, 16
        %v598 = vor.u32 %v595, %v596
        %v599 = vsel %vm328, %v591, %v598
        %v600 = vrot.slane %v595, 4
        %s649 = scalar_lea.vmem [#allocation2], 12
        %vm650 = vcmask 1043456
        %vm651 = vsmask.f32 7938
        %vm652 = vmand %vm650, %vm651
        %v653 = vld [vmem:[%s649] sm:$0xf]
        %v654 = vsel %vm652, %v335, %v653
        %655 = vst [vmem:[%s649] sm:$0xf] %v654
        %656 = vst [vmem:[%s649 + $0x4] sm:$0xf] %v344
        %vm657 = vcmask 1040384
        %vm658 = vmand %vm657, %vm326
        %v659 = vld [vmem:[%s649 + $0x8] sm:$0x1]
        %v660 = vsel %vm658, %v345, %v659
        %661 = vst [vmem:[%s649 + $0x8] sm:$0x1] %v660
        %v662 = vld [vmem:[%s649 + $0xc] sm:$0xf]
        %v663 = vsel %vm652, %v352, %v662
        %664 = vst [vmem:[%s649 + $0xc] sm:$0xf] %v663
        %665 = vst [vmem:[%s649 + $0x10] sm:$0xf] %v361
        %v666 = vld [vmem:[%s649 + $0x14] sm:$0x1]
        %v667 = vsel %vm658, %v362, %v666
        %668 = vst [vmem:[%s649 + $0x14] sm:$0x1] %v667
        %v669 = vld [vmem:[%s649 + $0x18] sm:$0xf]
        %v670 = vsel %vm652, %v369, %v669
        %671 = vst [vmem:[%s649 + $0x18] sm:$0xf] %v670
        %672 = vst [vmem:[%s649 + $0x1c] sm:$0xf] %v378
        %v673 = vld [vmem:[%s649 + $0x20] sm:$0x1]
        %v674 = vsel %vm658, %v379, %v673
        %675 = vst [vmem:[%s649 + $0x20] sm:$0x1] %v674
        %v676 = vld [vmem:[%s649 + $0x24] sm:$0xf]
        %v677 = vsel %vm652, %v386, %v676
        %678 = vst [vmem:[%s649 + $0x24] sm:$0xf] %v677
        %679 = vst [vmem:[%s649 + $0x28] sm:$0xf] %v395
        %v680 = vld [vmem:[%s649 + $0x2c] sm:$0x1]
        %v681 = vsel %vm658, %v396, %v680
        %682 = vst [vmem:[%s649 + $0x2c] sm:$0x1] %v681
        %v683 = vld [vmem:[%s649 + $0x30] sm:$0xf]
        %v684 = vsel %vm652, %v403, %v683
        %685 = vst [vmem:[%s649 + $0x30] sm:$0xf] %v684
        %686 = vst [vmem:[%s649 + $0x34] sm:$0xf] %v412
        %v687 = vld [vmem:[%s649 + $0x38] sm:$0x1]
        %v688 = vsel %vm658, %v413, %v687
        %689 = vst [vmem:[%s649 + $0x38] sm:$0x1] %v688
        %v690 = vld [vmem:[%s649 + $0x3c] sm:$0xf]
        %v691 = vsel %vm652, %v420, %v690
        %692 = vst [vmem:[%s649 + $0x3c] sm:$0xf] %v691
        %693 = vst [vmem:[%s649 + $0x40] sm:$0xf] %v429
        %v694 = vld [vmem:[%s649 + $0x44] sm:$0x1]
        %v695 = vsel %vm658, %v430, %v694
        %696 = vst [vmem:[%s649 + $0x44] sm:$0x1] %v695
        %v697 = vld [vmem:[%s649 + $0x48] sm:$0xf]
        %v698 = vsel %vm652, %v437, %v697
        %699 = vst [vmem:[%s649 + $0x48] sm:$0xf] %v698
        %700 = vst [vmem:[%s649 + $0x4c] sm:$0xf] %v446
        %v701 = vld [vmem:[%s649 + $0x50] sm:$0x1]
        %v702 = vsel %vm658, %v447, %v701
        %703 = vst [vmem:[%s649 + $0x50] sm:$0x1] %v702
        %v704 = vld [vmem:[%s649 + $0x54] sm:$0xf]
        %v705 = vsel %vm652, %v454, %v704
        %706 = vst [vmem:[%s649 + $0x54] sm:$0xf] %v705
        %707 = vst [vmem:[%s649 + $0x58] sm:$0xf] %v463
        %v708 = vld [vmem:[%s649 + $0x5c] sm:$0x1]
        %v709 = vsel %vm658, %v464, %v708
        %710 = vst [vmem:[%s649 + $0x5c] sm:$0x1] %v709
        %v711 = vld [vmem:[%s649 + $0x60] sm:$0xf]
        %v712 = vsel %vm652, %v471, %v711
        %713 = vst [vmem:[%s649 + $0x60] sm:$0xf] %v712
        %714 = vst [vmem:[%s649 + $0x64] sm:$0xf] %v480
        %v715 = vld [vmem:[%s649 + $0x68] sm:$0x1]
        %v716 = vsel %vm658, %v481, %v715
        %717 = vst [vmem:[%s649 + $0x68] sm:$0x1] %v716
        %v718 = vld [vmem:[%s649 + $0x6c] sm:$0xf]
        %v719 = vsel %vm652, %v488, %v718
        %720 = vst [vmem:[%s649 + $0x6c] sm:$0xf] %v719
        %721 = vst [vmem:[%s649 + $0x70] sm:$0xf] %v497
        %v722 = vld [vmem:[%s649 + $0x74] sm:$0x1]
        %v723 = vsel %vm658, %v498, %v722
        %724 = vst [vmem:[%s649 + $0x74] sm:$0x1] %v723
        %v725 = vld [vmem:[%s649 + $0x78] sm:$0xf]
        %v726 = vsel %vm652, %v505, %v725
        %727 = vst [vmem:[%s649 + $0x78] sm:$0xf] %v726
        %728 = vst [vmem:[%s649 + $0x7c] sm:$0xf] %v514
        %v729 = vld [vmem:[%s649 + $0x80] sm:$0x1]
        %v730 = vsel %vm658, %v515, %v729
        %731 = vst [vmem:[%s649 + $0x80] sm:$0x1] %v730
        %v732 = vld [vmem:[%s649 + $0x84] sm:$0xf]
        %v733 = vsel %vm652, %v522, %v732
        %734 = vst [vmem:[%s649 + $0x84] sm:$0xf] %v733
        %735 = vst [vmem:[%s649 + $0x88] sm:$0xf] %v531
        %v736 = vld [vmem:[%s649 + $0x8c] sm:$0x1]
        %v737 = vsel %vm658, %v532, %v736
        %738 = vst [vmem:[%s649 + $0x8c] sm:$0x1] %v737
        %v739 = vld [vmem:[%s649 + $0x90] sm:$0xf]
        %v740 = vsel %vm652, %v539, %v739
        %741 = vst [vmem:[%s649 + $0x90] sm:$0xf] %v740
        %742 = vst [vmem:[%s649 + $0x94] sm:$0xf] %v548
        %v743 = vld [vmem:[%s649 + $0x98] sm:$0x1]
        %v744 = vsel %vm658, %v549, %v743
        %745 = vst [vmem:[%s649 + $0x98] sm:$0x1] %v744
        %v746 = vld [vmem:[%s649 + $0x9c] sm:$0xf]
        %v747 = vsel %vm652, %v556, %v746
        %748 = vst [vmem:[%s649 + $0x9c] sm:$0xf] %v747
        %749 = vst [vmem:[%s649 + $0xa0] sm:$0xf] %v565
        %v750 = vld [vmem:[%s649 + $0xa4] sm:$0x1]
        %v751 = vsel %vm658, %v566, %v750
        %752 = vst [vmem:[%s649 + $0xa4] sm:$0x1] %v751
        %v753 = vld [vmem:[%s649 + $0xa8] sm:$0xf]
        %v754 = vsel %vm652, %v573, %v753
        %755 = vst [vmem:[%s649 + $0xa8] sm:$0xf] %v754
        %756 = vst [vmem:[%s649 + $0xac] sm:$0xf] %v582
        %v757 = vld [vmem:[%s649 + $0xb0] sm:$0x1]
        %v758 = vsel %vm658, %v583, %v757
        %759 = vst [vmem:[%s649 + $0xb0] sm:$0x1] %v758
        %v760 = vld [vmem:[%s649 + $0xb4] sm:$0xf]
        %v761 = vsel %vm652, %v590, %v760
        %762 = vst [vmem:[%s649 + $0xb4] sm:$0xf] %v761
        %763 = vst [vmem:[%s649 + $0xb8] sm:$0xf] %v599
        %v764 = vld [vmem:[%s649 + $0xbc] sm:$0x1]
        %v765 = vsel %vm658, %v600, %v764
        %766 = vst [vmem:[%s649 + $0xbc] sm:$0x1] %v765
      $region36: #{basic_block_forward.3} parent=31 // pred_fallthru
        _
      %s767 = smul.u32 %s19, 8
      %s768 = smul.u32 %s767, 3
      %s769 = smul.addr %s768, 4
      %s770 = scalar_lea.vmem [#allocation2], %s769
      %v771 = vld [vmem:[%s770] sm:$0xf]
      %v772 = vld [vmem:[%s770 + $0x4] sm:$0xf]
      %v773 = vld [vmem:[%s770 + $0x8] sm:$0x1]
      %v774 = vld [vmem:[%s770 + $0xc] sm:$0xf]
      %v775 = vld [vmem:[%s770 + $0x10] sm:$0xf]
      %v776 = vld [vmem:[%s770 + $0x14] sm:$0x1]
      %v777 = vld [vmem:[%s770 + $0x18] sm:$0xf]
      %v778 = vld [vmem:[%s770 + $0x1c] sm:$0xf]
      %v779 = vld [vmem:[%s770 + $0x20] sm:$0x1]
      %v780 = vld [vmem:[%s770 + $0x24] sm:$0xf]
      %v781 = vld [vmem:[%s770 + $0x28] sm:$0xf]
      %v782 = vld [vmem:[%s770 + $0x2c] sm:$0x1]
      %v783 = vld [vmem:[%s770 + $0x30] sm:$0xf]
      %v784 = vld [vmem:[%s770 + $0x34] sm:$0xf]
      %v785 = vld [vmem:[%s770 + $0x38] sm:$0x1]
      %v786 = vld [vmem:[%s770 + $0x3c] sm:$0xf]
      %v787 = vld [vmem:[%s770 + $0x40] sm:$0xf]
      %v788 = vld [vmem:[%s770 + $0x44] sm:$0x1]
      %v789 = vld [vmem:[%s770 + $0x48] sm:$0xf]
      %v790 = vld [vmem:[%s770 + $0x4c] sm:$0xf]
      %v791 = vld [vmem:[%s770 + $0x50] sm:$0x1]
      %v792 = vld [vmem:[%s770 + $0x54] sm:$0xf]
      %v793 = vld [vmem:[%s770 + $0x58] sm:$0xf]
      %v794 = vld [vmem:[%s770 + $0x5c] sm:$0x1]
      %v795 = vld [vmem:[%s770 + $0x60] sm:$0xf]
      %v796 = vld [vmem:[%s770 + $0x64] sm:$0xf]
      %v797 = vld [vmem:[%s770 + $0x68] sm:$0x1]
      %v798 = vld [vmem:[%s770 + $0x6c] sm:$0xf]
      %v799 = vld [vmem:[%s770 + $0x70] sm:$0xf]
      %v800 = vld [vmem:[%s770 + $0x74] sm:$0x1]
      %vm801 = vsmask.f32 3328
      %vm802 = vsmask.f32 7440
      %vm803 = vmor %vm801, %vm802
      %v805 = vshrl.u32 %v771, 16
      %v807 = vrot.slane %v805, 4
      %v808 = vshll.u32 %v771, 16
      %v810 = vrot.slane %v808, 5
      %v811 = vor.u32 %v807, %v810
      %v812 = vrot.slane %v811, 4
      %v814 = vshll.u32 %v772, 16
      %v816 = vrot.slane %v814, 5
      %v817 = vsel %vm803, %v812, %v816
      %v818 = vshrl.u32 %v772, 16
      %v820 = vrot.slane %v818, 4
      %v821 = vor.u32 %v820, %v816
      %v822 = vrot.slane %v821, 4
      %v824 = vshll.u32 %v773, 16
      %v826 = vrot.slane %v824, 5
      %v827 = vsel %vm803, %v822, %v826
      %v829 = vshrl.u32 %v774, 16
      %v831 = vrot.slane %v829, 4
      %v832 = vshll.u32 %v774, 16
      %v834 = vrot.slane %v832, 5
      %v835 = vor.u32 %v831, %v834
      %v836 = vrot.slane %v835, 4
      %v838 = vshll.u32 %v775, 16
      %v840 = vrot.slane %v838, 5
      %v841 = vsel %vm803, %v836, %v840
      %v842 = vshrl.u32 %v775, 16
      %v844 = vrot.slane %v842, 4
      %v845 = vor.u32 %v844, %v840
      %v846 = vrot.slane %v845, 4
      %v848 = vshll.u32 %v776, 16
      %v850 = vrot.slane %v848, 5
      %v851 = vsel %vm803, %v846, %v850
      %v853 = vshrl.u32 %v777, 16
      %v855 = vrot.slane %v853, 4
      %v856 = vshll.u32 %v777, 16
      %v858 = vrot.slane %v856, 5
      %v859 = vor.u32 %v855, %v858
      %v860 = vrot.slane %v859, 4
      %v862 = vshll.u32 %v778, 16
      %v864 = vrot.slane %v862, 5
      %v865 = vsel %vm803, %v860, %v864
      %v866 = vshrl.u32 %v778, 16
      %v868 = vrot.slane %v866, 4
      %v869 = vor.u32 %v868, %v864
      %v870 = vrot.slane %v869, 4
      %v872 = vshll.u32 %v779, 16
      %v874 = vrot.slane %v872, 5
      %v875 = vsel %vm803, %v870, %v874
      %v877 = vshrl.u32 %v780, 16
      %v879 = vrot.slane %v877, 4
      %v880 = vshll.u32 %v780, 16
      %v882 = vrot.slane %v880, 5
      %v883 = vor.u32 %v879, %v882
      %v884 = vrot.slane %v883, 4
      %v886 = vshll.u32 %v781, 16
      %v888 = vrot.slane %v886, 5
      %v889 = vsel %vm803, %v884, %v888
      %v890 = vshrl.u32 %v781, 16
      %v892 = vrot.slane %v890, 4
      %v893 = vor.u32 %v892, %v888
      %v894 = vrot.slane %v893, 4
      %v896 = vshll.u32 %v782, 16
      %v898 = vrot.slane %v896, 5
      %v899 = vsel %vm803, %v894, %v898
      %v901 = vshrl.u32 %v783, 16
      %v903 = vrot.slane %v901, 4
      %v904 = vshll.u32 %v783, 16
      %v906 = vrot.slane %v904, 5
      %v907 = vor.u32 %v903, %v906
      %v908 = vrot.slane %v907, 4
      %v910 = vshll.u32 %v784, 16
      %v912 = vrot.slane %v910, 5
      %v913 = vsel %vm803, %v908, %v912
      %v914 = vshrl.u32 %v784, 16
      %v916 = vrot.slane %v914, 4
      %v917 = vor.u32 %v916, %v912
      %v918 = vrot.slane %v917, 4
      %v920 = vshll.u32 %v785, 16
      %v922 = vrot.slane %v920, 5
      %v923 = vsel %vm803, %v918, %v922
      %v925 = vshrl.u32 %v786, 16
      %v927 = vrot.slane %v925, 4
      %v928 = vshll.u32 %v786, 16
      %v930 = vrot.slane %v928, 5
      %v931 = vor.u32 %v927, %v930
      %v932 = vrot.slane %v931, 4
      %v934 = vshll.u32 %v787, 16
      %v936 = vrot.slane %v934, 5
      %v937 = vsel %vm803, %v932, %v936
      %v938 = vshrl.u32 %v787, 16
      %v940 = vrot.slane %v938, 4
      %v941 = vor.u32 %v940, %v936
      %v942 = vrot.slane %v941, 4
      %v944 = vshll.u32 %v788, 16
      %v946 = vrot.slane %v944, 5
      %v947 = vsel %vm803, %v942, %v946
      %v949 = vshrl.u32 %v789, 16
      %v951 = vrot.slane %v949, 4
      %v952 = vshll.u32 %v789, 16
      %v954 = vrot.slane %v952, 5
      %v955 = vor.u32 %v951, %v954
      %v956 = vrot.slane %v955, 4
      %v958 = vshll.u32 %v790, 16
      %v960 = vrot.slane %v958, 5
      %v961 = vsel %vm803, %v956, %v960
      %v962 = vshrl.u32 %v790, 16
      %v964 = vrot.slane %v962, 4
      %v965 = vor.u32 %v964, %v960
      %v966 = vrot.slane %v965, 4
      %v968 = vshll.u32 %v791, 16
      %v970 = vrot.slane %v968, 5
      %v971 = vsel %vm803, %v966, %v970
      %v973 = vshrl.u32 %v792, 16
      %v975 = vrot.slane %v973, 4
      %v976 = vshll.u32 %v792, 16
      %v978 = vrot.slane %v976, 5
      %v979 = vor.u32 %v975, %v978
      %v980 = vrot.slane %v979, 4
      %v982 = vshll.u32 %v793, 16
      %v984 = vrot.slane %v982, 5
      %v985 = vsel %vm803, %v980, %v984
      %v986 = vshrl.u32 %v793, 16
      %v988 = vrot.slane %v986, 4
      %v989 = vor.u32 %v988, %v984
      %v990 = vrot.slane %v989, 4
      %v992 = vshll.u32 %v794, 16
      %v994 = vrot.slane %v992, 5
      %v995 = vsel %vm803, %v990, %v994
      %vm1020 = vcmask 1042432
      %vm1021 = vcmask 1046532
      %vm1022 = vmor %vm1020, %vm1021
      %v1023 = vrot.slane %v771, 5
      %v1024 = vrot.slane %v1023, 4
      %v1025 = vrot.slane %v772, 5
      %v1026 = vsel %vm1022, %v1024, %v1025
      %v1027 = vrot.slane %v1025, 4
      %v1028 = vrot.slane %v773, 5
      %v1029 = vsel %vm1022, %v1027, %v1028
      %v1030 = vrot.slane %v774, 5
      %v1031 = vrot.slane %v1030, 4
      %v1032 = vrot.slane %v775, 5
      %v1033 = vsel %vm1022, %v1031, %v1032
      %v1034 = vrot.slane %v1032, 4
      %v1035 = vrot.slane %v776, 5
      %v1036 = vsel %vm1022, %v1034, %v1035
      %v1037 = vrot.slane %v777, 5
      %v1038 = vrot.slane %v1037, 4
      %v1039 = vrot.slane %v778, 5
      %v1040 = vsel %vm1022, %v1038, %v1039
      %v1041 = vrot.slane %v1039, 4
      %v1042 = vrot.slane %v779, 5
      %v1043 = vsel %vm1022, %v1041, %v1042
      %v1044 = vrot.slane %v780, 5
      %v1045 = vrot.slane %v1044, 4
      %v1046 = vrot.slane %v781, 5
      %v1047 = vsel %vm1022, %v1045, %v1046
      %v1048 = vrot.slane %v1046, 4
      %v1049 = vrot.slane %v782, 5
      %v1050 = vsel %vm1022, %v1048, %v1049
      %v1051 = vrot.slane %v783, 5
      %v1052 = vrot.slane %v1051, 4
      %v1053 = vrot.slane %v784, 5
      %v1054 = vsel %vm1022, %v1052, %v1053
      %v1055 = vrot.slane %v1053, 4
      %v1056 = vrot.slane %v785, 5
      %v1057 = vsel %vm1022, %v1055, %v1056
      %v1058 = vrot.slane %v786, 5
      %v1059 = vrot.slane %v1058, 4
      %v1060 = vrot.slane %v787, 5
      %v1061 = vsel %vm1022, %v1059, %v1060
      %v1062 = vrot.slane %v1060, 4
      %v1063 = vrot.slane %v788, 5
      %v1064 = vsel %vm1022, %v1062, %v1063
      %v1065 = vrot.slane %v789, 5
      %v1066 = vrot.slane %v1065, 4
      %v1067 = vrot.slane %v790, 5
      %v1068 = vsel %vm1022, %v1066, %v1067
      %v1069 = vrot.slane %v1067, 4
      %v1070 = vrot.slane %v791, 5
      %v1071 = vsel %vm1022, %v1069, %v1070
      %v1072 = vrot.slane %v792, 5
      %v1073 = vrot.slane %v1072, 4
      %v1074 = vrot.slane %v793, 5
      %v1075 = vsel %vm1022, %v1073, %v1074
      %v1076 = vrot.slane %v1074, 4
      %v1077 = vrot.slane %v794, 5
      %v1078 = vsel %vm1022, %v1076, %v1077
      %v1080 = vshrl.u32 %v795, 16
      %v1082 = vrot.slane %v1080, 4
      %v1083 = vshll.u32 %v795, 16
      %v1085 = vrot.slane %v1083, 5
      %v1086 = vor.u32 %v1082, %v1085
      %v1087 = vrot.slane %v1086, 4
      %v1089 = vshll.u32 %v796, 16
      %v1091 = vrot.slane %v1089, 5
      %v1092 = vsel %vm803, %v1087, %v1091
      %v1093 = vshrl.u32 %v796, 16
      %v1095 = vrot.slane %v1093, 4
      %v1096 = vor.u32 %v1095, %v1091
      %v1097 = vrot.slane %v1096, 4
      %v1099 = vshll.u32 %v797, 16
      %v1101 = vrot.slane %v1099, 5
      %v1102 = vsel %vm803, %v1097, %v1101
      %v1106 = vrot.slane %v795, 5
      %v1107 = vrot.slane %v1106, 4
      %v1108 = vrot.slane %v796, 5
      %v1109 = vsel %vm1022, %v1107, %v1108
      %v1110 = vrot.slane %v1108, 4
      %v1111 = vrot.slane %v797, 5
      %v1112 = vsel %vm1022, %v1110, %v1111
      %v1114 = vshrl.u32 %v798, 16
      %v1116 = vrot.slane %v1114, 4
      %v1117 = vshll.u32 %v798, 16
      %v1119 = vrot.slane %v1117, 5
      %v1120 = vor.u32 %v1116, %v1119
      %v1121 = vrot.slane %v1120, 4
      %v1123 = vshll.u32 %v799, 16
      %v1125 = vrot.slane %v1123, 5
      %v1126 = vsel %vm803, %v1121, %v1125
      %v1127 = vshrl.u32 %v799, 16
      %v1129 = vrot.slane %v1127, 4
      %v1130 = vor.u32 %v1129, %v1125
      %v1131 = vrot.slane %v1130, 4
      %v1133 = vshll.u32 %v800, 16
      %v1135 = vrot.slane %v1133, 5
      %v1136 = vsel %vm803, %v1131, %v1135
      %v1140 = vrot.slane %v798, 5
      %v1141 = vrot.slane %v1140, 4
      %v1142 = vrot.slane %v799, 5
      %v1143 = vsel %vm1022, %v1141, %v1142
      %v1144 = vrot.slane %v1142, 4
      %v1145 = vrot.slane %v800, 5
      %v1146 = vsel %vm1022, %v1144, %v1145
      %v1147 = vunpack.c.l.b16 %v771
      %v1148 = vunpack.c.l.b16 %v772
      %v1149 = vunpack.c.l.b16 %v774
      %v1150 = vunpack.c.l.b16 %v775
      %v1151 = vunpack.c.l.b16 %v777
      %v1152 = vunpack.c.l.b16 %v778
      %v1153 = vunpack.c.l.b16 %v780
      %v1154 = vunpack.c.l.b16 %v781
      %v1155 = vunpack.c.l.b16 %v783
      %v1156 = vunpack.c.l.b16 %v784
      %v1157 = vunpack.c.l.b16 %v786
      %v1158 = vunpack.c.l.b16 %v787
      %v1159 = vunpack.c.l.b16 %v789
      %v1160 = vunpack.c.l.b16 %v790
      %v1161 = vunpack.c.l.b16 %v792
      %v1162 = vunpack.c.l.b16 %v793
      %v1163 = vpack.c.b16 %v1148, %v1147
      %v1164 = vpack.c.b16 %v1150, %v1149
      %v1165 = vpack.c.b16 %v1152, %v1151
      %v1166 = vpack.c.b16 %v1154, %v1153
      %v1167 = vpack.c.b16 %v1156, %v1155
      %v1168 = vpack.c.b16 %v1158, %v1157
      %v1169 = vpack.c.b16 %v1160, %v1159
      %v1170 = vpack.c.b16 %v1162, %v1161
      %v1179 = vunpack.c.l.b16 %v817
      %v1180 = vunpack.c.l.b16 %v827
      %v1181 = vunpack.c.l.b16 %v841
      %v1182 = vunpack.c.l.b16 %v851
      %v1183 = vunpack.c.l.b16 %v865
      %v1184 = vunpack.c.l.b16 %v875
      %v1185 = vunpack.c.l.b16 %v889
      %v1186 = vunpack.c.l.b16 %v899
      %v1187 = vunpack.c.l.b16 %v913
      %v1188 = vunpack.c.l.b16 %v923
      %v1189 = vunpack.c.l.b16 %v937
      %v1190 = vunpack.c.l.b16 %v947
      %v1191 = vunpack.c.l.b16 %v961
      %v1192 = vunpack.c.l.b16 %v971
      %v1193 = vunpack.c.l.b16 %v985
      %v1194 = vunpack.c.l.b16 %v995
      %v1195 = vpack.c.b16 %v1180, %v1179
      %v1196 = vpack.c.b16 %v1182, %v1181
      %v1197 = vpack.c.b16 %v1184, %v1183
      %v1198 = vpack.c.b16 %v1186, %v1185
      %v1199 = vpack.c.b16 %v1188, %v1187
      %v1200 = vpack.c.b16 %v1190, %v1189
      %v1201 = vpack.c.b16 %v1192, %v1191
      %v1202 = vpack.c.b16 %v1194, %v1193
      %v1211 = vunpack.c.l.b16 %v1026
      %v1212 = vunpack.c.l.b16 %v1029
      %v1213 = vunpack.c.l.b16 %v1033
      %v1214 = vunpack.c.l.b16 %v1036
      %v1215 = vunpack.c.l.b16 %v1040
      %v1216 = vunpack.c.l.b16 %v1043
      %v1217 = vunpack.c.l.b16 %v1047
      %v1218 = vunpack.c.l.b16 %v1050
      %v1219 = vunpack.c.l.b16 %v1054
      %v1220 = vunpack.c.l.b16 %v1057
      %v1221 = vunpack.c.l.b16 %v1061
      %v1222 = vunpack.c.l.b16 %v1064
      %v1223 = vunpack.c.l.b16 %v1068
      %v1224 = vunpack.c.l.b16 %v1071
      %v1225 = vunpack.c.l.b16 %v1075
      %v1226 = vunpack.c.l.b16 %v1078
      %v1227 = vpack.c.b16 %v1212, %v1211
      %v1228 = vpack.c.b16 %v1214, %v1213
      %v1229 = vpack.c.b16 %v1216, %v1215
      %v1230 = vpack.c.b16 %v1218, %v1217
      %v1231 = vpack.c.b16 %v1220, %v1219
      %v1232 = vpack.c.b16 %v1222, %v1221
      %v1233 = vpack.c.b16 %v1224, %v1223
      %v1234 = vpack.c.b16 %v1226, %v1225
      %v1243 = vunpack.c.l.b16 %v795
      %v1244 = vunpack.c.l.b16 %v796
      %v1245 = vpack.c.b16 %v1244, %v1243
      %v1247 = vunpack.c.l.b16 %v1092
      %v1248 = vunpack.c.l.b16 %v1102
      %v1249 = vpack.c.b16 %v1248, %v1247
      %v1251 = vunpack.c.l.b16 %v1109
      %v1252 = vunpack.c.l.b16 %v1112
      %v1253 = vpack.c.b16 %v1252, %v1251
      %v1255 = vunpack.c.l.b16 %v798
      %v1256 = vunpack.c.l.b16 %v799
      %v1257 = vpack.c.b16 %v1256, %v1255
      %v1259 = vunpack.c.l.b16 %v1126
      %v1260 = vunpack.c.l.b16 %v1136
      %v1261 = vpack.c.b16 %v1260, %v1259
      %v1263 = vunpack.c.l.b16 %v1143
      %v1264 = vunpack.c.l.b16 %v1146
      %v1265 = vpack.c.b16 %v1264, %v1263
      %v1267 = vld [vmem:[%s1] sm:$0xf]
      %v1268 = vld [vmem:[%s1 + $0x4] sm:$0xf]
      %v1269 = vld [vmem:[%s1 + $0x8] sm:$0xf]
      %v1270 = vld [vmem:[%s1 + $0xc] sm:$0xf]
      %v1271 = vld [vmem:[%s1 + $0x10] sm:$0xf]
      %v1272 = vld [vmem:[%s1 + $0x14] sm:$0xf]
      %v1273 = vld [vmem:[%s1 + $0x18] sm:$0xf]
      %v1274 = vld [vmem:[%s1 + $0x1c] sm:$0xf]
      %v1275 = vld [vmem:[%s1 + $0x20] sm:$0xf]
      %v1276 = vld [vmem:[%s1 + $0x24] sm:$0xf]
      %v1277 = vld [vmem:[%s1 + $0x28] sm:$0xf]
      %v1278 = vld [vmem:[%s1 + $0x2c] sm:$0xf]
      %v1279 = vld [vmem:[%s1 + $0x30] sm:$0xf]
      %v1280 = vld [vmem:[%s1 + $0x34] sm:$0xf]
      %v1281 = vld [vmem:[%s1 + $0x38] sm:$0xf]
      %v1282 = vld [vmem:[%s1 + $0x3c] sm:$0xf]
      %v1283 = vld [vmem:[%s1 + $0x40] sm:$0xf]
      %v1284 = vld [vmem:[%s1 + $0x44] sm:$0xf]
      %v1285 = vld [vmem:[%s1 + $0x48] sm:$0xf]
      %v1286 = vld [vmem:[%s1 + $0x4c] sm:$0xf]
      %v1287 = vld [vmem:[%s1 + $0x50] sm:$0xf]
      %v1288 = vld [vmem:[%s1 + $0x54] sm:$0xf]
      %v1289 = vld [vmem:[%s1 + $0x58] sm:$0xf]
      %v1290 = vld [vmem:[%s1 + $0x5c] sm:$0xf]
      %v1291 = vld [vmem:[%s1 + $0x60] sm:$0xf]
      %v1292 = vld [vmem:[%s1 + $0x64] sm:$0xf]
      %v1293 = vld [vmem:[%s1 + $0x68] sm:$0xf]
      %v1294 = vld [vmem:[%s1 + $0x6c] sm:$0xf]
      %v1295 = vld [vmem:[%s1 + $0x70] sm:$0xf]
      %v1296 = vld [vmem:[%s1 + $0x74] sm:$0xf]
      %v1297 = vld [vmem:[%s1 + $0x78] sm:$0xf]
      %v1298 = vld [vmem:[%s1 + $0x7c] sm:$0xf]
      %v1299 = vld [vmem:[%s1 + $0x80] sm:$0xf]
      %v1300 = vld [vmem:[%s1 + $0x84] sm:$0xf]
      %v1301 = vld [vmem:[%s1 + $0x88] sm:$0xf]
      %v1302 = vld [vmem:[%s1 + $0x8c] sm:$0xf]
      %v1303 = vld [vmem:[%s1 + $0x90] sm:$0xf]
      %v1304 = vld [vmem:[%s1 + $0x94] sm:$0xf]
      %v1305 = vld [vmem:[%s1 + $0x98] sm:$0xf]
      %v1306 = vld [vmem:[%s1 + $0x9c] sm:$0xf]
      %v1307 = vld [vmem:[%s1 + $0xa0] sm:$0xf]
      %v1308 = vld [vmem:[%s1 + $0xa4] sm:$0xf]
      %v1309 = vld [vmem:[%s1 + $0xa8] sm:$0xf]
      %v1310 = vld [vmem:[%s1 + $0xac] sm:$0xf]
      %v1311 = vld [vmem:[%s1 + $0xb0] sm:$0xf]
      %v1312 = vld [vmem:[%s1 + $0xb4] sm:$0xf]
      %v1313 = vld [vmem:[%s1 + $0xb8] sm:$0xf]
      %v1314 = vld [vmem:[%s1 + $0xbc] sm:$0xf]
      %v1315 = vld [vmem:[%s1 + $0xc0] sm:$0xf]
      %v1316 = vld [vmem:[%s1 + $0xc4] sm:$0xf]
      %v1317 = vld [vmem:[%s1 + $0xc8] sm:$0xf]
      %v1318 = vld [vmem:[%s1 + $0xcc] sm:$0xf]
      %v1319 = vld [vmem:[%s1 + $0xd0] sm:$0xf]
      %v1320 = vld [vmem:[%s1 + $0xd4] sm:$0xf]
      %v1321 = vld [vmem:[%s1 + $0xd8] sm:$0xf]
      %v1322 = vld [vmem:[%s1 + $0xdc] sm:$0xf]
      %v1323 = vld [vmem:[%s1 + $0xe0] sm:$0xf]
      %v1324 = vld [vmem:[%s1 + $0xe4] sm:$0xf]
      %v1325 = vld [vmem:[%s1 + $0xe8] sm:$0xf]
      %v1326 = vld [vmem:[%s1 + $0xec] sm:$0xf]
      %v1327 = vld [vmem:[%s1 + $0xf0] sm:$0xf]
      %v1328 = vld [vmem:[%s1 + $0xf4] sm:$0xf]
      %v1329 = vld [vmem:[%s1 + $0xf8] sm:$0xf]
      %v1330 = vld [vmem:[%s1 + $0xfc] sm:$0xf]
      %v1331 = vld [vmem:[%s1 + $0x100] sm:$0xf]
      %v1332 = vld [vmem:[%s1 + $0x104] sm:$0xf]
      %v1333 = vld [vmem:[%s1 + $0x108] sm:$0xf]
      %v1334 = vld [vmem:[%s1 + $0x10c] sm:$0xf]
      %v1335 = vld [vmem:[%s1 + $0x110] sm:$0xf]
      %v1336 = vld [vmem:[%s1 + $0x114] sm:$0xf]
      %v1337 = vld [vmem:[%s1 + $0x118] sm:$0xf]
      %v1338 = vld [vmem:[%s1 + $0x11c] sm:$0xf]
      %v1339 = vld [vmem:[%s1 + $0x120] sm:$0xf]
      %v1340 = vld [vmem:[%s1 + $0x124] sm:$0xf]
      %v1341 = vld [vmem:[%s1 + $0x128] sm:$0xf]
      %v1342 = vld [vmem:[%s1 + $0x12c] sm:$0xf]
      %v1343 = vld [vmem:[%s1 + $0x130] sm:$0xf]
      %v1344 = vld [vmem:[%s1 + $0x134] sm:$0xf]
      %v1345 = vld [vmem:[%s1 + $0x138] sm:$0xf]
      %v1346 = vld [vmem:[%s1 + $0x13c] sm:$0xf]
      %v1347 = vld [vmem:[%s1 + $0x140] sm:$0xf]
      %v1348 = vld [vmem:[%s1 + $0x144] sm:$0xf]
      %v1349 = vld [vmem:[%s1 + $0x148] sm:$0xf]
      %v1350 = vld [vmem:[%s1 + $0x14c] sm:$0xf]
      %v1351 = vld [vmem:[%s1 + $0x150] sm:$0xf]
      %v1352 = vld [vmem:[%s1 + $0x154] sm:$0xf]
      %v1353 = vld [vmem:[%s1 + $0x158] sm:$0xf]
      %v1354 = vld [vmem:[%s1 + $0x15c] sm:$0xf]
      %v1355 = vld [vmem:[%s1 + $0x160] sm:$0xf]
      %v1356 = vld [vmem:[%s1 + $0x164] sm:$0xf]
      %v1357 = vld [vmem:[%s1 + $0x168] sm:$0xf]
      %v1358 = vld [vmem:[%s1 + $0x16c] sm:$0xf]
      %v1359 = vld [vmem:[%s1 + $0x170] sm:$0xf]
      %v1360 = vld [vmem:[%s1 + $0x174] sm:$0xf]
      %v1361 = vld [vmem:[%s1 + $0x178] sm:$0xf]
      %v1362 = vld [vmem:[%s1 + $0x17c] sm:$0xf]
      %v1363 = vld [vmem:[%s1 + $0x180] sm:$0xf]
      %v1364 = vld [vmem:[%s1 + $0x184] sm:$0xf]
      %v1365 = vld [vmem:[%s1 + $0x188] sm:$0xf]
      %v1366 = vld [vmem:[%s1 + $0x18c] sm:$0xf]
      %v1367 = vld [vmem:[%s1 + $0x190] sm:$0xf]
      %v1368 = vld [vmem:[%s1 + $0x194] sm:$0xf]
      %v1369 = vld [vmem:[%s1 + $0x198] sm:$0xf]
      %v1370 = vld [vmem:[%s1 + $0x19c] sm:$0xf]
      %v1371 = vld [vmem:[%s1 + $0x1a0] sm:$0xf]
      %v1372 = vld [vmem:[%s1 + $0x1a4] sm:$0xf]
      %v1373 = vld [vmem:[%s1 + $0x1a8] sm:$0xf]
      %v1374 = vld [vmem:[%s1 + $0x1ac] sm:$0xf]
      %v1375 = vld [vmem:[%s1 + $0x1b0] sm:$0xf]
      %v1376 = vld [vmem:[%s1 + $0x1b4] sm:$0xf]
      %v1377 = vld [vmem:[%s1 + $0x1b8] sm:$0xf]
      %v1378 = vld [vmem:[%s1 + $0x1bc] sm:$0xf]
      %v1379 = vld [vmem:[%s1 + $0x1c0] sm:$0xf]
      %v1380 = vld [vmem:[%s1 + $0x1c4] sm:$0xf]
      %v1381 = vld [vmem:[%s1 + $0x1c8] sm:$0xf]
      %v1382 = vld [vmem:[%s1 + $0x1cc] sm:$0xf]
      %v1383 = vld [vmem:[%s1 + $0x1d0] sm:$0xf]
      %v1384 = vld [vmem:[%s1 + $0x1d4] sm:$0xf]
      %v1385 = vld [vmem:[%s1 + $0x1d8] sm:$0xf]
      %v1386 = vld [vmem:[%s1 + $0x1dc] sm:$0xf]
      %v1387 = vld [vmem:[%s1 + $0x1e0] sm:$0xf]
      %v1388 = vld [vmem:[%s1 + $0x1e4] sm:$0xf]
      %v1389 = vld [vmem:[%s1 + $0x1e8] sm:$0xf]
      %v1390 = vld [vmem:[%s1 + $0x1ec] sm:$0xf]
      %v1391 = vld [vmem:[%s1 + $0x1f0] sm:$0xf]
      %v1392 = vld [vmem:[%s1 + $0x1f4] sm:$0xf]
      %v1393 = vld [vmem:[%s1 + $0x1f8] sm:$0xf]
      %v1394 = vld [vmem:[%s1 + $0x1fc] sm:$0xf]
      %v1395 = vld [vmem:[%s1 + $0x200] sm:$0xf]
      %v1396 = vld [vmem:[%s1 + $0x204] sm:$0xf]
      %v1397 = vld [vmem:[%s1 + $0x208] sm:$0xf]
      %v1398 = vld [vmem:[%s1 + $0x20c] sm:$0xf]
      %v1399 = vld [vmem:[%s1 + $0x210] sm:$0xf]
      %v1400 = vld [vmem:[%s1 + $0x214] sm:$0xf]
      %v1401 = vld [vmem:[%s1 + $0x218] sm:$0xf]
      %v1402 = vld [vmem:[%s1 + $0x21c] sm:$0xf]
      %v1403 = vld [vmem:[%s1 + $0x220] sm:$0xf]
      %v1404 = vld [vmem:[%s1 + $0x224] sm:$0xf]
      %v1405 = vld [vmem:[%s1 + $0x228] sm:$0xf]
      %v1406 = vld [vmem:[%s1 + $0x22c] sm:$0xf]
      %v1407 = vld [vmem:[%s1 + $0x230] sm:$0xf]
      %v1408 = vld [vmem:[%s1 + $0x234] sm:$0xf]
      %v1409 = vld [vmem:[%s1 + $0x238] sm:$0xf]
      %v1410 = vld [vmem:[%s1 + $0x23c] sm:$0xf]
      %v1555 = vunpack.c.l.b16 %v1267
      %v1556 = vunpack.c.l.b16 %v1268
      %v1557 = vunpack.c.l.b16 %v1269
      %v1558 = vunpack.c.l.b16 %v1270
      %v1559 = vunpack.c.l.b16 %v1271
      %v1560 = vunpack.c.l.b16 %v1272
      %v1561 = vunpack.c.l.b16 %v1273
      %v1562 = vunpack.c.l.b16 %v1274
      %v1563 = vunpack.c.l.b16 %v1275
      %v1564 = vunpack.c.l.b16 %v1276
      %v1565 = vunpack.c.l.b16 %v1277
      %v1566 = vunpack.c.l.b16 %v1278
      %v1567 = vunpack.c.l.b16 %v1279
      %v1568 = vunpack.c.l.b16 %v1280
      %v1569 = vunpack.c.l.b16 %v1281
      %v1570 = vunpack.c.l.b16 %v1282
      %v1571 = vunpack.c.l.b16 %v1283
      %v1572 = vunpack.c.l.b16 %v1284
      %v1573 = vunpack.c.l.b16 %v1285
      %v1574 = vunpack.c.l.b16 %v1286
      %v1575 = vunpack.c.l.b16 %v1287
      %v1576 = vunpack.c.l.b16 %v1288
      %v1577 = vunpack.c.l.b16 %v1289
      %v1578 = vunpack.c.l.b16 %v1290
      %v1579 = vunpack.c.l.b16 %v1291
      %v1580 = vunpack.c.l.b16 %v1292
      %v1581 = vunpack.c.l.b16 %v1293
      %v1582 = vunpack.c.l.b16 %v1294
      %v1583 = vunpack.c.l.b16 %v1295
      %v1584 = vunpack.c.l.b16 %v1296
      %v1585 = vunpack.c.l.b16 %v1297
      %v1586 = vunpack.c.l.b16 %v1298
      %v1587 = vunpack.c.l.b16 %v1299
      %v1588 = vunpack.c.l.b16 %v1300
      %v1589 = vunpack.c.l.b16 %v1301
      %v1590 = vunpack.c.l.b16 %v1302
      %v1591 = vunpack.c.l.b16 %v1303
      %v1592 = vunpack.c.l.b16 %v1304
      %v1593 = vunpack.c.l.b16 %v1305
      %v1594 = vunpack.c.l.b16 %v1306
      %v1595 = vunpack.c.l.b16 %v1307
      %v1596 = vunpack.c.l.b16 %v1308
      %v1597 = vunpack.c.l.b16 %v1309
      %v1598 = vunpack.c.l.b16 %v1310
      %v1599 = vunpack.c.l.b16 %v1311
      %v1600 = vunpack.c.l.b16 %v1312
      %v1601 = vunpack.c.l.b16 %v1313
      %v1602 = vunpack.c.l.b16 %v1314
      %v1603 = vunpack.c.l.b16 %v1315
      %v1604 = vunpack.c.l.b16 %v1316
      %v1605 = vunpack.c.l.b16 %v1317
      %v1606 = vunpack.c.l.b16 %v1318
      %v1607 = vunpack.c.l.b16 %v1319
      %v1608 = vunpack.c.l.b16 %v1320
      %v1609 = vunpack.c.l.b16 %v1321
      %v1610 = vunpack.c.l.b16 %v1322
      %v1611 = vunpack.c.l.b16 %v1323
      %v1612 = vunpack.c.l.b16 %v1324
      %v1613 = vunpack.c.l.b16 %v1325
      %v1614 = vunpack.c.l.b16 %v1326
      %v1615 = vunpack.c.l.b16 %v1327
      %v1616 = vunpack.c.l.b16 %v1328
      %v1617 = vunpack.c.l.b16 %v1329
      %v1618 = vunpack.c.l.b16 %v1330
      %v1619 = vunpack.c.l.b16 %v1331
      %v1620 = vunpack.c.l.b16 %v1332
      %v1621 = vunpack.c.l.b16 %v1333
      %v1622 = vunpack.c.l.b16 %v1334
      %v1623 = vunpack.c.l.b16 %v1335
      %v1624 = vunpack.c.l.b16 %v1336
      %v1625 = vunpack.c.l.b16 %v1337
      %v1626 = vunpack.c.l.b16 %v1338
      %v1627 = vunpack.c.l.b16 %v1339
      %v1628 = vunpack.c.l.b16 %v1340
      %v1629 = vunpack.c.l.b16 %v1341
      %v1630 = vunpack.c.l.b16 %v1342
      %v1631 = vunpack.c.l.b16 %v1343
      %v1632 = vunpack.c.l.b16 %v1344
      %v1633 = vunpack.c.l.b16 %v1345
      %v1634 = vunpack.c.l.b16 %v1346
      %v1635 = vunpack.c.l.b16 %v1347
      %v1636 = vunpack.c.l.b16 %v1348
      %v1637 = vunpack.c.l.b16 %v1349
      %v1638 = vunpack.c.l.b16 %v1350
      %v1639 = vunpack.c.l.b16 %v1351
      %v1640 = vunpack.c.l.b16 %v1352
      %v1641 = vunpack.c.l.b16 %v1353
      %v1642 = vunpack.c.l.b16 %v1354
      %v1643 = vunpack.c.l.b16 %v1355
      %v1644 = vunpack.c.l.b16 %v1356
      %v1645 = vunpack.c.l.b16 %v1357
      %v1646 = vunpack.c.l.b16 %v1358
      %v1647 = vunpack.c.l.b16 %v1359
      %v1648 = vunpack.c.l.b16 %v1360
      %v1649 = vunpack.c.l.b16 %v1361
      %v1650 = vunpack.c.l.b16 %v1362
      %v1651 = vunpack.c.l.b16 %v1363
      %v1652 = vunpack.c.l.b16 %v1364
      %v1653 = vunpack.c.l.b16 %v1365
      %v1654 = vunpack.c.l.b16 %v1366
      %v1655 = vunpack.c.l.b16 %v1367
      %v1656 = vunpack.c.l.b16 %v1368
      %v1657 = vunpack.c.l.b16 %v1369
      %v1658 = vunpack.c.l.b16 %v1370
      %v1659 = vunpack.c.l.b16 %v1371
      %v1660 = vunpack.c.l.b16 %v1372
      %v1661 = vunpack.c.l.b16 %v1373
      %v1662 = vunpack.c.l.b16 %v1374
      %v1663 = vunpack.c.l.b16 %v1375
      %v1664 = vunpack.c.l.b16 %v1376
      %v1665 = vunpack.c.l.b16 %v1377
      %v1666 = vunpack.c.l.b16 %v1378
      %v1667 = vunpack.c.l.b16 %v1379
      %v1668 = vunpack.c.l.b16 %v1380
      %v1669 = vunpack.c.l.b16 %v1381
      %v1670 = vunpack.c.l.b16 %v1382
      %v1671 = vunpack.c.l.b16 %v1383
      %v1672 = vunpack.c.l.b16 %v1384
      %v1673 = vunpack.c.l.b16 %v1385
      %v1674 = vunpack.c.l.b16 %v1386
      %v1675 = vunpack.c.l.b16 %v1387
      %v1676 = vunpack.c.l.b16 %v1388
      %v1677 = vunpack.c.l.b16 %v1389
      %v1678 = vunpack.c.l.b16 %v1390
      %v1679 = vunpack.c.l.b16 %v1391
      %v1680 = vunpack.c.l.b16 %v1392
      %v1681 = vunpack.c.l.b16 %v1393
      %v1682 = vunpack.c.l.b16 %v1394
      %v1683 = vunpack.c.l.b16 %v1395
      %v1684 = vunpack.c.l.b16 %v1396
      %v1685 = vunpack.c.l.b16 %v1397
      %v1686 = vunpack.c.l.b16 %v1398
      %v1687 = vunpack.c.l.b16 %v1399
      %v1688 = vunpack.c.l.b16 %v1400
      %v1689 = vunpack.c.l.b16 %v1401
      %v1690 = vunpack.c.l.b16 %v1402
      %v1691 = vunpack.c.l.b16 %v1403
      %v1692 = vunpack.c.l.b16 %v1404
      %v1693 = vunpack.c.l.b16 %v1405
      %v1694 = vunpack.c.l.b16 %v1406
      %v1695 = vunpack.c.l.b16 %v1407
      %v1696 = vunpack.c.l.b16 %v1408
      %v1697 = vunpack.c.l.b16 %v1409
      %v1698 = vunpack.c.l.b16 %v1410
      %v1699 = vpack.c.b16 %v1556, %v1555
      %v1700 = vpack.c.b16 %v1558, %v1557
      %v1701 = vpack.c.b16 %v1560, %v1559
      %v1702 = vpack.c.b16 %v1562, %v1561
      %v1703 = vpack.c.b16 %v1564, %v1563
      %v1704 = vpack.c.b16 %v1566, %v1565
      %v1705 = vpack.c.b16 %v1568, %v1567
      %v1706 = vpack.c.b16 %v1570, %v1569
      %v1707 = vpack.c.b16 %v1572, %v1571
      %v1708 = vpack.c.b16 %v1574, %v1573
      %v1709 = vpack.c.b16 %v1576, %v1575
      %v1710 = vpack.c.b16 %v1578, %v1577
      %v1711 = vpack.c.b16 %v1580, %v1579
      %v1712 = vpack.c.b16 %v1582, %v1581
      %v1713 = vpack.c.b16 %v1584, %v1583
      %v1714 = vpack.c.b16 %v1586, %v1585
      %v1715 = vpack.c.b16 %v1588, %v1587
      %v1716 = vpack.c.b16 %v1590, %v1589
      %v1717 = vpack.c.b16 %v1592, %v1591
      %v1718 = vpack.c.b16 %v1594, %v1593
      %v1719 = vpack.c.b16 %v1596, %v1595
      %v1720 = vpack.c.b16 %v1598, %v1597
      %v1721 = vpack.c.b16 %v1600, %v1599
      %v1722 = vpack.c.b16 %v1602, %v1601
      %v1723 = vpack.c.b16 %v1604, %v1603
      %v1724 = vpack.c.b16 %v1606, %v1605
      %v1725 = vpack.c.b16 %v1608, %v1607
      %v1726 = vpack.c.b16 %v1610, %v1609
      %v1727 = vpack.c.b16 %v1612, %v1611
      %v1728 = vpack.c.b16 %v1614, %v1613
      %v1729 = vpack.c.b16 %v1616, %v1615
      %v1730 = vpack.c.b16 %v1618, %v1617
      %v1731 = vpack.c.b16 %v1620, %v1619
      %v1732 = vpack.c.b16 %v1622, %v1621
      %v1733 = vpack.c.b16 %v1624, %v1623
      %v1734 = vpack.c.b16 %v1626, %v1625
      %v1735 = vpack.c.b16 %v1628, %v1627
      %v1736 = vpack.c.b16 %v1630, %v1629
      %v1737 = vpack.c.b16 %v1632, %v1631
      %v1738 = vpack.c.b16 %v1634, %v1633
      %v1739 = vpack.c.b16 %v1636, %v1635
      %v1740 = vpack.c.b16 %v1638, %v1637
      %v1741 = vpack.c.b16 %v1640, %v1639
      %v1742 = vpack.c.b16 %v1642, %v1641
      %v1743 = vpack.c.b16 %v1644, %v1643
      %v1744 = vpack.c.b16 %v1646, %v1645
      %v1745 = vpack.c.b16 %v1648, %v1647
      %v1746 = vpack.c.b16 %v1650, %v1649
      %v1747 = vpack.c.b16 %v1652, %v1651
      %v1748 = vpack.c.b16 %v1654, %v1653
      %v1749 = vpack.c.b16 %v1656, %v1655
      %v1750 = vpack.c.b16 %v1658, %v1657
      %v1751 = vpack.c.b16 %v1660, %v1659
      %v1752 = vpack.c.b16 %v1662, %v1661
      %v1753 = vpack.c.b16 %v1664, %v1663
      %v1754 = vpack.c.b16 %v1666, %v1665
      %v1755 = vpack.c.b16 %v1668, %v1667
      %v1756 = vpack.c.b16 %v1670, %v1669
      %v1757 = vpack.c.b16 %v1672, %v1671
      %v1758 = vpack.c.b16 %v1674, %v1673
      %v1759 = vpack.c.b16 %v1676, %v1675
      %v1760 = vpack.c.b16 %v1678, %v1677
      %v1761 = vpack.c.b16 %v1680, %v1679
      %v1762 = vpack.c.b16 %v1682, %v1681
      %v1763 = vpack.c.b16 %v1684, %v1683
      %v1764 = vpack.c.b16 %v1686, %v1685
      %v1765 = vpack.c.b16 %v1688, %v1687
      %v1766 = vpack.c.b16 %v1690, %v1689
      %v1767 = vpack.c.b16 %v1692, %v1691
      %v1768 = vpack.c.b16 %v1694, %v1693
      %v1769 = vpack.c.b16 %v1696, %v1695
      %v1770 = vpack.c.b16 %v1698, %v1697
      %1843 = vmatprep.subr.bf16.mxu0 0
      %1844 = vmatpush1.bf16.msra.mxu0 %v1706
      %1845 = vmatprep.subr.bf16.mxu0 0
      %1846 = vmatpush1.bf16.msra.mxu0 %v1705
      %1847 = vmatprep.subr.bf16.mxu0 0
      %1848 = vmatpush1.bf16.msra.mxu0 %v1704
      %1849 = vmatprep.subr.bf16.mxu0 0
      %1850 = vmatpush1.bf16.msra.mxu0 %v1703
      %1851 = vmatprep.subr.bf16.mxu0 0
      %1852 = vmatpush1.bf16.msra.mxu0 %v1702
      %1853 = vmatprep.subr.bf16.mxu0 0
      %1854 = vmatpush1.bf16.msra.mxu0 %v1701
      %1855 = vmatprep.subr.bf16.mxu0 0
      %1856 = vmatpush1.bf16.msra.mxu0 %v1700
      %1857 = vmatprep.subr.bf16.mxu0 0
      %1858 = vmatpush1.bf16.msra.mxu0 %v1699
      %1859 = vmatprep.subr.bf16.mxu0 0
      %1860 = vmatpush2.bf16.msra.mxu0 %v1714
      %1861 = vmatprep.subr.bf16.mxu0 0
      %1862 = vmatpush2.bf16.msra.mxu0 %v1713
      %1863 = vmatprep.subr.bf16.mxu0 0
      %1864 = vmatpush2.bf16.msra.mxu0 %v1712
      %1865 = vmatprep.subr.bf16.mxu0 0
      %1866 = vmatpush2.bf16.msra.mxu0 %v1711
      %1867 = vmatprep.subr.bf16.mxu0 0
      %1868 = vmatpush2.bf16.msra.mxu0 %v1710
      %1869 = vmatprep.subr.bf16.mxu0 0
      %1870 = vmatpush2.bf16.msra.mxu0 %v1709
      %1871 = vmatprep.subr.bf16.mxu0 0
      %1872 = vmatpush2.bf16.msra.mxu0 %v1708
      %1873 = vmatprep.subr.bf16.mxu0 0
      %1874 = vmatpush2.bf16.msra.mxu0 %v1707
      %1875 = vmatprep.mubr.bf16.mxu0 %v1195
      %1876 = vmatmul.mubr.bf16.gmra.mxu0 %v1163
      %v1877 = vpop.f32.mrf.mxu0
      %v1878 = vadd.f32 0.0, %v1877
      %v1879 = vpop.f32.mrf.mxu0
      %v1880 = vpop.f32.mrf.mxu0
      %v1881 = vadd.f32 0.0, %v1880
      %v1882 = vpop.f32.mrf.mxu0
      %1883 = vmatprep.mubr.bf16.mxu0 %v1196
      %1884 = vmatmul.mubr.bf16.gmra.mxu0 %v1164
      %v1885 = vpop.f32.mrf.mxu0
      %v1886 = vadd.f32 0.0, %v1885
      %v1887 = vpop.f32.mrf.mxu0
      %v1888 = vpop.f32.mrf.mxu0
      %v1889 = vadd.f32 0.0, %v1888
      %v1890 = vpop.f32.mrf.mxu0
      %1891 = vmatprep.mubr.bf16.mxu0 %v1197
      %1892 = vmatmul.mubr.bf16.gmra.mxu0 %v1165
      %v1893 = vpop.f32.mrf.mxu0
      %v1894 = vadd.f32 0.0, %v1893
      %v1895 = vpop.f32.mrf.mxu0
      %v1896 = vpop.f32.mrf.mxu0
      %v1897 = vadd.f32 0.0, %v1896
      %v1898 = vpop.f32.mrf.mxu0
      %1899 = vmatprep.mubr.bf16.mxu0 %v1198
      %1900 = vmatmul.mubr.bf16.gmra.mxu0 %v1166
      %v1901 = vpop.f32.mrf.mxu0
      %v1902 = vadd.f32 0.0, %v1901
      %v1903 = vpop.f32.mrf.mxu0
      %v1904 = vpop.f32.mrf.mxu0
      %v1905 = vadd.f32 0.0, %v1904
      %v1906 = vpop.f32.mrf.mxu0
      %1907 = vmatprep.mubr.bf16.mxu0 %v1199
      %1908 = vmatmul.mubr.bf16.gmra.mxu0 %v1167
      %v1909 = vpop.f32.mrf.mxu0
      %v1910 = vadd.f32 0.0, %v1909
      %v1911 = vpop.f32.mrf.mxu0
      %v1912 = vpop.f32.mrf.mxu0
      %v1913 = vadd.f32 0.0, %v1912
      %v1914 = vpop.f32.mrf.mxu0
      %1915 = vmatprep.mubr.bf16.mxu0 %v1200
      %1916 = vmatmul.mubr.bf16.gmra.mxu0 %v1168
      %v1917 = vpop.f32.mrf.mxu0
      %v1918 = vadd.f32 0.0, %v1917
      %v1919 = vpop.f32.mrf.mxu0
      %v1920 = vpop.f32.mrf.mxu0
      %v1921 = vadd.f32 0.0, %v1920
      %v1922 = vpop.f32.mrf.mxu0
      %1923 = vmatprep.mubr.bf16.mxu0 %v1201
      %1924 = vmatmul.mubr.bf16.gmra.mxu0 %v1169
      %v1925 = vpop.f32.mrf.mxu0
      %v1926 = vadd.f32 0.0, %v1925
      %v1927 = vpop.f32.mrf.mxu0
      %v1928 = vpop.f32.mrf.mxu0
      %v1929 = vadd.f32 0.0, %v1928
      %v1930 = vpop.f32.mrf.mxu0
      %1931 = vmatprep.mubr.bf16.mxu0 %v1202
      %1932 = vmatmul.mubr.bf16.gmra.mxu0 %v1170
      %v1933 = vpop.f32.mrf.mxu0
      %v1934 = vadd.f32 0.0, %v1933
      %v1935 = vpop.f32.mrf.mxu0
      %v1936 = vpop.f32.mrf.mxu0
      %v1937 = vadd.f32 0.0, %v1936
      %v1938 = vpop.f32.mrf.mxu0
      %1939 = vdwg.mxu0
      %1940 = vmatprep.subr.bf16.mxu0 0
      %1941 = vmatpush1.bf16.msra.mxu0 %v1722
      %1942 = vmatprep.subr.bf16.mxu0 0
      %1943 = vmatpush1.bf16.msra.mxu0 %v1721
      %1944 = vmatprep.subr.bf16.mxu0 0
      %1945 = vmatpush1.bf16.msra.mxu0 %v1720
      %1946 = vmatprep.subr.bf16.mxu0 0
      %1947 = vmatpush1.bf16.msra.mxu0 %v1719
      %1948 = vmatprep.subr.bf16.mxu0 0
      %1949 = vmatpush1.bf16.msra.mxu0 %v1718
      %1950 = vmatprep.subr.bf16.mxu0 0
      %1951 = vmatpush1.bf16.msra.mxu0 %v1717
      %1952 = vmatprep.subr.bf16.mxu0 0
      %1953 = vmatpush1.bf16.msra.mxu0 %v1716
      %1954 = vmatprep.subr.bf16.mxu0 0
      %1955 = vmatpush1.bf16.msra.mxu0 %v1715
      %1956 = vmatprep.subr.bf16.mxu0 0
      %1957 = vmatpush2.bf16.msra.mxu0 %v1730
      %1958 = vmatprep.subr.bf16.mxu0 0
      %1959 = vmatpush2.bf16.msra.mxu0 %v1729
      %1960 = vmatprep.subr.bf16.mxu0 0
      %1961 = vmatpush2.bf16.msra.mxu0 %v1728
      %1962 = vmatprep.subr.bf16.mxu0 0
      %1963 = vmatpush2.bf16.msra.mxu0 %v1727
      %1964 = vmatprep.subr.bf16.mxu0 0
      %1965 = vmatpush2.bf16.msra.mxu0 %v1726
      %1966 = vmatprep.subr.bf16.mxu0 0
      %1967 = vmatpush2.bf16.msra.mxu0 %v1725
      %1968 = vmatprep.subr.bf16.mxu0 0
      %1969 = vmatpush2.bf16.msra.mxu0 %v1724
      %1970 = vmatprep.subr.bf16.mxu0 0
      %1971 = vmatpush2.bf16.msra.mxu0 %v1723
      %1972 = vmatprep.mubr.bf16.mxu0 %v1164
      %1973 = vmatmul.mubr.bf16.gmra.mxu0 %v1227
      %v1974 = vpop.f32.mrf.mxu0
      %v1975 = vadd.f32 %v1878, %v1974
      %v1976 = vpop.f32.mrf.mxu0
      %v1977 = vpop.f32.mrf.mxu0
      %v1978 = vadd.f32 %v1881, %v1977
      %v1979 = vpop.f32.mrf.mxu0
      %1980 = vmatprep.mubr.bf16.mxu0 %v1165
      %1981 = vmatmul.mubr.bf16.gmra.mxu0 %v1228
      %v1982 = vpop.f32.mrf.mxu0
      %v1983 = vadd.f32 %v1886, %v1982
      %v1984 = vpop.f32.mrf.mxu0
      %v1985 = vpop.f32.mrf.mxu0
      %v1986 = vadd.f32 %v1889, %v1985
      %v1987 = vpop.f32.mrf.mxu0
      %1988 = vmatprep.mubr.bf16.mxu0 %v1166
      %1989 = vmatmul.mubr.bf16.gmra.mxu0 %v1229
      %v1990 = vpop.f32.mrf.mxu0
      %v1991 = vadd.f32 %v1894, %v1990
      %v1992 = vpop.f32.mrf.mxu0
      %v1993 = vpop.f32.mrf.mxu0
      %v1994 = vadd.f32 %v1897, %v1993
      %v1995 = vpop.f32.mrf.mxu0
      %1996 = vmatprep.mubr.bf16.mxu0 %v1167
      %1997 = vmatmul.mubr.bf16.gmra.mxu0 %v1230
      %v1998 = vpop.f32.mrf.mxu0
      %v1999 = vadd.f32 %v1902, %v1998
      %v2000 = vpop.f32.mrf.mxu0
      %v2001 = vpop.f32.mrf.mxu0
      %v2002 = vadd.f32 %v1905, %v2001
      %v2003 = vpop.f32.mrf.mxu0
      %2004 = vmatprep.mubr.bf16.mxu0 %v1168
      %2005 = vmatmul.mubr.bf16.gmra.mxu0 %v1231
      %v2006 = vpop.f32.mrf.mxu0
      %v2007 = vadd.f32 %v1910, %v2006
      %v2008 = vpop.f32.mrf.mxu0
      %v2009 = vpop.f32.mrf.mxu0
      %v2010 = vadd.f32 %v1913, %v2009
      %v2011 = vpop.f32.mrf.mxu0
      %2012 = vmatprep.mubr.bf16.mxu0 %v1169
      %2013 = vmatmul.mubr.bf16.gmra.mxu0 %v1232
      %v2014 = vpop.f32.mrf.mxu0
      %v2015 = vadd.f32 %v1918, %v2014
      %v2016 = vpop.f32.mrf.mxu0
      %v2017 = vpop.f32.mrf.mxu0
      %v2018 = vadd.f32 %v1921, %v2017
      %v2019 = vpop.f32.mrf.mxu0
      %2020 = vmatprep.mubr.bf16.mxu0 %v1170
      %2021 = vmatmul.mubr.bf16.gmra.mxu0 %v1233
      %v2022 = vpop.f32.mrf.mxu0
      %v2023 = vadd.f32 %v1926, %v2022
      %v2024 = vpop.f32.mrf.mxu0
      %v2025 = vpop.f32.mrf.mxu0
      %v2026 = vadd.f32 %v1929, %v2025
      %v2027 = vpop.f32.mrf.mxu0
      %2028 = vmatprep.mubr.bf16.mxu0 %v1245
      %2029 = vmatmul.mubr.bf16.gmra.mxu0 %v1234
      %v2030 = vpop.f32.mrf.mxu0
      %v2031 = vadd.f32 %v1934, %v2030
      %v2032 = vpop.f32.mrf.mxu0
      %v2033 = vpop.f32.mrf.mxu0
      %v2034 = vadd.f32 %v1937, %v2033
      %v2035 = vpop.f32.mrf.mxu0
      %2036 = vdwg.mxu0
      %2037 = vmatprep.subr.bf16.mxu0 0
      %2038 = vmatpush1.bf16.msra.mxu0 %v1738
      %2039 = vmatprep.subr.bf16.mxu0 0
      %2040 = vmatpush1.bf16.msra.mxu0 %v1737
      %2041 = vmatprep.subr.bf16.mxu0 0
      %2042 = vmatpush1.bf16.msra.mxu0 %v1736
      %2043 = vmatprep.subr.bf16.mxu0 0
      %2044 = vmatpush1.bf16.msra.mxu0 %v1735
      %2045 = vmatprep.subr.bf16.mxu0 0
      %2046 = vmatpush1.bf16.msra.mxu0 %v1734
      %2047 = vmatprep.subr.bf16.mxu0 0
      %2048 = vmatpush1.bf16.msra.mxu0 %v1733
      %2049 = vmatprep.subr.bf16.mxu0 0
      %2050 = vmatpush1.bf16.msra.mxu0 %v1732
      %2051 = vmatprep.subr.bf16.mxu0 0
      %2052 = vmatpush1.bf16.msra.mxu0 %v1731
      %2053 = vmatprep.subr.bf16.mxu0 0
      %2054 = vmatpush2.bf16.msra.mxu0 %v1746
      %2055 = vmatprep.subr.bf16.mxu0 0
      %2056 = vmatpush2.bf16.msra.mxu0 %v1745
      %2057 = vmatprep.subr.bf16.mxu0 0
      %2058 = vmatpush2.bf16.msra.mxu0 %v1744
      %2059 = vmatprep.subr.bf16.mxu0 0
      %2060 = vmatpush2.bf16.msra.mxu0 %v1743
      %2061 = vmatprep.subr.bf16.mxu0 0
      %2062 = vmatpush2.bf16.msra.mxu0 %v1742
      %2063 = vmatprep.subr.bf16.mxu0 0
      %2064 = vmatpush2.bf16.msra.mxu0 %v1741
      %2065 = vmatprep.subr.bf16.mxu0 0
      %2066 = vmatpush2.bf16.msra.mxu0 %v1740
      %2067 = vmatprep.subr.bf16.mxu0 0
      %2068 = vmatpush2.bf16.msra.mxu0 %v1739
      %2069 = vmatprep.mubr.bf16.mxu0 %v1228
      %2070 = vmatmul.mubr.bf16.gmra.mxu0 %v1196
      %v2071 = vpop.f32.mrf.mxu0
      %v2072 = vadd.f32 %v1975, %v2071
      %v2073 = vpop.f32.mrf.mxu0
      %v2074 = vpop.f32.mrf.mxu0
      %v2075 = vadd.f32 %v1978, %v2074
      %v2076 = vpop.f32.mrf.mxu0
      %2077 = vmatprep.mubr.bf16.mxu0 %v1229
      %2078 = vmatmul.mubr.bf16.gmra.mxu0 %v1197
      %v2079 = vpop.f32.mrf.mxu0
      %v2080 = vadd.f32 %v1983, %v2079
      %v2081 = vpop.f32.mrf.mxu0
      %v2082 = vpop.f32.mrf.mxu0
      %v2083 = vadd.f32 %v1986, %v2082
      %v2084 = vpop.f32.mrf.mxu0
      %2085 = vmatprep.mubr.bf16.mxu0 %v1230
      %2086 = vmatmul.mubr.bf16.gmra.mxu0 %v1198
      %v2087 = vpop.f32.mrf.mxu0
      %v2088 = vadd.f32 %v1991, %v2087
      %v2089 = vpop.f32.mrf.mxu0
      %v2090 = vpop.f32.mrf.mxu0
      %v2091 = vadd.f32 %v1994, %v2090
      %v2092 = vpop.f32.mrf.mxu0
      %2093 = vmatprep.mubr.bf16.mxu0 %v1231
      %2094 = vmatmul.mubr.bf16.gmra.mxu0 %v1199
      %v2095 = vpop.f32.mrf.mxu0
      %v2096 = vadd.f32 %v1999, %v2095
      %v2097 = vpop.f32.mrf.mxu0
      %v2098 = vpop.f32.mrf.mxu0
      %v2099 = vadd.f32 %v2002, %v2098
      %v2100 = vpop.f32.mrf.mxu0
      %2101 = vmatprep.mubr.bf16.mxu0 %v1232
      %2102 = vmatmul.mubr.bf16.gmra.mxu0 %v1200
      %v2103 = vpop.f32.mrf.mxu0
      %v2104 = vadd.f32 %v2007, %v2103
      %v2105 = vpop.f32.mrf.mxu0
      %v2106 = vpop.f32.mrf.mxu0
      %v2107 = vadd.f32 %v2010, %v2106
      %v2108 = vpop.f32.mrf.mxu0
      %2109 = vmatprep.mubr.bf16.mxu0 %v1233
      %2110 = vmatmul.mubr.bf16.gmra.mxu0 %v1201
      %v2111 = vpop.f32.mrf.mxu0
      %v2112 = vadd.f32 %v2015, %v2111
      %v2113 = vpop.f32.mrf.mxu0
      %v2114 = vpop.f32.mrf.mxu0
      %v2115 = vadd.f32 %v2018, %v2114
      %v2116 = vpop.f32.mrf.mxu0
      %2117 = vmatprep.mubr.bf16.mxu0 %v1234
      %2118 = vmatmul.mubr.bf16.gmra.mxu0 %v1202
      %v2119 = vpop.f32.mrf.mxu0
      %v2120 = vadd.f32 %v2023, %v2119
      %v2121 = vpop.f32.mrf.mxu0
      %v2122 = vpop.f32.mrf.mxu0
      %v2123 = vadd.f32 %v2026, %v2122
      %v2124 = vpop.f32.mrf.mxu0
      %2125 = vmatprep.mubr.bf16.mxu0 %v1253
      %2126 = vmatmul.mubr.bf16.gmra.mxu0 %v1249
      %v2127 = vpop.f32.mrf.mxu0
      %v2128 = vadd.f32 %v2031, %v2127
      %v2129 = vpop.f32.mrf.mxu0
      %v2130 = vpop.f32.mrf.mxu0
      %v2131 = vadd.f32 %v2034, %v2130
      %v2132 = vpop.f32.mrf.mxu0
      %2133 = vdwg.mxu0
      %2134 = vmatprep.subr.bf16.mxu0 0
      %2135 = vmatpush1.bf16.msra.mxu0 %v1754
      %2136 = vmatprep.subr.bf16.mxu0 0
      %2137 = vmatpush1.bf16.msra.mxu0 %v1753
      %2138 = vmatprep.subr.bf16.mxu0 0
      %2139 = vmatpush1.bf16.msra.mxu0 %v1752
      %2140 = vmatprep.subr.bf16.mxu0 0
      %2141 = vmatpush1.bf16.msra.mxu0 %v1751
      %2142 = vmatprep.subr.bf16.mxu0 0
      %2143 = vmatpush1.bf16.msra.mxu0 %v1750
      %2144 = vmatprep.subr.bf16.mxu0 0
      %2145 = vmatpush1.bf16.msra.mxu0 %v1749
      %2146 = vmatprep.subr.bf16.mxu0 0
      %2147 = vmatpush1.bf16.msra.mxu0 %v1748
      %2148 = vmatprep.subr.bf16.mxu0 0
      %2149 = vmatpush1.bf16.msra.mxu0 %v1747
      %2150 = vmatprep.subr.bf16.mxu0 0
      %2151 = vmatpush2.bf16.msra.mxu0 %v1762
      %2152 = vmatprep.subr.bf16.mxu0 0
      %2153 = vmatpush2.bf16.msra.mxu0 %v1761
      %2154 = vmatprep.subr.bf16.mxu0 0
      %2155 = vmatpush2.bf16.msra.mxu0 %v1760
      %2156 = vmatprep.subr.bf16.mxu0 0
      %2157 = vmatpush2.bf16.msra.mxu0 %v1759
      %2158 = vmatprep.subr.bf16.mxu0 0
      %2159 = vmatpush2.bf16.msra.mxu0 %v1758
      %2160 = vmatprep.subr.bf16.mxu0 0
      %2161 = vmatpush2.bf16.msra.mxu0 %v1757
      %2162 = vmatprep.subr.bf16.mxu0 0
      %2163 = vmatpush2.bf16.msra.mxu0 %v1756
      %2164 = vmatprep.subr.bf16.mxu0 0
      %2165 = vmatpush2.bf16.msra.mxu0 %v1755
      %2166 = vmatprep.mubr.bf16.mxu0 %v1197
      %2167 = vmatmul.mubr.bf16.gmra.mxu0 %v1165
      %v2168 = vpop.f32.mrf.mxu0
      %v2169 = vadd.f32 %v2072, %v2168
      %v2170 = vpop.f32.mrf.mxu0
      %v2171 = vpop.f32.mrf.mxu0
      %v2172 = vadd.f32 %v2075, %v2171
      %v2173 = vpop.f32.mrf.mxu0
      %2174 = vmatprep.mubr.bf16.mxu0 %v1198
      %2175 = vmatmul.mubr.bf16.gmra.mxu0 %v1166
      %v2176 = vpop.f32.mrf.mxu0
      %v2177 = vadd.f32 %v2080, %v2176
      %v2178 = vpop.f32.mrf.mxu0
      %v2179 = vpop.f32.mrf.mxu0
      %v2180 = vadd.f32 %v2083, %v2179
      %v2181 = vpop.f32.mrf.mxu0
      %2182 = vmatprep.mubr.bf16.mxu0 %v1199
      %2183 = vmatmul.mubr.bf16.gmra.mxu0 %v1167
      %v2184 = vpop.f32.mrf.mxu0
      %v2185 = vadd.f32 %v2088, %v2184
      %v2186 = vpop.f32.mrf.mxu0
      %v2187 = vpop.f32.mrf.mxu0
      %v2188 = vadd.f32 %v2091, %v2187
      %v2189 = vpop.f32.mrf.mxu0
      %2190 = vmatprep.mubr.bf16.mxu0 %v1200
      %2191 = vmatmul.mubr.bf16.gmra.mxu0 %v1168
      %v2192 = vpop.f32.mrf.mxu0
      %v2193 = vadd.f32 %v2096, %v2192
      %v2194 = vpop.f32.mrf.mxu0
      %v2195 = vpop.f32.mrf.mxu0
      %v2196 = vadd.f32 %v2099, %v2195
      %v2197 = vpop.f32.mrf.mxu0
      %2198 = vmatprep.mubr.bf16.mxu0 %v1201
      %2199 = vmatmul.mubr.bf16.gmra.mxu0 %v1169
      %v2200 = vpop.f32.mrf.mxu0
      %v2201 = vadd.f32 %v2104, %v2200
      %v2202 = vpop.f32.mrf.mxu0
      %v2203 = vpop.f32.mrf.mxu0
      %v2204 = vadd.f32 %v2107, %v2203
      %v2205 = vpop.f32.mrf.mxu0
      %2206 = vmatprep.mubr.bf16.mxu0 %v1202
      %2207 = vmatmul.mubr.bf16.gmra.mxu0 %v1170
      %v2208 = vpop.f32.mrf.mxu0
      %v2209 = vadd.f32 %v2112, %v2208
      %v2210 = vpop.f32.mrf.mxu0
      %v2211 = vpop.f32.mrf.mxu0
      %v2212 = vadd.f32 %v2115, %v2211
      %v2213 = vpop.f32.mrf.mxu0
      %2214 = vmatprep.mubr.bf16.mxu0 %v1249
      %2215 = vmatmul.mubr.bf16.gmra.mxu0 %v1245
      %v2216 = vpop.f32.mrf.mxu0
      %v2217 = vadd.f32 %v2120, %v2216
      %v2218 = vpop.f32.mrf.mxu0
      %v2219 = vpop.f32.mrf.mxu0
      %v2220 = vadd.f32 %v2123, %v2219
      %v2221 = vpop.f32.mrf.mxu0
      %2222 = vmatprep.mubr.bf16.mxu0 %v1261
      %2223 = vmatmul.mubr.bf16.gmra.mxu0 %v1257
      %v2224 = vpop.f32.mrf.mxu0
      %v2225 = vadd.f32 %v2128, %v2224
      %v2226 = vpop.f32.mrf.mxu0
      %v2227 = vpop.f32.mrf.mxu0
      %v2228 = vadd.f32 %v2131, %v2227
      %v2229 = vpop.f32.mrf.mxu0
      %2230 = vdwg.mxu0
      %2231 = vmatprep.subr.bf16.mxu0 0
      %2232 = vmatpush1.bf16.msra.mxu0 %v1770
      %2233 = vmatprep.subr.bf16.mxu0 0
      %2234 = vmatpush1.bf16.msra.mxu0 %v1769
      %2235 = vmatprep.subr.bf16.mxu0 0
      %2236 = vmatpush1.bf16.msra.mxu0 %v1768
      %2237 = vmatprep.subr.bf16.mxu0 0
      %2238 = vmatpush1.bf16.msra.mxu0 %v1767
      %2239 = vmatprep.subr.bf16.mxu0 0
      %2240 = vmatpush1.bf16.msra.mxu0 %v1766
      %2241 = vmatprep.subr.bf16.mxu0 0
      %2242 = vmatpush1.bf16.msra.mxu0 %v1765
      %2243 = vmatprep.subr.bf16.mxu0 0
      %2244 = vmatpush1.bf16.msra.mxu0 %v1764
      %2245 = vmatprep.subr.bf16.mxu0 0
      %2246 = vmatpush1.bf16.msra.mxu0 %v1763
      %2247 = vmatprep.subr.bf16.mxu0 0
      %2248 = vmatpush2.bf16.msra.mxu0 0
      %2249 = vmatprep.subr.bf16.mxu0 0
      %2250 = vmatpush2.bf16.msra.mxu0 0
      %2251 = vmatprep.subr.bf16.mxu0 0
      %2252 = vmatpush2.bf16.msra.mxu0 0
      %2253 = vmatprep.subr.bf16.mxu0 0
      %2254 = vmatpush2.bf16.msra.mxu0 0
      %2255 = vmatprep.subr.bf16.mxu0 0
      %2256 = vmatpush2.bf16.msra.mxu0 0
      %2257 = vmatprep.subr.bf16.mxu0 0
      %2258 = vmatpush2.bf16.msra.mxu0 0
      %2259 = vmatprep.subr.bf16.mxu0 0
      %2260 = vmatpush2.bf16.msra.mxu0 0
      %2261 = vmatprep.subr.bf16.mxu0 0
      %2262 = vmatpush2.bf16.msra.mxu0 0
      %2263 = vmatprep.mubr.bf16.mxu0 0
      %2264 = vmatmul.mubr.bf16.gmra.mxu0 %v1229
      %v2265 = vpop.f32.mrf.mxu0
      %v2266 = vadd.f32 %v2169, %v2265
      %v2267 = vpop.f32.mrf.mxu0
      %v2268 = vpop.f32.mrf.mxu0
      %v2269 = vadd.f32 %v2172, %v2268
      %v2270 = vpop.f32.mrf.mxu0
      %2271 = vmatprep.mubr.bf16.mxu0 0
      %2272 = vmatmul.mubr.bf16.gmra.mxu0 %v1230
      %v2273 = vpop.f32.mrf.mxu0
      %v2274 = vadd.f32 %v2177, %v2273
      %v2275 = vpop.f32.mrf.mxu0
      %v2276 = vpop.f32.mrf.mxu0
      %v2277 = vadd.f32 %v2180, %v2276
      %v2278 = vpop.f32.mrf.mxu0
      %2279 = vmatprep.mubr.bf16.mxu0 0
      %2280 = vmatmul.mubr.bf16.gmra.mxu0 %v1231
      %v2281 = vpop.f32.mrf.mxu0
      %v2282 = vadd.f32 %v2185, %v2281
      %v2283 = vpop.f32.mrf.mxu0
      %v2284 = vpop.f32.mrf.mxu0
      %v2285 = vadd.f32 %v2188, %v2284
      %v2286 = vpop.f32.mrf.mxu0
      %2287 = vmatprep.mubr.bf16.mxu0 0
      %2288 = vmatmul.mubr.bf16.gmra.mxu0 %v1232
      %v2289 = vpop.f32.mrf.mxu0
      %v2290 = vadd.f32 %v2193, %v2289
      %v2291 = vpop.f32.mrf.mxu0
      %v2292 = vpop.f32.mrf.mxu0
      %v2293 = vadd.f32 %v2196, %v2292
      %v2294 = vpop.f32.mrf.mxu0
      %2295 = vmatprep.mubr.bf16.mxu0 0
      %2296 = vmatmul.mubr.bf16.gmra.mxu0 %v1233
      %v2297 = vpop.f32.mrf.mxu0
      %v2298 = vadd.f32 %v2201, %v2297
      %v2299 = vpop.f32.mrf.mxu0
      %v2300 = vpop.f32.mrf.mxu0
      %v2301 = vadd.f32 %v2204, %v2300
      %v2302 = vpop.f32.mrf.mxu0
      %2303 = vmatprep.mubr.bf16.mxu0 0
      %2304 = vmatmul.mubr.bf16.gmra.mxu0 %v1234
      %v2305 = vpop.f32.mrf.mxu0
      %v2306 = vadd.f32 %v2209, %v2305
      %v2307 = vpop.f32.mrf.mxu0
      %v2308 = vpop.f32.mrf.mxu0
      %v2309 = vadd.f32 %v2212, %v2308
      %v2310 = vpop.f32.mrf.mxu0
      %2311 = vmatprep.mubr.bf16.mxu0 0
      %2312 = vmatmul.mubr.bf16.gmra.mxu0 %v1253
      %v2313 = vpop.f32.mrf.mxu0
      %v2314 = vadd.f32 %v2217, %v2313
      %v2315 = vpop.f32.mrf.mxu0
      %v2316 = vpop.f32.mrf.mxu0
      %v2317 = vadd.f32 %v2220, %v2316
      %v2318 = vpop.f32.mrf.mxu0
      %2319 = vmatprep.mubr.bf16.mxu0 0
      %2320 = vmatmul.mubr.bf16.gmra.mxu0 %v1265
      %v2321 = vpop.f32.mrf.mxu0
      %v2322 = vadd.f32 %v2225, %v2321
      %v2323 = vpop.f32.mrf.mxu0
      %v2324 = vpop.f32.mrf.mxu0
      %v2325 = vadd.f32 %v2228, %v2324
      %v2326 = vpop.f32.mrf.mxu0
      %2327 = vdwg.mxu0
      %v2328 = vld [vmem:[%s222] sm:$0xff]
      %v2329 = vld [vmem:[%s222 + $0x8] sm:$0xff]
      %v2330 = vld [vmem:[%s222 + $0x10] sm:$0xff]
      %v2331 = vld [vmem:[%s222 + $0x18] sm:$0xff]
      %v2332 = vld [vmem:[%s222 + $0x20] sm:$0xff]
      %v2333 = vld [vmem:[%s222 + $0x28] sm:$0xff]
      %v2334 = vld [vmem:[%s222 + $0x30] sm:$0xff]
      %v2335 = vld [vmem:[%s222 + $0x38] sm:$0xff]
      %v2336 = vld [vmem:[%s222 + $0x40] sm:$0xff]
      %v2337 = vld [vmem:[%s222 + $0x48] sm:$0xff]
      %v2338 = vld [vmem:[%s222 + $0x50] sm:$0xff]
      %v2339 = vld [vmem:[%s222 + $0x58] sm:$0xff]
      %v2340 = vld [vmem:[%s222 + $0x60] sm:$0xff]
      %v2341 = vld [vmem:[%s222 + $0x68] sm:$0xff]
      %v2342 = vld [vmem:[%s222 + $0x70] sm:$0xff]
      %v2343 = vld [vmem:[%s222 + $0x78] sm:$0xff]
      %v2344 = vadd.f32 %v2266, %v2328
      %v2345 = vadd.f32 %v2269, %v2329
      %v2346 = vadd.f32 %v2274, %v2330
      %v2347 = vadd.f32 %v2277, %v2331
      %v2348 = vadd.f32 %v2282, %v2332
      %v2349 = vadd.f32 %v2285, %v2333
      %v2350 = vadd.f32 %v2290, %v2334
      %v2351 = vadd.f32 %v2293, %v2335
      %v2352 = vadd.f32 %v2298, %v2336
      %v2353 = vadd.f32 %v2301, %v2337
      %v2354 = vadd.f32 %v2306, %v2338
      %v2355 = vadd.f32 %v2309, %v2339
      %v2356 = vadd.f32 %v2314, %v2340
      %v2357 = vadd.f32 %v2317, %v2341
      %v2358 = vadd.f32 %v2322, %v2342
      %v2359 = vadd.f32 %v2325, %v2343
      %2360 = vst [vmem:[%s233] sm:$0xff] %v2344
      %2361 = vst [vmem:[%s233 + $0x8] sm:$0xff] %v2345
      %2362 = vst [vmem:[%s233 + $0x10] sm:$0xff] %v2346
      %2363 = vst [vmem:[%s233 + $0x18] sm:$0xff] %v2347
      %2364 = vst [vmem:[%s233 + $0x20] sm:$0xff] %v2348
      %2365 = vst [vmem:[%s233 + $0x28] sm:$0xff] %v2349
      %2366 = vst [vmem:[%s233 + $0x30] sm:$0xff] %v2350
      %2367 = vst [vmem:[%s233 + $0x38] sm:$0xff] %v2351
      %2368 = vst [vmem:[%s233 + $0x40] sm:$0xff] %v2352
      %2369 = vst [vmem:[%s233 + $0x48] sm:$0xff] %v2353
      %2370 = vst [vmem:[%s233 + $0x50] sm:$0xff] %v2354
      %2371 = vst [vmem:[%s233 + $0x58] sm:$0xff] %v2355
      %2372 = vst [vmem:[%s233 + $0x60] sm:$0xff] %v2356
      %2373 = vst [vmem:[%s233 + $0x68] sm:$0xff] %v2357
      %2374 = vst [vmem:[%s233 + $0x70] sm:$0xff] %v2358
      %2375 = vst [vmem:[%s233 + $0x78] sm:$0xff] %v2359
      %s2376 = smul.u32 8, %s19
      %p2377 = scmp.lt.s32.totalorder %s18, 1
      %s2378 = scalar_select %p2377, %s18, 1
      %p2379 = scmp.lt.s32.totalorder %s2376, 15
      %s2380 = scalar_select %p2379, %s2376, 15
      %s2381 = smul.addr %s2380, 2
      %s2382 = smul.addr %s2378, 32
      %s2383 = sadd.s32 %s2381, %s2382
      %s2384 = smul.addr %s2383, 8
      %s2385 = scalar_lea.vmem %s3, %s2384
      // Predicated region
      $region37: #{basic_block_forward.3} parent=31 // pred_check
        %p2386 = pneg %p121
      $region38: #{basic_block_forward.3} parent=31 // pred_check_branch
        %2388 = sbr.rel (%p2386) target = $region40
      $region39: #{basic_block_forward.3} parent=31 // pred_region
        %s2389 = smul.u32 8, %s19
      $region40: #{basic_block_forward.3} parent=31 // pred_fallthru
        _
    $region32: #{basic_block_forward.3} parent=5 // pred_fallthru
      _
    %p2390 = scmp.le.s32.totalorder 2, %s9
    // Predicated region
    $region41: #{basic_block_forward.3} parent=5 // pred_check
      %p2391 = pneg %p2390
    $region42: #{basic_block_forward.3} parent=5 // pred_check_branch
      %2393 = sbr.rel (%p2391) target = $region44
    $region43: #{basic_block_forward.3} parent=5 // pred_region
      %s2394 = ssub.s32 %s9, 2
      // Predicated region
      $region45: #{basic_block_forward.3} parent=43 // pred_check
        %p2395 = pneg %p127
      $region46: #{basic_block_forward.3} parent=43 // pred_check_branch
        %2397 = sbr.rel (%p2395) target = $region48
      $region47: #{basic_block_forward.3} parent=43 // pred_region
        %s2398 = smul.u32 8, %s21
        %p2399 = scmp.lt.s32.totalorder %s20, 1
        %s2400 = scalar_select %p2399, %s20, 1
        %p2401 = scmp.lt.s32.totalorder %s2398, 15
        %s2402 = scalar_select %p2401, %s2398, 15
        %s2403 = smul.addr %s2402, 2
        %s2404 = smul.addr %s2400, 32
        %s2405 = sadd.s32 %s2403, %s2404
        %s2406 = smul.addr %s2405, 8
        %s2407 = scalar_lea.vmem %s3, %s2406
      $region48: #{basic_block_forward.3} parent=43 // pred_fallthru
        _
    $region44: #{basic_block_forward.3} parent=5 // pred_fallthru
      _
  $region6: #{basic_block_forward.3} parent=0 // loop_footer
    %s13 = sadd.s32 1, %s9
  $region7: #{basic_block_forward.3} parent=0 // loop_footer_branch
    %8 = sbr.rel target = $region3
  $region8: #{basic_block_forward.3} parent=0 // loop_exit
    _

// kernel: basic_block_forward.2
$region0: #{basic_block_forward.2}
  #allocation0 [shape = 'u32[]', space=smem, size = 0x4, offset = 0x4, fixed_abs, tag = 'smem constant byte address 0x4 - core index']
  #allocation1 [shape = 'u32[144,128]{1,0:T(1,128)}', space=vmem, size = 0x12000, scoped, tag = 'internal scratch']
  #allocation2 [shape = 'bf16[18,18,128]{2,1,0:T(8,128)(2,1)}', space=vmem, size = 0x1b000, scoped, tag = 'scratch operand']
  %s0 = inlined_call_operand.vmem [shape: bf16[2,16,16,128], index: 0, kind: input, shape index: {}]
  %s1 = inlined_call_operand.vmem [shape: f32[1,128], index: 1, kind: input, shape index: {}]
  %s2 = inlined_call_operand.vmem [shape: f32[1,128], index: 2, kind: input, shape index: {}]
  %s3 = inlined_call_operand.vmem [shape: bf16[1152,128], index: 3, kind: input, shape index: {}]
  %s4 = inlined_call_operand.vmem [shape: f32[1,128], index: 4, kind: input, shape index: {}]
  %s5 = inlined_call_operand.vmem [shape: f32[1,128], index: 5, kind: input, shape index: {}]
  %s6 = inlined_call_operand.vmem [shape: bf16[128,128], index: 6, kind: input, shape index: {}]
  %s7 = inlined_call_operand.vmem [shape: bf16[2,16,16,128], index: 7, kind: output, shape index: {0}]
  %s8 = inlined_call_operand.vmem [shape: f32[2,16,16,128], index: 8, kind: output, shape index: {1}]
  %9 = xla_tuple %s7, %s8
  %s10 = sld [smem:[#allocation0]]
  $region73: #{basic_block_forward.2} parent=0
    _
  %s12 = ssub.s32 1, %s10
  %s13 = scalar_select 0, %s12, %s10
  loop: start=0, step=1, limit=6
  $region2: #{basic_block_forward.2} parent=0 // loop_pre_header
    _
  $region3: #{basic_block_forward.2} parent=0 // loop_header
    %s15 = sphi 0, %s19
    %p16 = scmp.ge.s32.totalorder %s15, 6
    %s22 = sphi 0, %s34
    %s23 = sphi 0, %s30
    %s24 = sphi 0, %s22
    %s25 = sphi 0, %s23
    %s26 = sphi 0, %s24
    %s27 = sphi 0, %s25
    %s37 = sphi 0, %s39
    %s40 = sphi 0, %s37
    %s41 = sphi 0, %s40
    %s57 = sphi 0, %s41
    %s61 = sphi 0, %s61
    %s63 = sphi 0, %s61
    %s64 = sphi 0, %s63
    %s78 = sphi 0, %s64
    %s82 = sphi 0, %s82
    %s84 = sphi 0, %s82
    %s85 = sphi 0, %s84
    %s99 = sphi 0, %s85
    %s103 = sphi 0, %s103
    %s105 = sphi 0, %s103
    %s106 = sphi 0, %s105
    %s120 = sphi 0, %s106
    %s124 = sphi 0, %s124
    %s126 = sphi 0, %s124
    %s127 = sphi 0, %s126
    %s141 = sphi 0, %s127
    %s145 = sphi 0, %s145
    %s147 = sphi 0, %s145
    %s148 = sphi 0, %s147
    %s162 = sphi 0, %s148
    %s166 = sphi 0, %s166
    %s168 = sphi 0, %s166
    %s169 = sphi 0, %s168
    %s183 = sphi 0, %s169
    %s191 = sphi 0, %s193
    %s194 = sphi 0, %s191
    %s195 = sphi 0, %s194
    %s211 = sphi 0, %s195
    %s219 = sphi 0, %s221
    %s222 = sphi 0, %s219
    %s223 = sphi 0, %s222
    %s239 = sphi 0, %s223
  $region4: #{basic_block_forward.2} parent=0 // loop_header_branch
    %18 = sbr.rel (%p16) target = $region8
  $region5: #{basic_block_forward.2} parent=0 // loop_body
    %s20 = ssub.s32 %s15, 1
    %s21 = ssub.s32 %s15, 2
    %s28 = sadd.s32 1, %s23
    %p29 = scmp.ge.s32.totalorder %s28, 2
    %s30 = scalar_select %p29, 0, %s28
    %s31 = sadd.s32 1, %s22
    %s32 = scalar_select %p29, %s31, %s22
    %p33 = scmp.ge.s32.totalorder %s32, 2
    %s34 = scalar_select %p33, 0, %s32
    %s35 = ssub.s32 %s22, %s34
    %p36 = scmp.eq.s32.totalorder %s35, 0
    %s38 = sadd.s32 %s37, 1
    %s39 = scalar_select %p36, %s37, %s38
    %p42 = pneg %p36
    %p43 = scmp.eq.s32.totalorder %s15, 3
    %p44 = por %p42, %p43
    %p45 = scmp.ne.s32.totalorder %s37, %s40
    %p46 = scmp.eq.s32.totalorder %s15, 0
    %p47 = por %p45, %p46
    %p48 = scmp.ne.s32.totalorder %s37, %s40
    %p49 = scmp.eq.s32.totalorder %s20, 3
    %p50 = por %p48, %p49
    %p51 = scmp.ne.s32.totalorder %s40, %s41
    %p52 = scmp.eq.s32.totalorder %s20, 0
    %p53 = por %p51, %p52
    %p54 = scmp.ne.s32.totalorder %s40, %s41
    %p55 = scmp.eq.s32.totalorder %s21, 3
    %p56 = por %p54, %p55
    %p58 = scmp.ne.s32.totalorder %s41, %s57
    %p59 = scmp.eq.s32.totalorder %s21, 0
    %p60 = por %p58, %p59
    %s62 = sadd.s32 %s61, 1
    %p65 = scmp.eq.s32.totalorder %s15, 3
    %p66 = scmp.ne.s32.totalorder %s61, %s63
    %p67 = scmp.eq.s32.totalorder %s15, 0
    %p68 = por %p66, %p67
    %p69 = scmp.ne.s32.totalorder %s61, %s63
    %p70 = scmp.eq.s32.totalorder %s20, 3
    %p71 = por %p69, %p70
    %p72 = scmp.ne.s32.totalorder %s63, %s64
    %p73 = scmp.eq.s32.totalorder %s20, 0
    %p74 = por %p72, %p73
    %p75 = scmp.ne.s32.totalorder %s63, %s64
    %p76 = scmp.eq.s32.totalorder %s21, 3
    %p77 = por %p75, %p76
    %p79 = scmp.ne.s32.totalorder %s64, %s78
    %p80 = scmp.eq.s32.totalorder %s21, 0
    %p81 = por %p79, %p80
    %s83 = sadd.s32 %s82, 1
    %p86 = scmp.eq.s32.totalorder %s15, 3
    %p87 = scmp.ne.s32.totalorder %s82, %s84
    %p88 = scmp.eq.s32.totalorder %s15, 0
    %p89 = por %p87, %p88
    %p90 = scmp.ne.s32.totalorder %s82, %s84
    %p91 = scmp.eq.s32.totalorder %s20, 3
    %p92 = por %p90, %p91
    %p93 = scmp.ne.s32.totalorder %s84, %s85
    %p94 = scmp.eq.s32.totalorder %s20, 0
    %p95 = por %p93, %p94
    %p96 = scmp.ne.s32.totalorder %s84, %s85
    %p97 = scmp.eq.s32.totalorder %s21, 3
    %p98 = por %p96, %p97
    %p100 = scmp.ne.s32.totalorder %s85, %s99
    %p101 = scmp.eq.s32.totalorder %s21, 0
    %p102 = por %p100, %p101
    %s104 = sadd.s32 %s103, 1
    %p107 = scmp.eq.s32.totalorder %s15, 3
    %p108 = scmp.ne.s32.totalorder %s103, %s105
    %p109 = scmp.eq.s32.totalorder %s15, 0
    %p110 = por %p108, %p109
    %p111 = scmp.ne.s32.totalorder %s103, %s105
    %p112 = scmp.eq.s32.totalorder %s20, 3
    %p113 = por %p111, %p112
    %p114 = scmp.ne.s32.totalorder %s105, %s106
    %p115 = scmp.eq.s32.totalorder %s20, 0
    %p116 = por %p114, %p115
    %p117 = scmp.ne.s32.totalorder %s105, %s106
    %p118 = scmp.eq.s32.totalorder %s21, 3
    %p119 = por %p117, %p118
    %p121 = scmp.ne.s32.totalorder %s106, %s120
    %p122 = scmp.eq.s32.totalorder %s21, 0
    %p123 = por %p121, %p122
    %s125 = sadd.s32 %s124, 1
    %p128 = scmp.eq.s32.totalorder %s15, 3
    %p129 = scmp.ne.s32.totalorder %s124, %s126
    %p130 = scmp.eq.s32.totalorder %s15, 0
    %p131 = por %p129, %p130
    %p132 = scmp.ne.s32.totalorder %s124, %s126
    %p133 = scmp.eq.s32.totalorder %s20, 3
    %p134 = por %p132, %p133
    %p135 = scmp.ne.s32.totalorder %s126, %s127
    %p136 = scmp.eq.s32.totalorder %s20, 0
    %p137 = por %p135, %p136
    %p138 = scmp.ne.s32.totalorder %s126, %s127
    %p139 = scmp.eq.s32.totalorder %s21, 3
    %p140 = por %p138, %p139
    %p142 = scmp.ne.s32.totalorder %s127, %s141
    %p143 = scmp.eq.s32.totalorder %s21, 0
    %p144 = por %p142, %p143
    %s146 = sadd.s32 %s145, 1
    %p149 = scmp.eq.s32.totalorder %s15, 3
    %p150 = scmp.ne.s32.totalorder %s145, %s147
    %p151 = scmp.eq.s32.totalorder %s15, 0
    %p152 = por %p150, %p151
    %p153 = scmp.ne.s32.totalorder %s145, %s147
    %p154 = scmp.eq.s32.totalorder %s20, 3
    %p155 = por %p153, %p154
    %p156 = scmp.ne.s32.totalorder %s147, %s148
    %p157 = scmp.eq.s32.totalorder %s20, 0
    %p158 = por %p156, %p157
    %p159 = scmp.ne.s32.totalorder %s147, %s148
    %p160 = scmp.eq.s32.totalorder %s21, 3
    %p161 = por %p159, %p160
    %p163 = scmp.ne.s32.totalorder %s148, %s162
    %p164 = scmp.eq.s32.totalorder %s21, 0
    %p165 = por %p163, %p164
    %s167 = sadd.s32 %s166, 1
    %p170 = scmp.eq.s32.totalorder %s15, 3
    %p171 = scmp.ne.s32.totalorder %s166, %s168
    %p172 = scmp.eq.s32.totalorder %s15, 0
    %p173 = por %p171, %p172
    %p174 = scmp.ne.s32.totalorder %s166, %s168
    %p175 = scmp.eq.s32.totalorder %s20, 3
    %p176 = por %p174, %p175
    %p177 = scmp.ne.s32.totalorder %s168, %s169
    %p178 = scmp.eq.s32.totalorder %s20, 0
    %p179 = por %p177, %p178
    %p180 = scmp.ne.s32.totalorder %s168, %s169
    %p181 = scmp.eq.s32.totalorder %s21, 3
    %p182 = por %p180, %p181
    %p184 = scmp.ne.s32.totalorder %s169, %s183
    %p185 = scmp.eq.s32.totalorder %s21, 0
    %p186 = por %p184, %p185
    %s187 = ssub.s32 %s22, %s34
    %s188 = ssub.s32 %s23, %s30
    %s189 = sor.u32 %s187, %s188
    %p190 = scmp.eq.s32.totalorder %s189, 0
    %s192 = sadd.s32 %s191, 1
    %s193 = scalar_select %p190, %s191, %s192
    %p196 = pneg %p190
    %p197 = scmp.eq.s32.totalorder %s15, 3
    %p198 = por %p196, %p197
    %p199 = scmp.ne.s32.totalorder %s191, %s194
    %p200 = scmp.eq.s32.totalorder %s15, 0
    %p201 = por %p199, %p200
    %p202 = scmp.ne.s32.totalorder %s191, %s194
    %p203 = scmp.eq.s32.totalorder %s20, 3
    %p204 = por %p202, %p203
    %p205 = scmp.ne.s32.totalorder %s194, %s195
    %p206 = scmp.eq.s32.totalorder %s20, 0
    %p207 = por %p205, %p206
    %p208 = scmp.ne.s32.totalorder %s194, %s195
    %p209 = scmp.eq.s32.totalorder %s21, 3
    %p210 = por %p208, %p209
    %p212 = scmp.ne.s32.totalorder %s195, %s211
    %p213 = scmp.eq.s32.totalorder %s21, 0
    %p214 = por %p212, %p213
    %s215 = ssub.s32 %s22, %s34
    %s216 = ssub.s32 %s23, %s30
    %s217 = sor.u32 %s215, %s216
    %p218 = scmp.eq.s32.totalorder %s217, 0
    %s220 = sadd.s32 %s219, 1
    %s221 = scalar_select %p218, %s219, %s220
    %p224 = pneg %p218
    %p225 = scmp.eq.s32.totalorder %s15, 3
    %p226 = por %p224, %p225
    %p227 = scmp.ne.s32.totalorder %s219, %s222
    %p228 = scmp.eq.s32.totalorder %s15, 0
    %p229 = por %p227, %p228
    %p230 = scmp.ne.s32.totalorder %s219, %s222
    %p231 = scmp.eq.s32.totalorder %s20, 3
    %p232 = por %p230, %p231
    %p233 = scmp.ne.s32.totalorder %s222, %s223
    %p234 = scmp.eq.s32.totalorder %s20, 0
    %p235 = por %p233, %p234
    %p236 = scmp.ne.s32.totalorder %s222, %s223
    %p237 = scmp.eq.s32.totalorder %s21, 3
    %p238 = por %p236, %p237
    %p240 = scmp.ne.s32.totalorder %s223, %s239
    %p241 = scmp.eq.s32.totalorder %s21, 0
    %p242 = por %p240, %p241
    %p243 = scmp.le.s32.totalorder 1, %s15
    %p244 = scmp.lt.s32.totalorder %s15, 5
    %p245 = pnand %p243, %p244
    %p246 = pneg %p245
    // Predicated region
    $region9: #{basic_block_forward.2} parent=5 // pred_check
      _
    $region10: #{basic_block_forward.2} parent=5 // pred_check_branch
      %248 = sbr.rel (%p245) target = $region12
    $region11: #{basic_block_forward.2} parent=5 // pred_region
      %s249 = ssub.s32 %s15, 1
      // Predicated region
      $region13: #{basic_block_forward.2} parent=11 // pred_check
        %p250 = pneg %p74
      $region14: #{basic_block_forward.2} parent=11 // pred_check_branch
        %252 = sbr.rel (%p250) target = $region16
      $region15: #{basic_block_forward.2} parent=11 // pred_region
        _
      $region16: #{basic_block_forward.2} parent=11 // pred_fallthru
        _
      // Predicated region
      $region17: #{basic_block_forward.2} parent=11 // pred_check
        %p253 = pneg %p95
      $region18: #{basic_block_forward.2} parent=11 // pred_check_branch
        %255 = sbr.rel (%p253) target = $region20
      $region19: #{basic_block_forward.2} parent=11 // pred_region
        _
      $region20: #{basic_block_forward.2} parent=11 // pred_fallthru
        _
      // Predicated region
      $region21: #{basic_block_forward.2} parent=11 // pred_check
        %p256 = pneg %p116
      $region22: #{basic_block_forward.2} parent=11 // pred_check_branch
        %258 = sbr.rel (%p256) target = $region24
      $region23: #{basic_block_forward.2} parent=11 // pred_region
        _
      $region24: #{basic_block_forward.2} parent=11 // pred_fallthru
        _
      // Predicated region
      $region25: #{basic_block_forward.2} parent=11 // pred_check
        %p259 = pneg %p137
      $region26: #{basic_block_forward.2} parent=11 // pred_check_branch
        %261 = sbr.rel (%p259) target = $region28
      $region27: #{basic_block_forward.2} parent=11 // pred_region
        _
      $region28: #{basic_block_forward.2} parent=11 // pred_fallthru
        _
      // Predicated region
      $region29: #{basic_block_forward.2} parent=11 // pred_check
        %p262 = pneg %p158
      $region30: #{basic_block_forward.2} parent=11 // pred_check_branch
        %264 = sbr.rel (%p262) target = $region32
      $region31: #{basic_block_forward.2} parent=11 // pred_region
        _
      $region32: #{basic_block_forward.2} parent=11 // pred_fallthru
        _
      // Predicated region
      $region33: #{basic_block_forward.2} parent=11 // pred_check
        %p265 = pneg %p179
      $region34: #{basic_block_forward.2} parent=11 // pred_check_branch
        %267 = sbr.rel (%p265) target = $region36
      $region35: #{basic_block_forward.2} parent=11 // pred_region
        _
      $region36: #{basic_block_forward.2} parent=11 // pred_fallthru
        _
    $region12: #{basic_block_forward.2} parent=5 // pred_fallthru
      _
    %p268 = scmp.lt.s32.totalorder %s15, 4
    // Predicated region
    $region37: #{basic_block_forward.2} parent=5 // pred_check
      %p269 = pneg %p268
    $region38: #{basic_block_forward.2} parent=5 // pred_check_branch
      %271 = sbr.rel (%p269) target = $region40
    $region39: #{basic_block_forward.2} parent=5 // pred_region
      // Predicated region
      $region41: #{basic_block_forward.2} parent=39 // pred_check
        %p272 = pneg %p47
      $region42: #{basic_block_forward.2} parent=39 // pred_check_branch
        %274 = sbr.rel (%p272) target = $region44
      $region43: #{basic_block_forward.2} parent=39 // pred_region
        %p275 = scmp.lt.s32.totalorder %s22, 1
        %s276 = scalar_select %p275, %s22, 1
        %s277 = smul.addr %s276, 32
        %s278 = smul.addr %s277, 4
        %s279 = scalar_lea.vmem %s0, %s278
      $region44: #{basic_block_forward.2} parent=39 // pred_fallthru
        _
    $region40: #{basic_block_forward.2} parent=5 // pred_fallthru
      _
    %p280 = scmp.le.s32.totalorder 1, %s15
    %p281 = scmp.lt.s32.totalorder %s15, 5
    %p282 = pnand %p280, %p281
    %p283 = pneg %p282
    // Predicated region
    $region45: #{basic_block_forward.2} parent=5 // pred_check
      _
    $region46: #{basic_block_forward.2} parent=5 // pred_check_branch
      %285 = sbr.rel (%p282) target = $region48
    $region47: #{basic_block_forward.2} parent=5 // pred_region
      %s286 = ssub.s32 %s15, 1
      %p287 = scmp.lt.s32.totalorder %s24, 1
      %s288 = scalar_select %p287, %s24, 1
      %s289 = smul.addr %s288, 32
      %s290 = smul.addr %s289, 4
      %s291 = scalar_lea.vmem %s0, %s290
      %p292 = pneg %p53
      %p293 = pneg %p50
      %p294 = pneg %p74
      %p295 = pneg %p71
      %p296 = pneg %p95
      %p297 = pneg %p92
      %p298 = pneg %p116
      %p299 = pneg %p113
      %p300 = pneg %p137
      %p301 = pneg %p134
      %p302 = pneg %p158
      %p303 = pneg %p155
      %p304 = pneg %p179
      %p305 = pneg %p176
      %p306 = pneg %p207
      %p307 = pneg %p204
      %s308 = smul.u32 8, %s25
      %p309 = scmp.lt.s32.totalorder %s24, 1
      %s310 = scalar_select %p309, %s24, 1
      %p311 = scmp.lt.s32.totalorder %s308, 15
      %s312 = scalar_select %p311, %s308, 15
      %s313 = smul.addr %s312, 2
      %s314 = smul.addr %s310, 32
      %s315 = sadd.s32 %s313, %s314
      %s316 = smul.addr %s315, 4
      %s317 = scalar_lea.vmem %s7, %s316
      %p318 = pneg %p235
      %p319 = pneg %p232
      %s320 = smul.u32 8, %s25
      %p321 = scmp.lt.s32.totalorder %s24, 1
      %s322 = scalar_select %p321, %s24, 1
      %p323 = scmp.lt.s32.totalorder %s320, 15
      %s324 = scalar_select %p323, %s320, 15
      %s325 = smul.addr %s324, 2
      %s326 = smul.addr %s322, 32
      %s327 = sadd.s32 %s325, %s326
      %s328 = smul.addr %s327, 8
      %s329 = scalar_lea.vmem %s8, %s328
      %p330 = scmp.lt.s32.totalorder %s24, 1
      %s331 = scalar_select %p330, %s24, 1
      %s332 = smul.addr %s331, 32
      %s333 = smul.addr %s332, 4
      %s334 = scalar_lea.vmem %s0, %s333
      %s335 = smul.u32 8, %s25
      %p336 = scmp.lt.s32.totalorder %s24, 1
      %s337 = scalar_select %p336, %s24, 1
      %p338 = scmp.lt.s32.totalorder %s335, 15
      %s339 = scalar_select %p338, %s335, 15
      %s340 = smul.addr %s339, 2
      %s341 = smul.addr %s337, 32
      %s342 = sadd.s32 %s340, %s341
      %s343 = smul.addr %s342, 4
      %s344 = scalar_lea.vmem %s7, %s343
      %s345 = smul.u32 8, %s25
      %s346 = smul.u32 8, %s25
      %p347 = scmp.lt.s32.totalorder %s24, 1
      %s348 = scalar_select %p347, %s24, 1
      %p349 = scmp.lt.s32.totalorder %s346, 15
      %s350 = scalar_select %p349, %s346, 15
      %s351 = smul.addr %s350, 2
      %s352 = smul.addr %s348, 32
      %s353 = sadd.s32 %s351, %s352
      %s354 = smul.addr %s353, 8
      %s355 = scalar_lea.vmem %s8, %s354
      %s356 = smul.u32 8, %s25
      %p358 = scmp.eq.s32.totalorder %s25, 0
      // Predicated region
      $region49: #{basic_block_forward.2} parent=47 // pred_check
        %p359 = pneg %p358
      $region50: #{basic_block_forward.2} parent=47 // pred_check_branch
        %361 = sbr.rel (%p359) target = $region52
      $region51: #{basic_block_forward.2} parent=47 // pred_region
        %362 = vst [vmem:[#allocation2] sm:$0xf] 0
        %363 = vst [vmem:[#allocation2 + $0x4] sm:$0xf] 0
        %364 = vst [vmem:[#allocation2 + $0x8] sm:$0x1] 0
        %365 = vst [vmem:[#allocation2 + $0xc] sm:$0xf] 0
        %366 = vst [vmem:[#allocation2 + $0x10] sm:$0xf] 0
        %367 = vst [vmem:[#allocation2 + $0x14] sm:$0x1] 0
        %368 = vst [vmem:[#allocation2 + $0x18] sm:$0xf] 0
        %369 = vst [vmem:[#allocation2 + $0x1c] sm:$0xf] 0
        %370 = vst [vmem:[#allocation2 + $0x20] sm:$0x1] 0
        %371 = vst [vmem:[#allocation2 + $0x24] sm:$0xf] 0
        %372 = vst [vmem:[#allocation2 + $0x28] sm:$0xf] 0
        %373 = vst [vmem:[#allocation2 + $0x2c] sm:$0x1] 0
        %374 = vst [vmem:[#allocation2 + $0x30] sm:$0xf] 0
        %375 = vst [vmem:[#allocation2 + $0x34] sm:$0xf] 0
        %376 = vst [vmem:[#allocation2 + $0x38] sm:$0x1] 0
        %377 = vst [vmem:[#allocation2 + $0x3c] sm:$0xf] 0
        %378 = vst [vmem:[#allocation2 + $0x40] sm:$0xf] 0
        %379 = vst [vmem:[#allocation2 + $0x44] sm:$0x1] 0
        %380 = vst [vmem:[#allocation2 + $0x48] sm:$0xf] 0
        %381 = vst [vmem:[#allocation2 + $0x4c] sm:$0xf] 0
        %382 = vst [vmem:[#allocation2 + $0x50] sm:$0x1] 0
        %383 = vst [vmem:[#allocation2 + $0x54] sm:$0xf] 0
        %384 = vst [vmem:[#allocation2 + $0x58] sm:$0xf] 0
        %385 = vst [vmem:[#allocation2 + $0x5c] sm:$0x1] 0
        %386 = vst [vmem:[#allocation2 + $0x60] sm:$0xf] 0
        %387 = vst [vmem:[#allocation2 + $0x64] sm:$0xf] 0
        %388 = vst [vmem:[#allocation2 + $0x68] sm:$0x1] 0
        %389 = vst [vmem:[#allocation2 + $0x6c] sm:$0xf] 0
        %390 = vst [vmem:[#allocation2 + $0x70] sm:$0xf] 0
        %391 = vst [vmem:[#allocation2 + $0x74] sm:$0x1] 0
        %392 = vst [vmem:[#allocation2 + $0x78] sm:$0xf] 0
        %393 = vst [vmem:[#allocation2 + $0x7c] sm:$0xf] 0
        %394 = vst [vmem:[#allocation2 + $0x80] sm:$0x1] 0
        %395 = vst [vmem:[#allocation2 + $0x84] sm:$0xf] 0
        %396 = vst [vmem:[#allocation2 + $0x88] sm:$0xf] 0
        %397 = vst [vmem:[#allocation2 + $0x8c] sm:$0x1] 0
        %398 = vst [vmem:[#allocation2 + $0x90] sm:$0xf] 0
        %399 = vst [vmem:[#allocation2 + $0x94] sm:$0xf] 0
        %400 = vst [vmem:[#allocation2 + $0x98] sm:$0x1] 0
        %401 = vst [vmem:[#allocation2 + $0x9c] sm:$0xf] 0
        %402 = vst [vmem:[#allocation2 + $0xa0] sm:$0xf] 0
        %403 = vst [vmem:[#allocation2 + $0xa4] sm:$0x1] 0
        %404 = vst [vmem:[#allocation2 + $0xa8] sm:$0xf] 0
        %405 = vst [vmem:[#allocation2 + $0xac] sm:$0xf] 0
        %406 = vst [vmem:[#allocation2 + $0xb0] sm:$0x1] 0
        %407 = vst [vmem:[#allocation2 + $0xb4] sm:$0xf] 0
        %408 = vst [vmem:[#allocation2 + $0xb8] sm:$0xf] 0
        %409 = vst [vmem:[#allocation2 + $0xbc] sm:$0x1] 0
        %410 = vst [vmem:[#allocation2 + $0xc0] sm:$0xf] 0
        %411 = vst [vmem:[#allocation2 + $0xc4] sm:$0xf] 0
        %412 = vst [vmem:[#allocation2 + $0xc8] sm:$0x1] 0
        %413 = vst [vmem:[#allocation2 + $0xcc] sm:$0xf] 0
        %414 = vst [vmem:[#allocation2 + $0xd0] sm:$0xf] 0
        %415 = vst [vmem:[#allocation2 + $0xd4] sm:$0x1] 0
        %v416 = vld [vmem:[%s334] sm:$0xf]
        %v417 = vld [vmem:[%s334 + $0x4] sm:$0xf]
        %v418 = vld [vmem:[%s334 + $0x8] sm:$0xf]
        %v419 = vld [vmem:[%s334 + $0xc] sm:$0xf]
        %v420 = vld [vmem:[%s334 + $0x10] sm:$0xf]
        %v421 = vld [vmem:[%s334 + $0x14] sm:$0xf]
        %v422 = vld [vmem:[%s334 + $0x18] sm:$0xf]
        %v423 = vld [vmem:[%s334 + $0x1c] sm:$0xf]
        %v424 = vld [vmem:[%s334 + $0x20] sm:$0xf]
        %v425 = vld [vmem:[%s334 + $0x24] sm:$0xf]
        %v426 = vld [vmem:[%s334 + $0x28] sm:$0xf]
        %v427 = vld [vmem:[%s334 + $0x2c] sm:$0xf]
        %v428 = vld [vmem:[%s334 + $0x30] sm:$0xf]
        %v429 = vld [vmem:[%s334 + $0x34] sm:$0xf]
        %v430 = vld [vmem:[%s334 + $0x38] sm:$0xf]
        %v431 = vld [vmem:[%s334 + $0x3c] sm:$0xf]
        %v432 = vld [vmem:[%s334 + $0x40] sm:$0xf]
        %v433 = vld [vmem:[%s334 + $0x44] sm:$0xf]
        %v434 = vld [vmem:[%s334 + $0x48] sm:$0xf]
        %v435 = vld [vmem:[%s334 + $0x4c] sm:$0xf]
        %v436 = vld [vmem:[%s334 + $0x50] sm:$0xf]
        %v437 = vld [vmem:[%s334 + $0x54] sm:$0xf]
        %v438 = vld [vmem:[%s334 + $0x58] sm:$0xf]
        %v439 = vld [vmem:[%s334 + $0x5c] sm:$0xf]
        %v440 = vld [vmem:[%s334 + $0x60] sm:$0xf]
        %v441 = vld [vmem:[%s334 + $0x64] sm:$0xf]
        %v442 = vld [vmem:[%s334 + $0x68] sm:$0xf]
        %v443 = vld [vmem:[%s334 + $0x6c] sm:$0xf]
        %v444 = vld [vmem:[%s334 + $0x70] sm:$0xf]
        %v445 = vld [vmem:[%s334 + $0x74] sm:$0xf]
        %v446 = vld [vmem:[%s334 + $0x78] sm:$0xf]
        %v447 = vld [vmem:[%s334 + $0x7c] sm:$0xf]
        %v448 = vunpack.c.l.bf16 %v416
        %v449 = vunpack.c.l.bf16 %v417
        %v450 = vunpack.c.l.bf16 %v418
        %v451 = vunpack.c.l.bf16 %v419
        %v452 = vunpack.c.l.bf16 %v420
        %v453 = vunpack.c.l.bf16 %v421
        %v454 = vunpack.c.l.bf16 %v422
        %v455 = vunpack.c.l.bf16 %v423
        %v456 = vunpack.c.l.bf16 %v424
        %v457 = vunpack.c.l.bf16 %v425
        %v458 = vunpack.c.l.bf16 %v426
        %v459 = vunpack.c.l.bf16 %v427
        %v460 = vunpack.c.l.bf16 %v428
        %v461 = vunpack.c.l.bf16 %v429
        %v462 = vunpack.c.l.bf16 %v430
        %v463 = vunpack.c.l.bf16 %v431
        %v464 = vunpack.c.l.bf16 %v432
        %v465 = vunpack.c.l.bf16 %v433
        %v466 = vunpack.c.l.bf16 %v434
        %v467 = vunpack.c.l.bf16 %v435
        %v468 = vunpack.c.l.bf16 %v436
        %v469 = vunpack.c.l.bf16 %v437
        %v470 = vunpack.c.l.bf16 %v438
        %v471 = vunpack.c.l.bf16 %v439
        %v472 = vunpack.c.l.bf16 %v440
        %v473 = vunpack.c.l.bf16 %v441
        %v474 = vunpack.c.l.bf16 %v442
        %v475 = vunpack.c.l.bf16 %v443
        %v476 = vunpack.c.l.bf16 %v444
        %v477 = vunpack.c.l.bf16 %v445
        %v478 = vunpack.c.l.bf16 %v446
        %v479 = vunpack.c.l.bf16 %v447
        %v480 = vld [vmem:[%s1] sm:$0x1]
        %v482 = vlaneseq
        %v483 = vshrl.u32 %v482, 7
        %v484 = vsub.s32 0, %v483
        %v485 = vrot.slane %v480, %v484
        %v487 = vmul.f32 %v448, %v485
        %v488 = vmul.f32 %v449, %v485
        %v489 = vmul.f32 %v450, %v485
        %v490 = vmul.f32 %v451, %v485
        %v491 = vmul.f32 %v452, %v485
        %v492 = vmul.f32 %v453, %v485
        %v493 = vmul.f32 %v454, %v485
        %v494 = vmul.f32 %v455, %v485
        %v495 = vmul.f32 %v456, %v485
        %v496 = vmul.f32 %v457, %v485
        %v497 = vmul.f32 %v458, %v485
        %v498 = vmul.f32 %v459, %v485
        %v499 = vmul.f32 %v460, %v485
        %v500 = vmul.f32 %v461, %v485
        %v501 = vmul.f32 %v462, %v485
        %v502 = vmul.f32 %v463, %v485
        %v503 = vmul.f32 %v464, %v485
        %v504 = vmul.f32 %v465, %v485
        %v505 = vmul.f32 %v466, %v485
        %v506 = vmul.f32 %v467, %v485
        %v507 = vmul.f32 %v468, %v485
        %v508 = vmul.f32 %v469, %v485
        %v509 = vmul.f32 %v470, %v485
        %v510 = vmul.f32 %v471, %v485
        %v511 = vmul.f32 %v472, %v485
        %v512 = vmul.f32 %v473, %v485
        %v513 = vmul.f32 %v474, %v485
        %v514 = vmul.f32 %v475, %v485
        %v515 = vmul.f32 %v476, %v485
        %v516 = vmul.f32 %v477, %v485
        %v517 = vmul.f32 %v478, %v485
        %v518 = vmul.f32 %v479, %v485
        %v519 = vld [vmem:[%s2] sm:$0x1]
        %v521 = vlaneseq
        %v522 = vshrl.u32 %v521, 7
        %v523 = vsub.s32 0, %v522
        %v524 = vrot.slane %v519, %v523
        %v526 = vadd.f32 %v487, %v524
        %v527 = vadd.f32 %v488, %v524
        %v528 = vadd.f32 %v489, %v524
        %v529 = vadd.f32 %v490, %v524
        %v530 = vadd.f32 %v491, %v524
        %v531 = vadd.f32 %v492, %v524
        %v532 = vadd.f32 %v493, %v524
        %v533 = vadd.f32 %v494, %v524
        %v534 = vadd.f32 %v495, %v524
        %v535 = vadd.f32 %v496, %v524
        %v536 = vadd.f32 %v497, %v524
        %v537 = vadd.f32 %v498, %v524
        %v538 = vadd.f32 %v499, %v524
        %v539 = vadd.f32 %v500, %v524
        %v540 = vadd.f32 %v501, %v524
        %v541 = vadd.f32 %v502, %v524
        %v542 = vadd.f32 %v503, %v524
        %v543 = vadd.f32 %v504, %v524
        %v544 = vadd.f32 %v505, %v524
        %v545 = vadd.f32 %v506, %v524
        %v546 = vadd.f32 %v507, %v524
        %v547 = vadd.f32 %v508, %v524
        %v548 = vadd.f32 %v509, %v524
        %v549 = vadd.f32 %v510, %v524
        %v550 = vadd.f32 %v511, %v524
        %v551 = vadd.f32 %v512, %v524
        %v552 = vadd.f32 %v513, %v524
        %v553 = vadd.f32 %v514, %v524
        %v554 = vadd.f32 %v515, %v524
        %v555 = vadd.f32 %v516, %v524
        %v556 = vadd.f32 %v517, %v524
        %v557 = vadd.f32 %v518, %v524
        %v558 = vmax.f32 %v526, 0.0
        %v559 = vmax.f32 %v527, 0.0
        %v560 = vmax.f32 %v528, 0.0
        %v561 = vmax.f32 %v529, 0.0
        %v562 = vmax.f32 %v530, 0.0
        %v563 = vmax.f32 %v531, 0.0
        %v564 = vmax.f32 %v532, 0.0
        %v565 = vmax.f32 %v533, 0.0
        %v566 = vmax.f32 %v534, 0.0
        %v567 = vmax.f32 %v535, 0.0
        %v568 = vmax.f32 %v536, 0.0
        %v569 = vmax.f32 %v537, 0.0
        %v570 = vmax.f32 %v538, 0.0
        %v571 = vmax.f32 %v539, 0.0
        %v572 = vmax.f32 %v540, 0.0
        %v573 = vmax.f32 %v541, 0.0
        %v574 = vmax.f32 %v542, 0.0
        %v575 = vmax.f32 %v543, 0.0
        %v576 = vmax.f32 %v544, 0.0
        %v577 = vmax.f32 %v545, 0.0
        %v578 = vmax.f32 %v546, 0.0
        %v579 = vmax.f32 %v547, 0.0
        %v580 = vmax.f32 %v548, 0.0
        %v581 = vmax.f32 %v549, 0.0
        %v582 = vmax.f32 %v550, 0.0
        %v583 = vmax.f32 %v551, 0.0
        %v584 = vmax.f32 %v552, 0.0
        %v585 = vmax.f32 %v553, 0.0
        %v586 = vmax.f32 %v554, 0.0
        %v587 = vmax.f32 %v555, 0.0
        %v588 = vmax.f32 %v556, 0.0
        %v589 = vmax.f32 %v557, 0.0
        %v590 = vpack.c.bf16 %v559, %v558
        %v591 = vpack.c.bf16 %v561, %v560
        %v592 = vpack.c.bf16 %v563, %v562
        %v593 = vpack.c.bf16 %v565, %v564
        %v594 = vpack.c.bf16 %v567, %v566
        %v595 = vpack.c.bf16 %v569, %v568
        %v596 = vpack.c.bf16 %v571, %v570
        %v597 = vpack.c.bf16 %v573, %v572
        %v598 = vpack.c.bf16 %v575, %v574
        %v599 = vpack.c.bf16 %v577, %v576
        %v600 = vpack.c.bf16 %v579, %v578
        %v601 = vpack.c.bf16 %v581, %v580
        %v602 = vpack.c.bf16 %v583, %v582
        %v603 = vpack.c.bf16 %v585, %v584
        %v604 = vpack.c.bf16 %v587, %v586
        %v605 = vpack.c.bf16 %v589, %v588
        %v622 = vunpack.c.l.b16 %v590
        %v623 = vunpack.c.h.b16 %v590
        %v624 = vunpack.c.l.b16 %v591
        %v625 = vunpack.c.h.b16 %v591
        %v626 = vunpack.c.l.b16 %v592
        %v627 = vunpack.c.h.b16 %v592
        %v628 = vunpack.c.l.b16 %v593
        %v629 = vunpack.c.h.b16 %v593
        %v630 = vunpack.c.l.b16 %v594
        %v631 = vunpack.c.h.b16 %v594
        %v632 = vunpack.c.l.b16 %v595
        %v633 = vunpack.c.h.b16 %v595
        %v634 = vunpack.c.l.b16 %v596
        %v635 = vunpack.c.h.b16 %v596
        %v636 = vunpack.c.l.b16 %v597
        %v637 = vunpack.c.h.b16 %v597
        %v638 = vunpack.c.l.b16 %v598
        %v639 = vunpack.c.h.b16 %v598
        %v640 = vunpack.c.l.b16 %v599
        %v641 = vunpack.c.h.b16 %v599
        %v642 = vunpack.c.l.b16 %v600
        %v643 = vunpack.c.h.b16 %v600
        %v644 = vunpack.c.l.b16 %v601
        %v645 = vunpack.c.h.b16 %v601
        %v646 = vunpack.c.l.b16 %v602
        %v647 = vunpack.c.h.b16 %v602
        %v648 = vunpack.c.l.b16 %v603
        %v649 = vunpack.c.h.b16 %v603
        %v650 = vunpack.c.l.b16 %v604
        %v651 = vunpack.c.h.b16 %v604
        %v652 = vunpack.c.l.b16 %v605
        %v653 = vunpack.c.h.b16 %v605
        %v654 = vpack.c.b16 %v622, %v622
        %v655 = vpack.c.b16 %v623, %v623
        %v656 = vpack.c.b16 %v624, %v624
        %v657 = vpack.c.b16 %v625, %v625
        %v658 = vpack.c.b16 %v626, %v626
        %v659 = vpack.c.b16 %v627, %v627
        %v660 = vpack.c.b16 %v628, %v628
        %v661 = vpack.c.b16 %v629, %v629
        %v662 = vpack.c.b16 %v630, %v630
        %v663 = vpack.c.b16 %v631, %v631
        %v664 = vpack.c.b16 %v632, %v632
        %v665 = vpack.c.b16 %v633, %v633
        %v666 = vpack.c.b16 %v634, %v634
        %v667 = vpack.c.b16 %v635, %v635
        %v668 = vpack.c.b16 %v636, %v636
        %v669 = vpack.c.b16 %v637, %v637
        %v670 = vpack.c.b16 %v638, %v638
        %v671 = vpack.c.b16 %v639, %v639
        %v672 = vpack.c.b16 %v640, %v640
        %v673 = vpack.c.b16 %v641, %v641
        %v674 = vpack.c.b16 %v642, %v642
        %v675 = vpack.c.b16 %v643, %v643
        %v676 = vpack.c.b16 %v644, %v644
        %v677 = vpack.c.b16 %v645, %v645
        %v678 = vpack.c.b16 %v646, %v646
        %v679 = vpack.c.b16 %v647, %v647
        %v680 = vpack.c.b16 %v648, %v648
        %v681 = vpack.c.b16 %v649, %v649
        %v682 = vpack.c.b16 %v650, %v650
        %v683 = vpack.c.b16 %v651, %v651
        %v684 = vpack.c.b16 %v652, %v652
        %v685 = vpack.c.b16 %v653, %v653
        %vm686 = vsmask.f32 256
        %vm687 = vsmask.f32 4368
        %vm688 = vmor %vm686, %vm687
        %v690 = vshrl.u32 %v654, 16
        %v692 = vrot.slane %v690, 7
        %v693 = vshll.u32 %v654, 16
        %v695 = vor.u32 %v692, %v693
        %v696 = vrot.slane %v692, 4
        %v698 = vshrl.u32 %v655, 16
        %v700 = vrot.slane %v698, 7
        %v701 = vshll.u32 %v655, 16
        %v703 = vor.u32 %v700, %v701
        %v704 = vsel %vm688, %v696, %v703
        %v705 = vrot.slane %v700, 4
        %v707 = vshrl.u32 %v656, 16
        %v709 = vrot.slane %v707, 7
        %v710 = vshll.u32 %v656, 16
        %v712 = vor.u32 %v709, %v710
        %v713 = vrot.slane %v709, 4
        %v715 = vshrl.u32 %v657, 16
        %v717 = vrot.slane %v715, 7
        %v718 = vshll.u32 %v657, 16
        %v720 = vor.u32 %v717, %v718
        %v721 = vsel %vm688, %v713, %v720
        %v722 = vrot.slane %v717, 4
        %v724 = vshrl.u32 %v658, 16
        %v726 = vrot.slane %v724, 7
        %v727 = vshll.u32 %v658, 16
        %v729 = vor.u32 %v726, %v727
        %v730 = vrot.slane %v726, 4
        %v732 = vshrl.u32 %v659, 16
        %v734 = vrot.slane %v732, 7
        %v735 = vshll.u32 %v659, 16
        %v737 = vor.u32 %v734, %v735
        %v738 = vsel %vm688, %v730, %v737
        %v739 = vrot.slane %v734, 4
        %v741 = vshrl.u32 %v660, 16
        %v743 = vrot.slane %v741, 7
        %v744 = vshll.u32 %v660, 16
        %v746 = vor.u32 %v743, %v744
        %v747 = vrot.slane %v743, 4
        %v749 = vshrl.u32 %v661, 16
        %v751 = vrot.slane %v749, 7
        %v752 = vshll.u32 %v661, 16
        %v754 = vor.u32 %v751, %v752
        %v755 = vsel %vm688, %v747, %v754
        %v756 = vrot.slane %v751, 4
        %v758 = vshrl.u32 %v662, 16
        %v760 = vrot.slane %v758, 7
        %v761 = vshll.u32 %v662, 16
        %v763 = vor.u32 %v760, %v761
        %v764 = vrot.slane %v760, 4
        %v766 = vshrl.u32 %v663, 16
        %v768 = vrot.slane %v766, 7
        %v769 = vshll.u32 %v663, 16
        %v771 = vor.u32 %v768, %v769
        %v772 = vsel %vm688, %v764, %v771
        %v773 = vrot.slane %v768, 4
        %v775 = vshrl.u32 %v664, 16
        %v777 = vrot.slane %v775, 7
        %v778 = vshll.u32 %v664, 16
        %v780 = vor.u32 %v777, %v778
        %v781 = vrot.slane %v777, 4
        %v783 = vshrl.u32 %v665, 16
        %v785 = vrot.slane %v783, 7
        %v786 = vshll.u32 %v665, 16
        %v788 = vor.u32 %v785, %v786
        %v789 = vsel %vm688, %v781, %v788
        %v790 = vrot.slane %v785, 4
        %v792 = vshrl.u32 %v666, 16
        %v794 = vrot.slane %v792, 7
        %v795 = vshll.u32 %v666, 16
        %v797 = vor.u32 %v794, %v795
        %v798 = vrot.slane %v794, 4
        %v800 = vshrl.u32 %v667, 16
        %v802 = vrot.slane %v800, 7
        %v803 = vshll.u32 %v667, 16
        %v805 = vor.u32 %v802, %v803
        %v806 = vsel %vm688, %v798, %v805
        %v807 = vrot.slane %v802, 4
        %v809 = vshrl.u32 %v668, 16
        %v811 = vrot.slane %v809, 7
        %v812 = vshll.u32 %v668, 16
        %v814 = vor.u32 %v811, %v812
        %v815 = vrot.slane %v811, 4
        %v817 = vshrl.u32 %v669, 16
        %v819 = vrot.slane %v817, 7
        %v820 = vshll.u32 %v669, 16
        %v822 = vor.u32 %v819, %v820
        %v823 = vsel %vm688, %v815, %v822
        %v824 = vrot.slane %v819, 4
        %v826 = vshrl.u32 %v670, 16
        %v828 = vrot.slane %v826, 7
        %v829 = vshll.u32 %v670, 16
        %v831 = vor.u32 %v828, %v829
        %v832 = vrot.slane %v828, 4
        %v834 = vshrl.u32 %v671, 16
        %v836 = vrot.slane %v834, 7
        %v837 = vshll.u32 %v671, 16
        %v839 = vor.u32 %v836, %v837
        %v840 = vsel %vm688, %v832, %v839
        %v841 = vrot.slane %v836, 4
        %v843 = vshrl.u32 %v672, 16
        %v845 = vrot.slane %v843, 7
        %v846 = vshll.u32 %v672, 16
        %v848 = vor.u32 %v845, %v846
        %v849 = vrot.slane %v845, 4
        %v851 = vshrl.u32 %v673, 16
        %v853 = vrot.slane %v851, 7
        %v854 = vshll.u32 %v673, 16
        %v856 = vor.u32 %v853, %v854
        %v857 = vsel %vm688, %v849, %v856
        %v858 = vrot.slane %v853, 4
        %v860 = vshrl.u32 %v674, 16
        %v862 = vrot.slane %v860, 7
        %v863 = vshll.u32 %v674, 16
        %v865 = vor.u32 %v862, %v863
        %v866 = vrot.slane %v862, 4
        %v868 = vshrl.u32 %v675, 16
        %v870 = vrot.slane %v868, 7
        %v871 = vshll.u32 %v675, 16
        %v873 = vor.u32 %v870, %v871
        %v874 = vsel %vm688, %v866, %v873
        %v875 = vrot.slane %v870, 4
        %v877 = vshrl.u32 %v676, 16
        %v879 = vrot.slane %v877, 7
        %v880 = vshll.u32 %v676, 16
        %v882 = vor.u32 %v879, %v880
        %v883 = vrot.slane %v879, 4
        %v885 = vshrl.u32 %v677, 16
        %v887 = vrot.slane %v885, 7
        %v888 = vshll.u32 %v677, 16
        %v890 = vor.u32 %v887, %v888
        %v891 = vsel %vm688, %v883, %v890
        %v892 = vrot.slane %v887, 4
        %v894 = vshrl.u32 %v678, 16
        %v896 = vrot.slane %v894, 7
        %v897 = vshll.u32 %v678, 16
        %v899 = vor.u32 %v896, %v897
        %v900 = vrot.slane %v896, 4
        %v902 = vshrl.u32 %v679, 16
        %v904 = vrot.slane %v902, 7
        %v905 = vshll.u32 %v679, 16
        %v907 = vor.u32 %v904, %v905
        %v908 = vsel %vm688, %v900, %v907
        %v909 = vrot.slane %v904, 4
        %v911 = vshrl.u32 %v680, 16
        %v913 = vrot.slane %v911, 7
        %v914 = vshll.u32 %v680, 16
        %v916 = vor.u32 %v913, %v914
        %v917 = vrot.slane %v913, 4
        %v919 = vshrl.u32 %v681, 16
        %v921 = vrot.slane %v919, 7
        %v922 = vshll.u32 %v681, 16
        %v924 = vor.u32 %v921, %v922
        %v925 = vsel %vm688, %v917, %v924
        %v926 = vrot.slane %v921, 4
        %v928 = vshrl.u32 %v682, 16
        %v930 = vrot.slane %v928, 7
        %v931 = vshll.u32 %v682, 16
        %v933 = vor.u32 %v930, %v931
        %v934 = vrot.slane %v930, 4
        %v936 = vshrl.u32 %v683, 16
        %v938 = vrot.slane %v936, 7
        %v939 = vshll.u32 %v683, 16
        %v941 = vor.u32 %v938, %v939
        %v942 = vsel %vm688, %v934, %v941
        %v943 = vrot.slane %v938, 4
        %v945 = vshrl.u32 %v684, 16
        %v947 = vrot.slane %v945, 7
        %v948 = vshll.u32 %v684, 16
        %v950 = vor.u32 %v947, %v948
        %v951 = vrot.slane %v947, 4
        %v953 = vshrl.u32 %v685, 16
        %v955 = vrot.slane %v953, 7
        %v956 = vshll.u32 %v685, 16
        %v958 = vor.u32 %v955, %v956
        %v959 = vsel %vm688, %v951, %v958
        %v960 = vrot.slane %v955, 4
        %s1009 = scalar_lea.vmem [#allocation2], 12
        %vm1010 = vcmask 1043456
        %vm1011 = vsmask.f32 7938
        %vm1012 = vmand %vm1010, %vm1011
        %v1013 = vld [vmem:[%s1009] sm:$0xf]
        %v1014 = vsel %vm1012, %v695, %v1013
        %1015 = vst [vmem:[%s1009] sm:$0xf] %v1014
        %1016 = vst [vmem:[%s1009 + $0x4] sm:$0xf] %v704
        %vm1017 = vcmask 1040384
        %vm1018 = vmand %vm1017, %vm686
        %v1019 = vld [vmem:[%s1009 + $0x8] sm:$0x1]
        %v1020 = vsel %vm1018, %v705, %v1019
        %1021 = vst [vmem:[%s1009 + $0x8] sm:$0x1] %v1020
        %v1022 = vld [vmem:[%s1009 + $0xc] sm:$0xf]
        %v1023 = vsel %vm1012, %v712, %v1022
        %1024 = vst [vmem:[%s1009 + $0xc] sm:$0xf] %v1023
        %1025 = vst [vmem:[%s1009 + $0x10] sm:$0xf] %v721
        %v1026 = vld [vmem:[%s1009 + $0x14] sm:$0x1]
        %v1027 = vsel %vm1018, %v722, %v1026
        %1028 = vst [vmem:[%s1009 + $0x14] sm:$0x1] %v1027
        %v1029 = vld [vmem:[%s1009 + $0x18] sm:$0xf]
        %v1030 = vsel %vm1012, %v729, %v1029
        %1031 = vst [vmem:[%s1009 + $0x18] sm:$0xf] %v1030
        %1032 = vst [vmem:[%s1009 + $0x1c] sm:$0xf] %v738
        %v1033 = vld [vmem:[%s1009 + $0x20] sm:$0x1]
        %v1034 = vsel %vm1018, %v739, %v1033
        %1035 = vst [vmem:[%s1009 + $0x20] sm:$0x1] %v1034
        %v1036 = vld [vmem:[%s1009 + $0x24] sm:$0xf]
        %v1037 = vsel %vm1012, %v746, %v1036
        %1038 = vst [vmem:[%s1009 + $0x24] sm:$0xf] %v1037
        %1039 = vst [vmem:[%s1009 + $0x28] sm:$0xf] %v755
        %v1040 = vld [vmem:[%s1009 + $0x2c] sm:$0x1]
        %v1041 = vsel %vm1018, %v756, %v1040
        %1042 = vst [vmem:[%s1009 + $0x2c] sm:$0x1] %v1041
        %v1043 = vld [vmem:[%s1009 + $0x30] sm:$0xf]
        %v1044 = vsel %vm1012, %v763, %v1043
        %1045 = vst [vmem:[%s1009 + $0x30] sm:$0xf] %v1044
        %1046 = vst [vmem:[%s1009 + $0x34] sm:$0xf] %v772
        %v1047 = vld [vmem:[%s1009 + $0x38] sm:$0x1]
        %v1048 = vsel %vm1018, %v773, %v1047
        %1049 = vst [vmem:[%s1009 + $0x38] sm:$0x1] %v1048
        %v1050 = vld [vmem:[%s1009 + $0x3c] sm:$0xf]
        %v1051 = vsel %vm1012, %v780, %v1050
        %1052 = vst [vmem:[%s1009 + $0x3c] sm:$0xf] %v1051
        %1053 = vst [vmem:[%s1009 + $0x40] sm:$0xf] %v789
        %v1054 = vld [vmem:[%s1009 + $0x44] sm:$0x1]
        %v1055 = vsel %vm1018, %v790, %v1054
        %1056 = vst [vmem:[%s1009 + $0x44] sm:$0x1] %v1055
        %v1057 = vld [vmem:[%s1009 + $0x48] sm:$0xf]
        %v1058 = vsel %vm1012, %v797, %v1057
        %1059 = vst [vmem:[%s1009 + $0x48] sm:$0xf] %v1058
        %1060 = vst [vmem:[%s1009 + $0x4c] sm:$0xf] %v806
        %v1061 = vld [vmem:[%s1009 + $0x50] sm:$0x1]
        %v1062 = vsel %vm1018, %v807, %v1061
        %1063 = vst [vmem:[%s1009 + $0x50] sm:$0x1] %v1062
        %v1064 = vld [vmem:[%s1009 + $0x54] sm:$0xf]
        %v1065 = vsel %vm1012, %v814, %v1064
        %1066 = vst [vmem:[%s1009 + $0x54] sm:$0xf] %v1065
        %1067 = vst [vmem:[%s1009 + $0x58] sm:$0xf] %v823
        %v1068 = vld [vmem:[%s1009 + $0x5c] sm:$0x1]
        %v1069 = vsel %vm1018, %v824, %v1068
        %1070 = vst [vmem:[%s1009 + $0x5c] sm:$0x1] %v1069
        %v1071 = vld [vmem:[%s1009 + $0x60] sm:$0xf]
        %v1072 = vsel %vm1012, %v831, %v1071
        %1073 = vst [vmem:[%s1009 + $0x60] sm:$0xf] %v1072
        %1074 = vst [vmem:[%s1009 + $0x64] sm:$0xf] %v840
        %v1075 = vld [vmem:[%s1009 + $0x68] sm:$0x1]
        %v1076 = vsel %vm1018, %v841, %v1075
        %1077 = vst [vmem:[%s1009 + $0x68] sm:$0x1] %v1076
        %v1078 = vld [vmem:[%s1009 + $0x6c] sm:$0xf]
        %v1079 = vsel %vm1012, %v848, %v1078
        %1080 = vst [vmem:[%s1009 + $0x6c] sm:$0xf] %v1079
        %1081 = vst [vmem:[%s1009 + $0x70] sm:$0xf] %v857
        %v1082 = vld [vmem:[%s1009 + $0x74] sm:$0x1]
        %v1083 = vsel %vm1018, %v858, %v1082
        %1084 = vst [vmem:[%s1009 + $0x74] sm:$0x1] %v1083
        %v1085 = vld [vmem:[%s1009 + $0x78] sm:$0xf]
        %v1086 = vsel %vm1012, %v865, %v1085
        %1087 = vst [vmem:[%s1009 + $0x78] sm:$0xf] %v1086
        %1088 = vst [vmem:[%s1009 + $0x7c] sm:$0xf] %v874
        %v1089 = vld [vmem:[%s1009 + $0x80] sm:$0x1]
        %v1090 = vsel %vm1018, %v875, %v1089
        %1091 = vst [vmem:[%s1009 + $0x80] sm:$0x1] %v1090
        %v1092 = vld [vmem:[%s1009 + $0x84] sm:$0xf]
        %v1093 = vsel %vm1012, %v882, %v1092
        %1094 = vst [vmem:[%s1009 + $0x84] sm:$0xf] %v1093
        %1095 = vst [vmem:[%s1009 + $0x88] sm:$0xf] %v891
        %v1096 = vld [vmem:[%s1009 + $0x8c] sm:$0x1]
        %v1097 = vsel %vm1018, %v892, %v1096
        %1098 = vst [vmem:[%s1009 + $0x8c] sm:$0x1] %v1097
        %v1099 = vld [vmem:[%s1009 + $0x90] sm:$0xf]
        %v1100 = vsel %vm1012, %v899, %v1099
        %1101 = vst [vmem:[%s1009 + $0x90] sm:$0xf] %v1100
        %1102 = vst [vmem:[%s1009 + $0x94] sm:$0xf] %v908
        %v1103 = vld [vmem:[%s1009 + $0x98] sm:$0x1]
        %v1104 = vsel %vm1018, %v909, %v1103
        %1105 = vst [vmem:[%s1009 + $0x98] sm:$0x1] %v1104
        %v1106 = vld [vmem:[%s1009 + $0x9c] sm:$0xf]
        %v1107 = vsel %vm1012, %v916, %v1106
        %1108 = vst [vmem:[%s1009 + $0x9c] sm:$0xf] %v1107
        %1109 = vst [vmem:[%s1009 + $0xa0] sm:$0xf] %v925
        %v1110 = vld [vmem:[%s1009 + $0xa4] sm:$0x1]
        %v1111 = vsel %vm1018, %v926, %v1110
        %1112 = vst [vmem:[%s1009 + $0xa4] sm:$0x1] %v1111
        %v1113 = vld [vmem:[%s1009 + $0xa8] sm:$0xf]
        %v1114 = vsel %vm1012, %v933, %v1113
        %1115 = vst [vmem:[%s1009 + $0xa8] sm:$0xf] %v1114
        %1116 = vst [vmem:[%s1009 + $0xac] sm:$0xf] %v942
        %v1117 = vld [vmem:[%s1009 + $0xb0] sm:$0x1]
        %v1118 = vsel %vm1018, %v943, %v1117
        %1119 = vst [vmem:[%s1009 + $0xb0] sm:$0x1] %v1118
        %v1120 = vld [vmem:[%s1009 + $0xb4] sm:$0xf]
        %v1121 = vsel %vm1012, %v950, %v1120
        %1122 = vst [vmem:[%s1009 + $0xb4] sm:$0xf] %v1121
        %1123 = vst [vmem:[%s1009 + $0xb8] sm:$0xf] %v959
        %v1124 = vld [vmem:[%s1009 + $0xbc] sm:$0x1]
        %v1125 = vsel %vm1018, %v960, %v1124
        %1126 = vst [vmem:[%s1009 + $0xbc] sm:$0x1] %v1125
      $region52: #{basic_block_forward.2} parent=47 // pred_fallthru
        _
      %s1127 = smul.u32 %s25, 8
      %s1128 = smul.u32 %s1127, 3
      %s1129 = smul.addr %s1128, 4
      %s1130 = scalar_lea.vmem [#allocation2], %s1129
      %v1131 = vld [vmem:[%s1130] sm:$0xf]
      %v1132 = vld [vmem:[%s1130 + $0x4] sm:$0xf]
      %v1133 = vld [vmem:[%s1130 + $0x8] sm:$0x1]
      %v1134 = vld [vmem:[%s1130 + $0xc] sm:$0xf]
      %v1135 = vld [vmem:[%s1130 + $0x10] sm:$0xf]
      %v1136 = vld [vmem:[%s1130 + $0x14] sm:$0x1]
      %v1137 = vld [vmem:[%s1130 + $0x18] sm:$0xf]
      %v1138 = vld [vmem:[%s1130 + $0x1c] sm:$0xf]
      %v1139 = vld [vmem:[%s1130 + $0x20] sm:$0x1]
      %v1140 = vld [vmem:[%s1130 + $0x24] sm:$0xf]
      %v1141 = vld [vmem:[%s1130 + $0x28] sm:$0xf]
      %v1142 = vld [vmem:[%s1130 + $0x2c] sm:$0x1]
      %v1143 = vld [vmem:[%s1130 + $0x30] sm:$0xf]
      %v1144 = vld [vmem:[%s1130 + $0x34] sm:$0xf]
      %v1145 = vld [vmem:[%s1130 + $0x38] sm:$0x1]
      %v1146 = vld [vmem:[%s1130 + $0x3c] sm:$0xf]
      %v1147 = vld [vmem:[%s1130 + $0x40] sm:$0xf]
      %v1148 = vld [vmem:[%s1130 + $0x44] sm:$0x1]
      %v1149 = vld [vmem:[%s1130 + $0x48] sm:$0xf]
      %v1150 = vld [vmem:[%s1130 + $0x4c] sm:$0xf]
      %v1151 = vld [vmem:[%s1130 + $0x50] sm:$0x1]
      %v1152 = vld [vmem:[%s1130 + $0x54] sm:$0xf]
      %v1153 = vld [vmem:[%s1130 + $0x58] sm:$0xf]
      %v1154 = vld [vmem:[%s1130 + $0x5c] sm:$0x1]
      %v1155 = vld [vmem:[%s1130 + $0x60] sm:$0xf]
      %v1156 = vld [vmem:[%s1130 + $0x64] sm:$0xf]
      %v1157 = vld [vmem:[%s1130 + $0x68] sm:$0x1]
      %v1158 = vld [vmem:[%s1130 + $0x6c] sm:$0xf]
      %v1159 = vld [vmem:[%s1130 + $0x70] sm:$0xf]
      %v1160 = vld [vmem:[%s1130 + $0x74] sm:$0x1]
      %vm1161 = vsmask.f32 3328
      %vm1162 = vsmask.f32 7440
      %vm1163 = vmor %vm1161, %vm1162
      %v1165 = vshrl.u32 %v1131, 16
      %v1167 = vrot.slane %v1165, 4
      %v1168 = vshll.u32 %v1131, 16
      %v1170 = vrot.slane %v1168, 5
      %v1171 = vor.u32 %v1167, %v1170
      %v1172 = vrot.slane %v1171, 4
      %v1174 = vshll.u32 %v1132, 16
      %v1176 = vrot.slane %v1174, 5
      %v1177 = vsel %vm1163, %v1172, %v1176
      %v1178 = vshrl.u32 %v1132, 16
      %v1180 = vrot.slane %v1178, 4
      %v1181 = vor.u32 %v1180, %v1176
      %v1182 = vrot.slane %v1181, 4
      %v1184 = vshll.u32 %v1133, 16
      %v1186 = vrot.slane %v1184, 5
      %v1187 = vsel %vm1163, %v1182, %v1186
      %v1189 = vshrl.u32 %v1134, 16
      %v1191 = vrot.slane %v1189, 4
      %v1192 = vshll.u32 %v1134, 16
      %v1194 = vrot.slane %v1192, 5
      %v1195 = vor.u32 %v1191, %v1194
      %v1196 = vrot.slane %v1195, 4
      %v1198 = vshll.u32 %v1135, 16
      %v1200 = vrot.slane %v1198, 5
      %v1201 = vsel %vm1163, %v1196, %v1200
      %v1202 = vshrl.u32 %v1135, 16
      %v1204 = vrot.slane %v1202, 4
      %v1205 = vor.u32 %v1204, %v1200
      %v1206 = vrot.slane %v1205, 4
      %v1208 = vshll.u32 %v1136, 16
      %v1210 = vrot.slane %v1208, 5
      %v1211 = vsel %vm1163, %v1206, %v1210
      %v1213 = vshrl.u32 %v1137, 16
      %v1215 = vrot.slane %v1213, 4
      %v1216 = vshll.u32 %v1137, 16
      %v1218 = vrot.slane %v1216, 5
      %v1219 = vor.u32 %v1215, %v1218
      %v1220 = vrot.slane %v1219, 4
      %v1222 = vshll.u32 %v1138, 16
      %v1224 = vrot.slane %v1222, 5
      %v1225 = vsel %vm1163, %v1220, %v1224
      %v1226 = vshrl.u32 %v1138, 16
      %v1228 = vrot.slane %v1226, 4
      %v1229 = vor.u32 %v1228, %v1224
      %v1230 = vrot.slane %v1229, 4
      %v1232 = vshll.u32 %v1139, 16
      %v1234 = vrot.slane %v1232, 5
      %v1235 = vsel %vm1163, %v1230, %v1234
      %v1237 = vshrl.u32 %v1140, 16
      %v1239 = vrot.slane %v1237, 4
      %v1240 = vshll.u32 %v1140, 16
      %v1242 = vrot.slane %v1240, 5
      %v1243 = vor.u32 %v1239, %v1242
      %v1244 = vrot.slane %v1243, 4
      %v1246 = vshll.u32 %v1141, 16
      %v1248 = vrot.slane %v1246, 5
      %v1249 = vsel %vm1163, %v1244, %v1248
      %v1250 = vshrl.u32 %v1141, 16
      %v1252 = vrot.slane %v1250, 4
      %v1253 = vor.u32 %v1252, %v1248
      %v1254 = vrot.slane %v1253, 4
      %v1256 = vshll.u32 %v1142, 16
      %v1258 = vrot.slane %v1256, 5
      %v1259 = vsel %vm1163, %v1254, %v1258
      %v1261 = vshrl.u32 %v1143, 16
      %v1263 = vrot.slane %v1261, 4
      %v1264 = vshll.u32 %v1143, 16
      %v1266 = vrot.slane %v1264, 5
      %v1267 = vor.u32 %v1263, %v1266
      %v1268 = vrot.slane %v1267, 4
      %v1270 = vshll.u32 %v1144, 16
      %v1272 = vrot.slane %v1270, 5
      %v1273 = vsel %vm1163, %v1268, %v1272
      %v1274 = vshrl.u32 %v1144, 16
      %v1276 = vrot.slane %v1274, 4
      %v1277 = vor.u32 %v1276, %v1272
      %v1278 = vrot.slane %v1277, 4
      %v1280 = vshll.u32 %v1145, 16
      %v1282 = vrot.slane %v1280, 5
      %v1283 = vsel %vm1163, %v1278, %v1282
      %v1285 = vshrl.u32 %v1146, 16
      %v1287 = vrot.slane %v1285, 4
      %v1288 = vshll.u32 %v1146, 16
      %v1290 = vrot.slane %v1288, 5
      %v1291 = vor.u32 %v1287, %v1290
      %v1292 = vrot.slane %v1291, 4
      %v1294 = vshll.u32 %v1147, 16
      %v1296 = vrot.slane %v1294, 5
      %v1297 = vsel %vm1163, %v1292, %v1296
      %v1298 = vshrl.u32 %v1147, 16
      %v1300 = vrot.slane %v1298, 4
      %v1301 = vor.u32 %v1300, %v1296
      %v1302 = vrot.slane %v1301, 4
      %v1304 = vshll.u32 %v1148, 16
      %v1306 = vrot.slane %v1304, 5
      %v1307 = vsel %vm1163, %v1302, %v1306
      %v1309 = vshrl.u32 %v1149, 16
      %v1311 = vrot.slane %v1309, 4
      %v1312 = vshll.u32 %v1149, 16
      %v1314 = vrot.slane %v1312, 5
      %v1315 = vor.u32 %v1311, %v1314
      %v1316 = vrot.slane %v1315, 4
      %v1318 = vshll.u32 %v1150, 16
      %v1320 = vrot.slane %v1318, 5
      %v1321 = vsel %vm1163, %v1316, %v1320
      %v1322 = vshrl.u32 %v1150, 16
      %v1324 = vrot.slane %v1322, 4
      %v1325 = vor.u32 %v1324, %v1320
      %v1326 = vrot.slane %v1325, 4
      %v1328 = vshll.u32 %v1151, 16
      %v1330 = vrot.slane %v1328, 5
      %v1331 = vsel %vm1163, %v1326, %v1330
      %v1333 = vshrl.u32 %v1152, 16
      %v1335 = vrot.slane %v1333, 4
      %v1336 = vshll.u32 %v1152, 16
      %v1338 = vrot.slane %v1336, 5
      %v1339 = vor.u32 %v1335, %v1338
      %v1340 = vrot.slane %v1339, 4
      %v1342 = vshll.u32 %v1153, 16
      %v1344 = vrot.slane %v1342, 5
      %v1345 = vsel %vm1163, %v1340, %v1344
      %v1346 = vshrl.u32 %v1153, 16
      %v1348 = vrot.slane %v1346, 4
      %v1349 = vor.u32 %v1348, %v1344
      %v1350 = vrot.slane %v1349, 4
      %v1352 = vshll.u32 %v1154, 16
      %v1354 = vrot.slane %v1352, 5
      %v1355 = vsel %vm1163, %v1350, %v1354
      %vm1380 = vcmask 1042432
      %vm1381 = vcmask 1046532
      %vm1382 = vmor %vm1380, %vm1381
      %v1383 = vrot.slane %v1131, 5
      %v1384 = vrot.slane %v1383, 4
      %v1385 = vrot.slane %v1132, 5
      %v1386 = vsel %vm1382, %v1384, %v1385
      %v1387 = vrot.slane %v1385, 4
      %v1388 = vrot.slane %v1133, 5
      %v1389 = vsel %vm1382, %v1387, %v1388
      %v1390 = vrot.slane %v1134, 5
      %v1391 = vrot.slane %v1390, 4
      %v1392 = vrot.slane %v1135, 5
      %v1393 = vsel %vm1382, %v1391, %v1392
      %v1394 = vrot.slane %v1392, 4
      %v1395 = vrot.slane %v1136, 5
      %v1396 = vsel %vm1382, %v1394, %v1395
      %v1397 = vrot.slane %v1137, 5
      %v1398 = vrot.slane %v1397, 4
      %v1399 = vrot.slane %v1138, 5
      %v1400 = vsel %vm1382, %v1398, %v1399
      %v1401 = vrot.slane %v1399, 4
      %v1402 = vrot.slane %v1139, 5
      %v1403 = vsel %vm1382, %v1401, %v1402
      %v1404 = vrot.slane %v1140, 5
      %v1405 = vrot.slane %v1404, 4
      %v1406 = vrot.slane %v1141, 5
      %v1407 = vsel %vm1382, %v1405, %v1406
      %v1408 = vrot.slane %v1406, 4
      %v1409 = vrot.slane %v1142, 5
      %v1410 = vsel %vm1382, %v1408, %v1409
      %v1411 = vrot.slane %v1143, 5
      %v1412 = vrot.slane %v1411, 4
      %v1413 = vrot.slane %v1144, 5
      %v1414 = vsel %vm1382, %v1412, %v1413
      %v1415 = vrot.slane %v1413, 4
      %v1416 = vrot.slane %v1145, 5
      %v1417 = vsel %vm1382, %v1415, %v1416
      %v1418 = vrot.slane %v1146, 5
      %v1419 = vrot.slane %v1418, 4
      %v1420 = vrot.slane %v1147, 5
      %v1421 = vsel %vm1382, %v1419, %v1420
      %v1422 = vrot.slane %v1420, 4
      %v1423 = vrot.slane %v1148, 5
      %v1424 = vsel %vm1382, %v1422, %v1423
      %v1425 = vrot.slane %v1149, 5
      %v1426 = vrot.slane %v1425, 4
      %v1427 = vrot.slane %v1150, 5
      %v1428 = vsel %vm1382, %v1426, %v1427
      %v1429 = vrot.slane %v1427, 4
      %v1430 = vrot.slane %v1151, 5
      %v1431 = vsel %vm1382, %v1429, %v1430
      %v1432 = vrot.slane %v1152, 5
      %v1433 = vrot.slane %v1432, 4
      %v1434 = vrot.slane %v1153, 5
      %v1435 = vsel %vm1382, %v1433, %v1434
      %v1436 = vrot.slane %v1434, 4
      %v1437 = vrot.slane %v1154, 5
      %v1438 = vsel %vm1382, %v1436, %v1437
      %v1440 = vshrl.u32 %v1155, 16
      %v1442 = vrot.slane %v1440, 4
      %v1443 = vshll.u32 %v1155, 16
      %v1445 = vrot.slane %v1443, 5
      %v1446 = vor.u32 %v1442, %v1445
      %v1447 = vrot.slane %v1446, 4
      %v1449 = vshll.u32 %v1156, 16
      %v1451 = vrot.slane %v1449, 5
      %v1452 = vsel %vm1163, %v1447, %v1451
      %v1453 = vshrl.u32 %v1156, 16
      %v1455 = vrot.slane %v1453, 4
      %v1456 = vor.u32 %v1455, %v1451
      %v1457 = vrot.slane %v1456, 4
      %v1459 = vshll.u32 %v1157, 16
      %v1461 = vrot.slane %v1459, 5
      %v1462 = vsel %vm1163, %v1457, %v1461
      %v1466 = vrot.slane %v1155, 5
      %v1467 = vrot.slane %v1466, 4
      %v1468 = vrot.slane %v1156, 5
      %v1469 = vsel %vm1382, %v1467, %v1468
      %v1470 = vrot.slane %v1468, 4
      %v1471 = vrot.slane %v1157, 5
      %v1472 = vsel %vm1382, %v1470, %v1471
      %v1474 = vshrl.u32 %v1158, 16
      %v1476 = vrot.slane %v1474, 4
      %v1477 = vshll.u32 %v1158, 16
      %v1479 = vrot.slane %v1477, 5
      %v1480 = vor.u32 %v1476, %v1479
      %v1481 = vrot.slane %v1480, 4
      %v1483 = vshll.u32 %v1159, 16
      %v1485 = vrot.slane %v1483, 5
      %v1486 = vsel %vm1163, %v1481, %v1485
      %v1487 = vshrl.u32 %v1159, 16
      %v1489 = vrot.slane %v1487, 4
      %v1490 = vor.u32 %v1489, %v1485
      %v1491 = vrot.slane %v1490, 4
      %v1493 = vshll.u32 %v1160, 16
      %v1495 = vrot.slane %v1493, 5
      %v1496 = vsel %vm1163, %v1491, %v1495
      %v1500 = vrot.slane %v1158, 5
      %v1501 = vrot.slane %v1500, 4
      %v1502 = vrot.slane %v1159, 5
      %v1503 = vsel %vm1382, %v1501, %v1502
      %v1504 = vrot.slane %v1502, 4
      %v1505 = vrot.slane %v1160, 5
      %v1506 = vsel %vm1382, %v1504, %v1505
      %v1507 = vunpack.c.l.b16 %v1131
      %v1508 = vunpack.c.l.b16 %v1132
      %v1509 = vunpack.c.l.b16 %v1134
      %v1510 = vunpack.c.l.b16 %v1135
      %v1511 = vunpack.c.l.b16 %v1137
      %v1512 = vunpack.c.l.b16 %v1138
      %v1513 = vunpack.c.l.b16 %v1140
      %v1514 = vunpack.c.l.b16 %v1141
      %v1515 = vunpack.c.l.b16 %v1143
      %v1516 = vunpack.c.l.b16 %v1144
      %v1517 = vunpack.c.l.b16 %v1146
      %v1518 = vunpack.c.l.b16 %v1147
      %v1519 = vunpack.c.l.b16 %v1149
      %v1520 = vunpack.c.l.b16 %v1150
      %v1521 = vunpack.c.l.b16 %v1152
      %v1522 = vunpack.c.l.b16 %v1153
      %v1523 = vpack.c.b16 %v1508, %v1507
      %v1524 = vpack.c.b16 %v1510, %v1509
      %v1525 = vpack.c.b16 %v1512, %v1511
      %v1526 = vpack.c.b16 %v1514, %v1513
      %v1527 = vpack.c.b16 %v1516, %v1515
      %v1528 = vpack.c.b16 %v1518, %v1517
      %v1529 = vpack.c.b16 %v1520, %v1519
      %v1530 = vpack.c.b16 %v1522, %v1521
      %v1539 = vunpack.c.l.b16 %v1177
      %v1540 = vunpack.c.l.b16 %v1187
      %v1541 = vunpack.c.l.b16 %v1201
      %v1542 = vunpack.c.l.b16 %v1211
      %v1543 = vunpack.c.l.b16 %v1225
      %v1544 = vunpack.c.l.b16 %v1235
      %v1545 = vunpack.c.l.b16 %v1249
      %v1546 = vunpack.c.l.b16 %v1259
      %v1547 = vunpack.c.l.b16 %v1273
      %v1548 = vunpack.c.l.b16 %v1283
      %v1549 = vunpack.c.l.b16 %v1297
      %v1550 = vunpack.c.l.b16 %v1307
      %v1551 = vunpack.c.l.b16 %v1321
      %v1552 = vunpack.c.l.b16 %v1331
      %v1553 = vunpack.c.l.b16 %v1345
      %v1554 = vunpack.c.l.b16 %v1355
      %v1555 = vpack.c.b16 %v1540, %v1539
      %v1556 = vpack.c.b16 %v1542, %v1541
      %v1557 = vpack.c.b16 %v1544, %v1543
      %v1558 = vpack.c.b16 %v1546, %v1545
      %v1559 = vpack.c.b16 %v1548, %v1547
      %v1560 = vpack.c.b16 %v1550, %v1549
      %v1561 = vpack.c.b16 %v1552, %v1551
      %v1562 = vpack.c.b16 %v1554, %v1553
      %v1571 = vunpack.c.l.b16 %v1386
      %v1572 = vunpack.c.l.b16 %v1389
      %v1573 = vunpack.c.l.b16 %v1393
      %v1574 = vunpack.c.l.b16 %v1396
      %v1575 = vunpack.c.l.b16 %v1400
      %v1576 = vunpack.c.l.b16 %v1403
      %v1577 = vunpack.c.l.b16 %v1407
      %v1578 = vunpack.c.l.b16 %v1410
      %v1579 = vunpack.c.l.b16 %v1414
      %v1580 = vunpack.c.l.b16 %v1417
      %v1581 = vunpack.c.l.b16 %v1421
      %v1582 = vunpack.c.l.b16 %v1424
      %v1583 = vunpack.c.l.b16 %v1428
      %v1584 = vunpack.c.l.b16 %v1431
      %v1585 = vunpack.c.l.b16 %v1435
      %v1586 = vunpack.c.l.b16 %v1438
      %v1587 = vpack.c.b16 %v1572, %v1571
      %v1588 = vpack.c.b16 %v1574, %v1573
      %v1589 = vpack.c.b16 %v1576, %v1575
      %v1590 = vpack.c.b16 %v1578, %v1577
      %v1591 = vpack.c.b16 %v1580, %v1579
      %v1592 = vpack.c.b16 %v1582, %v1581
      %v1593 = vpack.c.b16 %v1584, %v1583
      %v1594 = vpack.c.b16 %v1586, %v1585
      %v1603 = vunpack.c.l.b16 %v1155
      %v1604 = vunpack.c.l.b16 %v1156
      %v1605 = vpack.c.b16 %v1604, %v1603
      %v1607 = vunpack.c.l.b16 %v1452
      %v1608 = vunpack.c.l.b16 %v1462
      %v1609 = vpack.c.b16 %v1608, %v1607
      %v1611 = vunpack.c.l.b16 %v1469
      %v1612 = vunpack.c.l.b16 %v1472
      %v1613 = vpack.c.b16 %v1612, %v1611
      %v1615 = vunpack.c.l.b16 %v1158
      %v1616 = vunpack.c.l.b16 %v1159
      %v1617 = vpack.c.b16 %v1616, %v1615
      %v1619 = vunpack.c.l.b16 %v1486
      %v1620 = vunpack.c.l.b16 %v1496
      %v1621 = vpack.c.b16 %v1620, %v1619
      %v1623 = vunpack.c.l.b16 %v1503
      %v1624 = vunpack.c.l.b16 %v1506
      %v1625 = vpack.c.b16 %v1624, %v1623
      %v1627 = vld [vmem:[%s3] sm:$0xf]
      %v1628 = vld [vmem:[%s3 + $0x4] sm:$0xf]
      %v1629 = vld [vmem:[%s3 + $0x8] sm:$0xf]
      %v1630 = vld [vmem:[%s3 + $0xc] sm:$0xf]
      %v1631 = vld [vmem:[%s3 + $0x10] sm:$0xf]
      %v1632 = vld [vmem:[%s3 + $0x14] sm:$0xf]
      %v1633 = vld [vmem:[%s3 + $0x18] sm:$0xf]
      %v1634 = vld [vmem:[%s3 + $0x1c] sm:$0xf]
      %v1635 = vld [vmem:[%s3 + $0x20] sm:$0xf]
      %v1636 = vld [vmem:[%s3 + $0x24] sm:$0xf]
      %v1637 = vld [vmem:[%s3 + $0x28] sm:$0xf]
      %v1638 = vld [vmem:[%s3 + $0x2c] sm:$0xf]
      %v1639 = vld [vmem:[%s3 + $0x30] sm:$0xf]
      %v1640 = vld [vmem:[%s3 + $0x34] sm:$0xf]
      %v1641 = vld [vmem:[%s3 + $0x38] sm:$0xf]
      %v1642 = vld [vmem:[%s3 + $0x3c] sm:$0xf]
      %v1643 = vld [vmem:[%s3 + $0x40] sm:$0xf]
      %v1644 = vld [vmem:[%s3 + $0x44] sm:$0xf]
      %v1645 = vld [vmem:[%s3 + $0x48] sm:$0xf]
      %v1646 = vld [vmem:[%s3 + $0x4c] sm:$0xf]
      %v1647 = vld [vmem:[%s3 + $0x50] sm:$0xf]
      %v1648 = vld [vmem:[%s3 + $0x54] sm:$0xf]
      %v1649 = vld [vmem:[%s3 + $0x58] sm:$0xf]
      %v1650 = vld [vmem:[%s3 + $0x5c] sm:$0xf]
      %v1651 = vld [vmem:[%s3 + $0x60] sm:$0xf]
      %v1652 = vld [vmem:[%s3 + $0x64] sm:$0xf]
      %v1653 = vld [vmem:[%s3 + $0x68] sm:$0xf]
      %v1654 = vld [vmem:[%s3 + $0x6c] sm:$0xf]
      %v1655 = vld [vmem:[%s3 + $0x70] sm:$0xf]
      %v1656 = vld [vmem:[%s3 + $0x74] sm:$0xf]
      %v1657 = vld [vmem:[%s3 + $0x78] sm:$0xf]
      %v1658 = vld [vmem:[%s3 + $0x7c] sm:$0xf]
      %v1659 = vld [vmem:[%s3 + $0x80] sm:$0xf]
      %v1660 = vld [vmem:[%s3 + $0x84] sm:$0xf]
      %v1661 = vld [vmem:[%s3 + $0x88] sm:$0xf]
      %v1662 = vld [vmem:[%s3 + $0x8c] sm:$0xf]
      %v1663 = vld [vmem:[%s3 + $0x90] sm:$0xf]
      %v1664 = vld [vmem:[%s3 + $0x94] sm:$0xf]
      %v1665 = vld [vmem:[%s3 + $0x98] sm:$0xf]
      %v1666 = vld [vmem:[%s3 + $0x9c] sm:$0xf]
      %v1667 = vld [vmem:[%s3 + $0xa0] sm:$0xf]
      %v1668 = vld [vmem:[%s3 + $0xa4] sm:$0xf]
      %v1669 = vld [vmem:[%s3 + $0xa8] sm:$0xf]
      %v1670 = vld [vmem:[%s3 + $0xac] sm:$0xf]
      %v1671 = vld [vmem:[%s3 + $0xb0] sm:$0xf]
      %v1672 = vld [vmem:[%s3 + $0xb4] sm:$0xf]
      %v1673 = vld [vmem:[%s3 + $0xb8] sm:$0xf]
      %v1674 = vld [vmem:[%s3 + $0xbc] sm:$0xf]
      %v1675 = vld [vmem:[%s3 + $0xc0] sm:$0xf]
      %v1676 = vld [vmem:[%s3 + $0xc4] sm:$0xf]
      %v1677 = vld [vmem:[%s3 + $0xc8] sm:$0xf]
      %v1678 = vld [vmem:[%s3 + $0xcc] sm:$0xf]
      %v1679 = vld [vmem:[%s3 + $0xd0] sm:$0xf]
      %v1680 = vld [vmem:[%s3 + $0xd4] sm:$0xf]
      %v1681 = vld [vmem:[%s3 + $0xd8] sm:$0xf]
      %v1682 = vld [vmem:[%s3 + $0xdc] sm:$0xf]
      %v1683 = vld [vmem:[%s3 + $0xe0] sm:$0xf]
      %v1684 = vld [vmem:[%s3 + $0xe4] sm:$0xf]
      %v1685 = vld [vmem:[%s3 + $0xe8] sm:$0xf]
      %v1686 = vld [vmem:[%s3 + $0xec] sm:$0xf]
      %v1687 = vld [vmem:[%s3 + $0xf0] sm:$0xf]
      %v1688 = vld [vmem:[%s3 + $0xf4] sm:$0xf]
      %v1689 = vld [vmem:[%s3 + $0xf8] sm:$0xf]
      %v1690 = vld [vmem:[%s3 + $0xfc] sm:$0xf]
      %v1691 = vld [vmem:[%s3 + $0x100] sm:$0xf]
      %v1692 = vld [vmem:[%s3 + $0x104] sm:$0xf]
      %v1693 = vld [vmem:[%s3 + $0x108] sm:$0xf]
      %v1694 = vld [vmem:[%s3 + $0x10c] sm:$0xf]
      %v1695 = vld [vmem:[%s3 + $0x110] sm:$0xf]
      %v1696 = vld [vmem:[%s3 + $0x114] sm:$0xf]
      %v1697 = vld [vmem:[%s3 + $0x118] sm:$0xf]
      %v1698 = vld [vmem:[%s3 + $0x11c] sm:$0xf]
      %v1699 = vld [vmem:[%s3 + $0x120] sm:$0xf]
      %v1700 = vld [vmem:[%s3 + $0x124] sm:$0xf]
      %v1701 = vld [vmem:[%s3 + $0x128] sm:$0xf]
      %v1702 = vld [vmem:[%s3 + $0x12c] sm:$0xf]
      %v1703 = vld [vmem:[%s3 + $0x130] sm:$0xf]
      %v1704 = vld [vmem:[%s3 + $0x134] sm:$0xf]
      %v1705 = vld [vmem:[%s3 + $0x138] sm:$0xf]
      %v1706 = vld [vmem:[%s3 + $0x13c] sm:$0xf]
      %v1707 = vld [vmem:[%s3 + $0x140] sm:$0xf]
      %v1708 = vld [vmem:[%s3 + $0x144] sm:$0xf]
      %v1709 = vld [vmem:[%s3 + $0x148] sm:$0xf]
      %v1710 = vld [vmem:[%s3 + $0x14c] sm:$0xf]
      %v1711 = vld [vmem:[%s3 + $0x150] sm:$0xf]
      %v1712 = vld [vmem:[%s3 + $0x154] sm:$0xf]
      %v1713 = vld [vmem:[%s3 + $0x158] sm:$0xf]
      %v1714 = vld [vmem:[%s3 + $0x15c] sm:$0xf]
      %v1715 = vld [vmem:[%s3 + $0x160] sm:$0xf]
      %v1716 = vld [vmem:[%s3 + $0x164] sm:$0xf]
      %v1717 = vld [vmem:[%s3 + $0x168] sm:$0xf]
      %v1718 = vld [vmem:[%s3 + $0x16c] sm:$0xf]
      %v1719 = vld [vmem:[%s3 + $0x170] sm:$0xf]
      %v1720 = vld [vmem:[%s3 + $0x174] sm:$0xf]
      %v1721 = vld [vmem:[%s3 + $0x178] sm:$0xf]
      %v1722 = vld [vmem:[%s3 + $0x17c] sm:$0xf]
      %v1723 = vld [vmem:[%s3 + $0x180] sm:$0xf]
      %v1724 = vld [vmem:[%s3 + $0x184] sm:$0xf]
      %v1725 = vld [vmem:[%s3 + $0x188] sm:$0xf]
      %v1726 = vld [vmem:[%s3 + $0x18c] sm:$0xf]
      %v1727 = vld [vmem:[%s3 + $0x190] sm:$0xf]
      %v1728 = vld [vmem:[%s3 + $0x194] sm:$0xf]
      %v1729 = vld [vmem:[%s3 + $0x198] sm:$0xf]
      %v1730 = vld [vmem:[%s3 + $0x19c] sm:$0xf]
      %v1731 = vld [vmem:[%s3 + $0x1a0] sm:$0xf]
      %v1732 = vld [vmem:[%s3 + $0x1a4] sm:$0xf]
      %v1733 = vld [vmem:[%s3 + $0x1a8] sm:$0xf]
      %v1734 = vld [vmem:[%s3 + $0x1ac] sm:$0xf]
      %v1735 = vld [vmem:[%s3 + $0x1b0] sm:$0xf]
      %v1736 = vld [vmem:[%s3 + $0x1b4] sm:$0xf]
      %v1737 = vld [vmem:[%s3 + $0x1b8] sm:$0xf]
      %v1738 = vld [vmem:[%s3 + $0x1bc] sm:$0xf]
      %v1739 = vld [vmem:[%s3 + $0x1c0] sm:$0xf]
      %v1740 = vld [vmem:[%s3 + $0x1c4] sm:$0xf]
      %v1741 = vld [vmem:[%s3 + $0x1c8] sm:$0xf]
      %v1742 = vld [vmem:[%s3 + $0x1cc] sm:$0xf]
      %v1743 = vld [vmem:[%s3 + $0x1d0] sm:$0xf]
      %v1744 = vld [vmem:[%s3 + $0x1d4] sm:$0xf]
      %v1745 = vld [vmem:[%s3 + $0x1d8] sm:$0xf]
      %v1746 = vld [vmem:[%s3 + $0x1dc] sm:$0xf]
      %v1747 = vld [vmem:[%s3 + $0x1e0] sm:$0xf]
      %v1748 = vld [vmem:[%s3 + $0x1e4] sm:$0xf]
      %v1749 = vld [vmem:[%s3 + $0x1e8] sm:$0xf]
      %v1750 = vld [vmem:[%s3 + $0x1ec] sm:$0xf]
      %v1751 = vld [vmem:[%s3 + $0x1f0] sm:$0xf]
      %v1752 = vld [vmem:[%s3 + $0x1f4] sm:$0xf]
      %v1753 = vld [vmem:[%s3 + $0x1f8] sm:$0xf]
      %v1754 = vld [vmem:[%s3 + $0x1fc] sm:$0xf]
      %v1755 = vld [vmem:[%s3 + $0x200] sm:$0xf]
      %v1756 = vld [vmem:[%s3 + $0x204] sm:$0xf]
      %v1757 = vld [vmem:[%s3 + $0x208] sm:$0xf]
      %v1758 = vld [vmem:[%s3 + $0x20c] sm:$0xf]
      %v1759 = vld [vmem:[%s3 + $0x210] sm:$0xf]
      %v1760 = vld [vmem:[%s3 + $0x214] sm:$0xf]
      %v1761 = vld [vmem:[%s3 + $0x218] sm:$0xf]
      %v1762 = vld [vmem:[%s3 + $0x21c] sm:$0xf]
      %v1763 = vld [vmem:[%s3 + $0x220] sm:$0xf]
      %v1764 = vld [vmem:[%s3 + $0x224] sm:$0xf]
      %v1765 = vld [vmem:[%s3 + $0x228] sm:$0xf]
      %v1766 = vld [vmem:[%s3 + $0x22c] sm:$0xf]
      %v1767 = vld [vmem:[%s3 + $0x230] sm:$0xf]
      %v1768 = vld [vmem:[%s3 + $0x234] sm:$0xf]
      %v1769 = vld [vmem:[%s3 + $0x238] sm:$0xf]
      %v1770 = vld [vmem:[%s3 + $0x23c] sm:$0xf]
      %v1915 = vunpack.c.l.b16 %v1627
      %v1916 = vunpack.c.l.b16 %v1628
      %v1917 = vunpack.c.l.b16 %v1629
      %v1918 = vunpack.c.l.b16 %v1630
      %v1919 = vunpack.c.l.b16 %v1631
      %v1920 = vunpack.c.l.b16 %v1632
      %v1921 = vunpack.c.l.b16 %v1633
      %v1922 = vunpack.c.l.b16 %v1634
      %v1923 = vunpack.c.l.b16 %v1635
      %v1924 = vunpack.c.l.b16 %v1636
      %v1925 = vunpack.c.l.b16 %v1637
      %v1926 = vunpack.c.l.b16 %v1638
      %v1927 = vunpack.c.l.b16 %v1639
      %v1928 = vunpack.c.l.b16 %v1640
      %v1929 = vunpack.c.l.b16 %v1641
      %v1930 = vunpack.c.l.b16 %v1642
      %v1931 = vunpack.c.l.b16 %v1643
      %v1932 = vunpack.c.l.b16 %v1644
      %v1933 = vunpack.c.l.b16 %v1645
      %v1934 = vunpack.c.l.b16 %v1646
      %v1935 = vunpack.c.l.b16 %v1647
      %v1936 = vunpack.c.l.b16 %v1648
      %v1937 = vunpack.c.l.b16 %v1649
      %v1938 = vunpack.c.l.b16 %v1650
      %v1939 = vunpack.c.l.b16 %v1651
      %v1940 = vunpack.c.l.b16 %v1652
      %v1941 = vunpack.c.l.b16 %v1653
      %v1942 = vunpack.c.l.b16 %v1654
      %v1943 = vunpack.c.l.b16 %v1655
      %v1944 = vunpack.c.l.b16 %v1656
      %v1945 = vunpack.c.l.b16 %v1657
      %v1946 = vunpack.c.l.b16 %v1658
      %v1947 = vunpack.c.l.b16 %v1659
      %v1948 = vunpack.c.l.b16 %v1660
      %v1949 = vunpack.c.l.b16 %v1661
      %v1950 = vunpack.c.l.b16 %v1662
      %v1951 = vunpack.c.l.b16 %v1663
      %v1952 = vunpack.c.l.b16 %v1664
      %v1953 = vunpack.c.l.b16 %v1665
      %v1954 = vunpack.c.l.b16 %v1666
      %v1955 = vunpack.c.l.b16 %v1667
      %v1956 = vunpack.c.l.b16 %v1668
      %v1957 = vunpack.c.l.b16 %v1669
      %v1958 = vunpack.c.l.b16 %v1670
      %v1959 = vunpack.c.l.b16 %v1671
      %v1960 = vunpack.c.l.b16 %v1672
      %v1961 = vunpack.c.l.b16 %v1673
      %v1962 = vunpack.c.l.b16 %v1674
      %v1963 = vunpack.c.l.b16 %v1675
      %v1964 = vunpack.c.l.b16 %v1676
      %v1965 = vunpack.c.l.b16 %v1677
      %v1966 = vunpack.c.l.b16 %v1678
      %v1967 = vunpack.c.l.b16 %v1679
      %v1968 = vunpack.c.l.b16 %v1680
      %v1969 = vunpack.c.l.b16 %v1681
      %v1970 = vunpack.c.l.b16 %v1682
      %v1971 = vunpack.c.l.b16 %v1683
      %v1972 = vunpack.c.l.b16 %v1684
      %v1973 = vunpack.c.l.b16 %v1685
      %v1974 = vunpack.c.l.b16 %v1686
      %v1975 = vunpack.c.l.b16 %v1687
      %v1976 = vunpack.c.l.b16 %v1688
      %v1977 = vunpack.c.l.b16 %v1689
      %v1978 = vunpack.c.l.b16 %v1690
      %v1979 = vunpack.c.l.b16 %v1691
      %v1980 = vunpack.c.l.b16 %v1692
      %v1981 = vunpack.c.l.b16 %v1693
      %v1982 = vunpack.c.l.b16 %v1694
      %v1983 = vunpack.c.l.b16 %v1695
      %v1984 = vunpack.c.l.b16 %v1696
      %v1985 = vunpack.c.l.b16 %v1697
      %v1986 = vunpack.c.l.b16 %v1698
      %v1987 = vunpack.c.l.b16 %v1699
      %v1988 = vunpack.c.l.b16 %v1700
      %v1989 = vunpack.c.l.b16 %v1701
      %v1990 = vunpack.c.l.b16 %v1702
      %v1991 = vunpack.c.l.b16 %v1703
      %v1992 = vunpack.c.l.b16 %v1704
      %v1993 = vunpack.c.l.b16 %v1705
      %v1994 = vunpack.c.l.b16 %v1706
      %v1995 = vunpack.c.l.b16 %v1707
      %v1996 = vunpack.c.l.b16 %v1708
      %v1997 = vunpack.c.l.b16 %v1709
      %v1998 = vunpack.c.l.b16 %v1710
      %v1999 = vunpack.c.l.b16 %v1711
      %v2000 = vunpack.c.l.b16 %v1712
      %v2001 = vunpack.c.l.b16 %v1713
      %v2002 = vunpack.c.l.b16 %v1714
      %v2003 = vunpack.c.l.b16 %v1715
      %v2004 = vunpack.c.l.b16 %v1716
      %v2005 = vunpack.c.l.b16 %v1717
      %v2006 = vunpack.c.l.b16 %v1718
      %v2007 = vunpack.c.l.b16 %v1719
      %v2008 = vunpack.c.l.b16 %v1720
      %v2009 = vunpack.c.l.b16 %v1721
      %v2010 = vunpack.c.l.b16 %v1722
      %v2011 = vunpack.c.l.b16 %v1723
      %v2012 = vunpack.c.l.b16 %v1724
      %v2013 = vunpack.c.l.b16 %v1725
      %v2014 = vunpack.c.l.b16 %v1726
      %v2015 = vunpack.c.l.b16 %v1727
      %v2016 = vunpack.c.l.b16 %v1728
      %v2017 = vunpack.c.l.b16 %v1729
      %v2018 = vunpack.c.l.b16 %v1730
      %v2019 = vunpack.c.l.b16 %v1731
      %v2020 = vunpack.c.l.b16 %v1732
      %v2021 = vunpack.c.l.b16 %v1733
      %v2022 = vunpack.c.l.b16 %v1734
      %v2023 = vunpack.c.l.b16 %v1735
      %v2024 = vunpack.c.l.b16 %v1736
      %v2025 = vunpack.c.l.b16 %v1737
      %v2026 = vunpack.c.l.b16 %v1738
      %v2027 = vunpack.c.l.b16 %v1739
      %v2028 = vunpack.c.l.b16 %v1740
      %v2029 = vunpack.c.l.b16 %v1741
      %v2030 = vunpack.c.l.b16 %v1742
      %v2031 = vunpack.c.l.b16 %v1743
      %v2032 = vunpack.c.l.b16 %v1744
      %v2033 = vunpack.c.l.b16 %v1745
      %v2034 = vunpack.c.l.b16 %v1746
      %v2035 = vunpack.c.l.b16 %v1747
      %v2036 = vunpack.c.l.b16 %v1748
      %v2037 = vunpack.c.l.b16 %v1749
      %v2038 = vunpack.c.l.b16 %v1750
      %v2039 = vunpack.c.l.b16 %v1751
      %v2040 = vunpack.c.l.b16 %v1752
      %v2041 = vunpack.c.l.b16 %v1753
      %v2042 = vunpack.c.l.b16 %v1754
      %v2043 = vunpack.c.l.b16 %v1755
      %v2044 = vunpack.c.l.b16 %v1756
      %v2045 = vunpack.c.l.b16 %v1757
      %v2046 = vunpack.c.l.b16 %v1758
      %v2047 = vunpack.c.l.b16 %v1759
      %v2048 = vunpack.c.l.b16 %v1760
      %v2049 = vunpack.c.l.b16 %v1761
      %v2050 = vunpack.c.l.b16 %v1762
      %v2051 = vunpack.c.l.b16 %v1763
      %v2052 = vunpack.c.l.b16 %v1764
      %v2053 = vunpack.c.l.b16 %v1765
      %v2054 = vunpack.c.l.b16 %v1766
      %v2055 = vunpack.c.l.b16 %v1767
      %v2056 = vunpack.c.l.b16 %v1768
      %v2057 = vunpack.c.l.b16 %v1769
      %v2058 = vunpack.c.l.b16 %v1770
      %v2059 = vpack.c.b16 %v1916, %v1915
      %v2060 = vpack.c.b16 %v1918, %v1917
      %v2061 = vpack.c.b16 %v1920, %v1919
      %v2062 = vpack.c.b16 %v1922, %v1921
      %v2063 = vpack.c.b16 %v1924, %v1923
      %v2064 = vpack.c.b16 %v1926, %v1925
      %v2065 = vpack.c.b16 %v1928, %v1927
      %v2066 = vpack.c.b16 %v1930, %v1929
      %v2067 = vpack.c.b16 %v1932, %v1931
      %v2068 = vpack.c.b16 %v1934, %v1933
      %v2069 = vpack.c.b16 %v1936, %v1935
      %v2070 = vpack.c.b16 %v1938, %v1937
      %v2071 = vpack.c.b16 %v1940, %v1939
      %v2072 = vpack.c.b16 %v1942, %v1941
      %v2073 = vpack.c.b16 %v1944, %v1943
      %v2074 = vpack.c.b16 %v1946, %v1945
      %v2075 = vpack.c.b16 %v1948, %v1947
      %v2076 = vpack.c.b16 %v1950, %v1949
      %v2077 = vpack.c.b16 %v1952, %v1951
      %v2078 = vpack.c.b16 %v1954, %v1953
      %v2079 = vpack.c.b16 %v1956, %v1955
      %v2080 = vpack.c.b16 %v1958, %v1957
      %v2081 = vpack.c.b16 %v1960, %v1959
      %v2082 = vpack.c.b16 %v1962, %v1961
      %v2083 = vpack.c.b16 %v1964, %v1963
      %v2084 = vpack.c.b16 %v1966, %v1965
      %v2085 = vpack.c.b16 %v1968, %v1967
      %v2086 = vpack.c.b16 %v1970, %v1969
      %v2087 = vpack.c.b16 %v1972, %v1971
      %v2088 = vpack.c.b16 %v1974, %v1973
      %v2089 = vpack.c.b16 %v1976, %v1975
      %v2090 = vpack.c.b16 %v1978, %v1977
      %v2091 = vpack.c.b16 %v1980, %v1979
      %v2092 = vpack.c.b16 %v1982, %v1981
      %v2093 = vpack.c.b16 %v1984, %v1983
      %v2094 = vpack.c.b16 %v1986, %v1985
      %v2095 = vpack.c.b16 %v1988, %v1987
      %v2096 = vpack.c.b16 %v1990, %v1989
      %v2097 = vpack.c.b16 %v1992, %v1991
      %v2098 = vpack.c.b16 %v1994, %v1993
      %v2099 = vpack.c.b16 %v1996, %v1995
      %v2100 = vpack.c.b16 %v1998, %v1997
      %v2101 = vpack.c.b16 %v2000, %v1999
      %v2102 = vpack.c.b16 %v2002, %v2001
      %v2103 = vpack.c.b16 %v2004, %v2003
      %v2104 = vpack.c.b16 %v2006, %v2005
      %v2105 = vpack.c.b16 %v2008, %v2007
      %v2106 = vpack.c.b16 %v2010, %v2009
      %v2107 = vpack.c.b16 %v2012, %v2011
      %v2108 = vpack.c.b16 %v2014, %v2013
      %v2109 = vpack.c.b16 %v2016, %v2015
      %v2110 = vpack.c.b16 %v2018, %v2017
      %v2111 = vpack.c.b16 %v2020, %v2019
      %v2112 = vpack.c.b16 %v2022, %v2021
      %v2113 = vpack.c.b16 %v2024, %v2023
      %v2114 = vpack.c.b16 %v2026, %v2025
      %v2115 = vpack.c.b16 %v2028, %v2027
      %v2116 = vpack.c.b16 %v2030, %v2029
      %v2117 = vpack.c.b16 %v2032, %v2031
      %v2118 = vpack.c.b16 %v2034, %v2033
      %v2119 = vpack.c.b16 %v2036, %v2035
      %v2120 = vpack.c.b16 %v2038, %v2037
      %v2121 = vpack.c.b16 %v2040, %v2039
      %v2122 = vpack.c.b16 %v2042, %v2041
      %v2123 = vpack.c.b16 %v2044, %v2043
      %v2124 = vpack.c.b16 %v2046, %v2045
      %v2125 = vpack.c.b16 %v2048, %v2047
      %v2126 = vpack.c.b16 %v2050, %v2049
      %v2127 = vpack.c.b16 %v2052, %v2051
      %v2128 = vpack.c.b16 %v2054, %v2053
      %v2129 = vpack.c.b16 %v2056, %v2055
      %v2130 = vpack.c.b16 %v2058, %v2057
      %2203 = vmatprep.subr.bf16.mxu0 0
      %2204 = vmatpush1.bf16.msra.mxu0 %v2066
      %2205 = vmatprep.subr.bf16.mxu0 0
      %2206 = vmatpush1.bf16.msra.mxu0 %v2065
      %2207 = vmatprep.subr.bf16.mxu0 0
      %2208 = vmatpush1.bf16.msra.mxu0 %v2064
      %2209 = vmatprep.subr.bf16.mxu0 0
      %2210 = vmatpush1.bf16.msra.mxu0 %v2063
      %2211 = vmatprep.subr.bf16.mxu0 0
      %2212 = vmatpush1.bf16.msra.mxu0 %v2062
      %2213 = vmatprep.subr.bf16.mxu0 0
      %2214 = vmatpush1.bf16.msra.mxu0 %v2061
      %2215 = vmatprep.subr.bf16.mxu0 0
      %2216 = vmatpush1.bf16.msra.mxu0 %v2060
      %2217 = vmatprep.subr.bf16.mxu0 0
      %2218 = vmatpush1.bf16.msra.mxu0 %v2059
      %2219 = vmatprep.subr.bf16.mxu0 0
      %2220 = vmatpush2.bf16.msra.mxu0 %v2074
      %2221 = vmatprep.subr.bf16.mxu0 0
      %2222 = vmatpush2.bf16.msra.mxu0 %v2073
      %2223 = vmatprep.subr.bf16.mxu0 0
      %2224 = vmatpush2.bf16.msra.mxu0 %v2072
      %2225 = vmatprep.subr.bf16.mxu0 0
      %2226 = vmatpush2.bf16.msra.mxu0 %v2071
      %2227 = vmatprep.subr.bf16.mxu0 0
      %2228 = vmatpush2.bf16.msra.mxu0 %v2070
      %2229 = vmatprep.subr.bf16.mxu0 0
      %2230 = vmatpush2.bf16.msra.mxu0 %v2069
      %2231 = vmatprep.subr.bf16.mxu0 0
      %2232 = vmatpush2.bf16.msra.mxu0 %v2068
      %2233 = vmatprep.subr.bf16.mxu0 0
      %2234 = vmatpush2.bf16.msra.mxu0 %v2067
      %2235 = vmatprep.mubr.bf16.mxu0 %v1555
      %2236 = vmatmul.mubr.bf16.gmra.mxu0 %v1523
      %v2237 = vpop.f32.mrf.mxu0
      %v2238 = vadd.f32 0.0, %v2237
      %v2239 = vpop.f32.mrf.mxu0
      %v2240 = vpop.f32.mrf.mxu0
      %v2241 = vadd.f32 0.0, %v2240
      %v2242 = vpop.f32.mrf.mxu0
      %2243 = vmatprep.mubr.bf16.mxu0 %v1556
      %2244 = vmatmul.mubr.bf16.gmra.mxu0 %v1524
      %v2245 = vpop.f32.mrf.mxu0
      %v2246 = vadd.f32 0.0, %v2245
      %v2247 = vpop.f32.mrf.mxu0
      %v2248 = vpop.f32.mrf.mxu0
      %v2249 = vadd.f32 0.0, %v2248
      %v2250 = vpop.f32.mrf.mxu0
      %2251 = vmatprep.mubr.bf16.mxu0 %v1557
      %2252 = vmatmul.mubr.bf16.gmra.mxu0 %v1525
      %v2253 = vpop.f32.mrf.mxu0
      %v2254 = vadd.f32 0.0, %v2253
      %v2255 = vpop.f32.mrf.mxu0
      %v2256 = vpop.f32.mrf.mxu0
      %v2257 = vadd.f32 0.0, %v2256
      %v2258 = vpop.f32.mrf.mxu0
      %2259 = vmatprep.mubr.bf16.mxu0 %v1558
      %2260 = vmatmul.mubr.bf16.gmra.mxu0 %v1526
      %v2261 = vpop.f32.mrf.mxu0
      %v2262 = vadd.f32 0.0, %v2261
      %v2263 = vpop.f32.mrf.mxu0
      %v2264 = vpop.f32.mrf.mxu0
      %v2265 = vadd.f32 0.0, %v2264
      %v2266 = vpop.f32.mrf.mxu0
      %2267 = vmatprep.mubr.bf16.mxu0 %v1559
      %2268 = vmatmul.mubr.bf16.gmra.mxu0 %v1527
      %v2269 = vpop.f32.mrf.mxu0
      %v2270 = vadd.f32 0.0, %v2269
      %v2271 = vpop.f32.mrf.mxu0
      %v2272 = vpop.f32.mrf.mxu0
      %v2273 = vadd.f32 0.0, %v2272
      %v2274 = vpop.f32.mrf.mxu0
      %2275 = vmatprep.mubr.bf16.mxu0 %v1560
      %2276 = vmatmul.mubr.bf16.gmra.mxu0 %v1528
      %v2277 = vpop.f32.mrf.mxu0
      %v2278 = vadd.f32 0.0, %v2277
      %v2279 = vpop.f32.mrf.mxu0
      %v2280 = vpop.f32.mrf.mxu0
      %v2281 = vadd.f32 0.0, %v2280
      %v2282 = vpop.f32.mrf.mxu0
      %2283 = vmatprep.mubr.bf16.mxu0 %v1561
      %2284 = vmatmul.mubr.bf16.gmra.mxu0 %v1529
      %v2285 = vpop.f32.mrf.mxu0
      %v2286 = vadd.f32 0.0, %v2285
      %v2287 = vpop.f32.mrf.mxu0
      %v2288 = vpop.f32.mrf.mxu0
      %v2289 = vadd.f32 0.0, %v2288
      %v2290 = vpop.f32.mrf.mxu0
      %2291 = vmatprep.mubr.bf16.mxu0 %v1562
      %2292 = vmatmul.mubr.bf16.gmra.mxu0 %v1530
      %v2293 = vpop.f32.mrf.mxu0
      %v2294 = vadd.f32 0.0, %v2293
      %v2295 = vpop.f32.mrf.mxu0
      %v2296 = vpop.f32.mrf.mxu0
      %v2297 = vadd.f32 0.0, %v2296
      %v2298 = vpop.f32.mrf.mxu0
      %2299 = vdwg.mxu0
      %2300 = vmatprep.subr.bf16.mxu0 0
      %2301 = vmatpush1.bf16.msra.mxu0 %v2082
      %2302 = vmatprep.subr.bf16.mxu0 0
      %2303 = vmatpush1.bf16.msra.mxu0 %v2081
      %2304 = vmatprep.subr.bf16.mxu0 0
      %2305 = vmatpush1.bf16.msra.mxu0 %v2080
      %2306 = vmatprep.subr.bf16.mxu0 0
      %2307 = vmatpush1.bf16.msra.mxu0 %v2079
      %2308 = vmatprep.subr.bf16.mxu0 0
      %2309 = vmatpush1.bf16.msra.mxu0 %v2078
      %2310 = vmatprep.subr.bf16.mxu0 0
      %2311 = vmatpush1.bf16.msra.mxu0 %v2077
      %2312 = vmatprep.subr.bf16.mxu0 0
      %2313 = vmatpush1.bf16.msra.mxu0 %v2076
      %2314 = vmatprep.subr.bf16.mxu0 0
      %2315 = vmatpush1.bf16.msra.mxu0 %v2075
      %2316 = vmatprep.subr.bf16.mxu0 0
      %2317 = vmatpush2.bf16.msra.mxu0 %v2090
      %2318 = vmatprep.subr.bf16.mxu0 0
      %2319 = vmatpush2.bf16.msra.mxu0 %v2089
      %2320 = vmatprep.subr.bf16.mxu0 0
      %2321 = vmatpush2.bf16.msra.mxu0 %v2088
      %2322 = vmatprep.subr.bf16.mxu0 0
      %2323 = vmatpush2.bf16.msra.mxu0 %v2087
      %2324 = vmatprep.subr.bf16.mxu0 0
      %2325 = vmatpush2.bf16.msra.mxu0 %v2086
      %2326 = vmatprep.subr.bf16.mxu0 0
      %2327 = vmatpush2.bf16.msra.mxu0 %v2085
      %2328 = vmatprep.subr.bf16.mxu0 0
      %2329 = vmatpush2.bf16.msra.mxu0 %v2084
      %2330 = vmatprep.subr.bf16.mxu0 0
      %2331 = vmatpush2.bf16.msra.mxu0 %v2083
      %2332 = vmatprep.mubr.bf16.mxu0 %v1524
      %2333 = vmatmul.mubr.bf16.gmra.mxu0 %v1587
      %v2334 = vpop.f32.mrf.mxu0
      %v2335 = vadd.f32 %v2238, %v2334
      %v2336 = vpop.f32.mrf.mxu0
      %v2337 = vpop.f32.mrf.mxu0
      %v2338 = vadd.f32 %v2241, %v2337
      %v2339 = vpop.f32.mrf.mxu0
      %2340 = vmatprep.mubr.bf16.mxu0 %v1525
      %2341 = vmatmul.mubr.bf16.gmra.mxu0 %v1588
      %v2342 = vpop.f32.mrf.mxu0
      %v2343 = vadd.f32 %v2246, %v2342
      %v2344 = vpop.f32.mrf.mxu0
      %v2345 = vpop.f32.mrf.mxu0
      %v2346 = vadd.f32 %v2249, %v2345
      %v2347 = vpop.f32.mrf.mxu0
      %2348 = vmatprep.mubr.bf16.mxu0 %v1526
      %2349 = vmatmul.mubr.bf16.gmra.mxu0 %v1589
      %v2350 = vpop.f32.mrf.mxu0
      %v2351 = vadd.f32 %v2254, %v2350
      %v2352 = vpop.f32.mrf.mxu0
      %v2353 = vpop.f32.mrf.mxu0
      %v2354 = vadd.f32 %v2257, %v2353
      %v2355 = vpop.f32.mrf.mxu0
      %2356 = vmatprep.mubr.bf16.mxu0 %v1527
      %2357 = vmatmul.mubr.bf16.gmra.mxu0 %v1590
      %v2358 = vpop.f32.mrf.mxu0
      %v2359 = vadd.f32 %v2262, %v2358
      %v2360 = vpop.f32.mrf.mxu0
      %v2361 = vpop.f32.mrf.mxu0
      %v2362 = vadd.f32 %v2265, %v2361
      %v2363 = vpop.f32.mrf.mxu0
      %2364 = vmatprep.mubr.bf16.mxu0 %v1528
      %2365 = vmatmul.mubr.bf16.gmra.mxu0 %v1591
      %v2366 = vpop.f32.mrf.mxu0
      %v2367 = vadd.f32 %v2270, %v2366
      %v2368 = vpop.f32.mrf.mxu0
      %v2369 = vpop.f32.mrf.mxu0
      %v2370 = vadd.f32 %v2273, %v2369
      %v2371 = vpop.f32.mrf.mxu0
      %2372 = vmatprep.mubr.bf16.mxu0 %v1529
      %2373 = vmatmul.mubr.bf16.gmra.mxu0 %v1592
      %v2374 = vpop.f32.mrf.mxu0
      %v2375 = vadd.f32 %v2278, %v2374
      %v2376 = vpop.f32.mrf.mxu0
      %v2377 = vpop.f32.mrf.mxu0
      %v2378 = vadd.f32 %v2281, %v2377
      %v2379 = vpop.f32.mrf.mxu0
      %2380 = vmatprep.mubr.bf16.mxu0 %v1530
      %2381 = vmatmul.mubr.bf16.gmra.mxu0 %v1593
      %v2382 = vpop.f32.mrf.mxu0
      %v2383 = vadd.f32 %v2286, %v2382
      %v2384 = vpop.f32.mrf.mxu0
      %v2385 = vpop.f32.mrf.mxu0
      %v2386 = vadd.f32 %v2289, %v2385
      %v2387 = vpop.f32.mrf.mxu0
      %2388 = vmatprep.mubr.bf16.mxu0 %v1605
      %2389 = vmatmul.mubr.bf16.gmra.mxu0 %v1594
      %v2390 = vpop.f32.mrf.mxu0
      %v2391 = vadd.f32 %v2294, %v2390
      %v2392 = vpop.f32.mrf.mxu0
      %v2393 = vpop.f32.mrf.mxu0
      %v2394 = vadd.f32 %v2297, %v2393
      %v2395 = vpop.f32.mrf.mxu0
      %2396 = vdwg.mxu0
      %2397 = vmatprep.subr.bf16.mxu0 0
      %2398 = vmatpush1.bf16.msra.mxu0 %v2098
      %2399 = vmatprep.subr.bf16.mxu0 0
      %2400 = vmatpush1.bf16.msra.mxu0 %v2097
      %2401 = vmatprep.subr.bf16.mxu0 0
      %2402 = vmatpush1.bf16.msra.mxu0 %v2096
      %2403 = vmatprep.subr.bf16.mxu0 0
      %2404 = vmatpush1.bf16.msra.mxu0 %v2095
      %2405 = vmatprep.subr.bf16.mxu0 0
      %2406 = vmatpush1.bf16.msra.mxu0 %v2094
      %2407 = vmatprep.subr.bf16.mxu0 0
      %2408 = vmatpush1.bf16.msra.mxu0 %v2093
      %2409 = vmatprep.subr.bf16.mxu0 0
      %2410 = vmatpush1.bf16.msra.mxu0 %v2092
      %2411 = vmatprep.subr.bf16.mxu0 0
      %2412 = vmatpush1.bf16.msra.mxu0 %v2091
      %2413 = vmatprep.subr.bf16.mxu0 0
      %2414 = vmatpush2.bf16.msra.mxu0 %v2106
      %2415 = vmatprep.subr.bf16.mxu0 0
      %2416 = vmatpush2.bf16.msra.mxu0 %v2105
      %2417 = vmatprep.subr.bf16.mxu0 0
      %2418 = vmatpush2.bf16.msra.mxu0 %v2104
      %2419 = vmatprep.subr.bf16.mxu0 0
      %2420 = vmatpush2.bf16.msra.mxu0 %v2103
      %2421 = vmatprep.subr.bf16.mxu0 0
      %2422 = vmatpush2.bf16.msra.mxu0 %v2102
      %2423 = vmatprep.subr.bf16.mxu0 0
      %2424 = vmatpush2.bf16.msra.mxu0 %v2101
      %2425 = vmatprep.subr.bf16.mxu0 0
      %2426 = vmatpush2.bf16.msra.mxu0 %v2100
      %2427 = vmatprep.subr.bf16.mxu0 0
      %2428 = vmatpush2.bf16.msra.mxu0 %v2099
      %2429 = vmatprep.mubr.bf16.mxu0 %v1588
      %2430 = vmatmul.mubr.bf16.gmra.mxu0 %v1556
      %v2431 = vpop.f32.mrf.mxu0
      %v2432 = vadd.f32 %v2335, %v2431
      %v2433 = vpop.f32.mrf.mxu0
      %v2434 = vpop.f32.mrf.mxu0
      %v2435 = vadd.f32 %v2338, %v2434
      %v2436 = vpop.f32.mrf.mxu0
      %2437 = vmatprep.mubr.bf16.mxu0 %v1589
      %2438 = vmatmul.mubr.bf16.gmra.mxu0 %v1557
      %v2439 = vpop.f32.mrf.mxu0
      %v2440 = vadd.f32 %v2343, %v2439
      %v2441 = vpop.f32.mrf.mxu0
      %v2442 = vpop.f32.mrf.mxu0
      %v2443 = vadd.f32 %v2346, %v2442
      %v2444 = vpop.f32.mrf.mxu0
      %2445 = vmatprep.mubr.bf16.mxu0 %v1590
      %2446 = vmatmul.mubr.bf16.gmra.mxu0 %v1558
      %v2447 = vpop.f32.mrf.mxu0
      %v2448 = vadd.f32 %v2351, %v2447
      %v2449 = vpop.f32.mrf.mxu0
      %v2450 = vpop.f32.mrf.mxu0
      %v2451 = vadd.f32 %v2354, %v2450
      %v2452 = vpop.f32.mrf.mxu0
      %2453 = vmatprep.mubr.bf16.mxu0 %v1591
      %2454 = vmatmul.mubr.bf16.gmra.mxu0 %v1559
      %v2455 = vpop.f32.mrf.mxu0
      %v2456 = vadd.f32 %v2359, %v2455
      %v2457 = vpop.f32.mrf.mxu0
      %v2458 = vpop.f32.mrf.mxu0
      %v2459 = vadd.f32 %v2362, %v2458
      %v2460 = vpop.f32.mrf.mxu0
      %2461 = vmatprep.mubr.bf16.mxu0 %v1592
      %2462 = vmatmul.mubr.bf16.gmra.mxu0 %v1560
      %v2463 = vpop.f32.mrf.mxu0
      %v2464 = vadd.f32 %v2367, %v2463
      %v2465 = vpop.f32.mrf.mxu0
      %v2466 = vpop.f32.mrf.mxu0
      %v2467 = vadd.f32 %v2370, %v2466
      %v2468 = vpop.f32.mrf.mxu0
      %2469 = vmatprep.mubr.bf16.mxu0 %v1593
      %2470 = vmatmul.mubr.bf16.gmra.mxu0 %v1561
      %v2471 = vpop.f32.mrf.mxu0
      %v2472 = vadd.f32 %v2375, %v2471
      %v2473 = vpop.f32.mrf.mxu0
      %v2474 = vpop.f32.mrf.mxu0
      %v2475 = vadd.f32 %v2378, %v2474
      %v2476 = vpop.f32.mrf.mxu0
      %2477 = vmatprep.mubr.bf16.mxu0 %v1594
      %2478 = vmatmul.mubr.bf16.gmra.mxu0 %v1562
      %v2479 = vpop.f32.mrf.mxu0
      %v2480 = vadd.f32 %v2383, %v2479
      %v2481 = vpop.f32.mrf.mxu0
      %v2482 = vpop.f32.mrf.mxu0
      %v2483 = vadd.f32 %v2386, %v2482
      %v2484 = vpop.f32.mrf.mxu0
      %2485 = vmatprep.mubr.bf16.mxu0 %v1613
      %2486 = vmatmul.mubr.bf16.gmra.mxu0 %v1609
      %v2487 = vpop.f32.mrf.mxu0
      %v2488 = vadd.f32 %v2391, %v2487
      %v2489 = vpop.f32.mrf.mxu0
      %v2490 = vpop.f32.mrf.mxu0
      %v2491 = vadd.f32 %v2394, %v2490
      %v2492 = vpop.f32.mrf.mxu0
      %2493 = vdwg.mxu0
      %2494 = vmatprep.subr.bf16.mxu0 0
      %2495 = vmatpush1.bf16.msra.mxu0 %v2114
      %2496 = vmatprep.subr.bf16.mxu0 0
      %2497 = vmatpush1.bf16.msra.mxu0 %v2113
      %2498 = vmatprep.subr.bf16.mxu0 0
      %2499 = vmatpush1.bf16.msra.mxu0 %v2112
      %2500 = vmatprep.subr.bf16.mxu0 0
      %2501 = vmatpush1.bf16.msra.mxu0 %v2111
      %2502 = vmatprep.subr.bf16.mxu0 0
      %2503 = vmatpush1.bf16.msra.mxu0 %v2110
      %2504 = vmatprep.subr.bf16.mxu0 0
      %2505 = vmatpush1.bf16.msra.mxu0 %v2109
      %2506 = vmatprep.subr.bf16.mxu0 0
      %2507 = vmatpush1.bf16.msra.mxu0 %v2108
      %2508 = vmatprep.subr.bf16.mxu0 0
      %2509 = vmatpush1.bf16.msra.mxu0 %v2107
      %2510 = vmatprep.subr.bf16.mxu0 0
      %2511 = vmatpush2.bf16.msra.mxu0 %v2122
      %2512 = vmatprep.subr.bf16.mxu0 0
      %2513 = vmatpush2.bf16.msra.mxu0 %v2121
      %2514 = vmatprep.subr.bf16.mxu0 0
      %2515 = vmatpush2.bf16.msra.mxu0 %v2120
      %2516 = vmatprep.subr.bf16.mxu0 0
      %2517 = vmatpush2.bf16.msra.mxu0 %v2119
      %2518 = vmatprep.subr.bf16.mxu0 0
      %2519 = vmatpush2.bf16.msra.mxu0 %v2118
      %2520 = vmatprep.subr.bf16.mxu0 0
      %2521 = vmatpush2.bf16.msra.mxu0 %v2117
      %2522 = vmatprep.subr.bf16.mxu0 0
      %2523 = vmatpush2.bf16.msra.mxu0 %v2116
      %2524 = vmatprep.subr.bf16.mxu0 0
      %2525 = vmatpush2.bf16.msra.mxu0 %v2115
      %2526 = vmatprep.mubr.bf16.mxu0 %v1557
      %2527 = vmatmul.mubr.bf16.gmra.mxu0 %v1525
      %v2528 = vpop.f32.mrf.mxu0
      %v2529 = vadd.f32 %v2432, %v2528
      %v2530 = vpop.f32.mrf.mxu0
      %v2531 = vpop.f32.mrf.mxu0
      %v2532 = vadd.f32 %v2435, %v2531
      %v2533 = vpop.f32.mrf.mxu0
      %2534 = vmatprep.mubr.bf16.mxu0 %v1558
      %2535 = vmatmul.mubr.bf16.gmra.mxu0 %v1526
      %v2536 = vpop.f32.mrf.mxu0
      %v2537 = vadd.f32 %v2440, %v2536
      %v2538 = vpop.f32.mrf.mxu0
      %v2539 = vpop.f32.mrf.mxu0
      %v2540 = vadd.f32 %v2443, %v2539
      %v2541 = vpop.f32.mrf.mxu0
      %2542 = vmatprep.mubr.bf16.mxu0 %v1559
      %2543 = vmatmul.mubr.bf16.gmra.mxu0 %v1527
      %v2544 = vpop.f32.mrf.mxu0
      %v2545 = vadd.f32 %v2448, %v2544
      %v2546 = vpop.f32.mrf.mxu0
      %v2547 = vpop.f32.mrf.mxu0
      %v2548 = vadd.f32 %v2451, %v2547
      %v2549 = vpop.f32.mrf.mxu0
      %2550 = vmatprep.mubr.bf16.mxu0 %v1560
      %2551 = vmatmul.mubr.bf16.gmra.mxu0 %v1528
      %v2552 = vpop.f32.mrf.mxu0
      %v2553 = vadd.f32 %v2456, %v2552
      %v2554 = vpop.f32.mrf.mxu0
      %v2555 = vpop.f32.mrf.mxu0
      %v2556 = vadd.f32 %v2459, %v2555
      %v2557 = vpop.f32.mrf.mxu0
      %2558 = vmatprep.mubr.bf16.mxu0 %v1561
      %2559 = vmatmul.mubr.bf16.gmra.mxu0 %v1529
      %v2560 = vpop.f32.mrf.mxu0
      %v2561 = vadd.f32 %v2464, %v2560
      %v2562 = vpop.f32.mrf.mxu0
      %v2563 = vpop.f32.mrf.mxu0
      %v2564 = vadd.f32 %v2467, %v2563
      %v2565 = vpop.f32.mrf.mxu0
      %2566 = vmatprep.mubr.bf16.mxu0 %v1562
      %2567 = vmatmul.mubr.bf16.gmra.mxu0 %v1530
      %v2568 = vpop.f32.mrf.mxu0
      %v2569 = vadd.f32 %v2472, %v2568
      %v2570 = vpop.f32.mrf.mxu0
      %v2571 = vpop.f32.mrf.mxu0
      %v2572 = vadd.f32 %v2475, %v2571
      %v2573 = vpop.f32.mrf.mxu0
      %2574 = vmatprep.mubr.bf16.mxu0 %v1609
      %2575 = vmatmul.mubr.bf16.gmra.mxu0 %v1605
      %v2576 = vpop.f32.mrf.mxu0
      %v2577 = vadd.f32 %v2480, %v2576
      %v2578 = vpop.f32.mrf.mxu0
      %v2579 = vpop.f32.mrf.mxu0
      %v2580 = vadd.f32 %v2483, %v2579
      %v2581 = vpop.f32.mrf.mxu0
      %2582 = vmatprep.mubr.bf16.mxu0 %v1621
      %2583 = vmatmul.mubr.bf16.gmra.mxu0 %v1617
      %v2584 = vpop.f32.mrf.mxu0
      %v2585 = vadd.f32 %v2488, %v2584
      %v2586 = vpop.f32.mrf.mxu0
      %v2587 = vpop.f32.mrf.mxu0
      %v2588 = vadd.f32 %v2491, %v2587
      %v2589 = vpop.f32.mrf.mxu0
      %2590 = vdwg.mxu0
      %2591 = vmatprep.subr.bf16.mxu0 0
      %2592 = vmatpush1.bf16.msra.mxu0 %v2130
      %2593 = vmatprep.subr.bf16.mxu0 0
      %2594 = vmatpush1.bf16.msra.mxu0 %v2129
      %2595 = vmatprep.subr.bf16.mxu0 0
      %2596 = vmatpush1.bf16.msra.mxu0 %v2128
      %2597 = vmatprep.subr.bf16.mxu0 0
      %2598 = vmatpush1.bf16.msra.mxu0 %v2127
      %2599 = vmatprep.subr.bf16.mxu0 0
      %2600 = vmatpush1.bf16.msra.mxu0 %v2126
      %2601 = vmatprep.subr.bf16.mxu0 0
      %2602 = vmatpush1.bf16.msra.mxu0 %v2125
      %2603 = vmatprep.subr.bf16.mxu0 0
      %2604 = vmatpush1.bf16.msra.mxu0 %v2124
      %2605 = vmatprep.subr.bf16.mxu0 0
      %2606 = vmatpush1.bf16.msra.mxu0 %v2123
      %2607 = vmatprep.subr.bf16.mxu0 0
      %2608 = vmatpush2.bf16.msra.mxu0 0
      %2609 = vmatprep.subr.bf16.mxu0 0
      %2610 = vmatpush2.bf16.msra.mxu0 0
      %2611 = vmatprep.subr.bf16.mxu0 0
      %2612 = vmatpush2.bf16.msra.mxu0 0
      %2613 = vmatprep.subr.bf16.mxu0 0
      %2614 = vmatpush2.bf16.msra.mxu0 0
      %2615 = vmatprep.subr.bf16.mxu0 0
      %2616 = vmatpush2.bf16.msra.mxu0 0
      %2617 = vmatprep.subr.bf16.mxu0 0
      %2618 = vmatpush2.bf16.msra.mxu0 0
      %2619 = vmatprep.subr.bf16.mxu0 0
      %2620 = vmatpush2.bf16.msra.mxu0 0
      %2621 = vmatprep.subr.bf16.mxu0 0
      %2622 = vmatpush2.bf16.msra.mxu0 0
      %2623 = vmatprep.mubr.bf16.mxu0 0
      %2624 = vmatmul.mubr.bf16.gmra.mxu0 %v1589
      %v2625 = vpop.f32.mrf.mxu0
      %v2626 = vadd.f32 %v2529, %v2625
      %v2627 = vpop.f32.mrf.mxu0
      %v2628 = vpop.f32.mrf.mxu0
      %v2629 = vadd.f32 %v2532, %v2628
      %v2630 = vpop.f32.mrf.mxu0
      %2631 = vmatprep.mubr.bf16.mxu0 0
      %2632 = vmatmul.mubr.bf16.gmra.mxu0 %v1590
      %v2633 = vpop.f32.mrf.mxu0
      %v2634 = vadd.f32 %v2537, %v2633
      %v2635 = vpop.f32.mrf.mxu0
      %v2636 = vpop.f32.mrf.mxu0
      %v2637 = vadd.f32 %v2540, %v2636
      %v2638 = vpop.f32.mrf.mxu0
      %2639 = vmatprep.mubr.bf16.mxu0 0
      %2640 = vmatmul.mubr.bf16.gmra.mxu0 %v1591
      %v2641 = vpop.f32.mrf.mxu0
      %v2642 = vadd.f32 %v2545, %v2641
      %v2643 = vpop.f32.mrf.mxu0
      %v2644 = vpop.f32.mrf.mxu0
      %v2645 = vadd.f32 %v2548, %v2644
      %v2646 = vpop.f32.mrf.mxu0
      %2647 = vmatprep.mubr.bf16.mxu0 0
      %2648 = vmatmul.mubr.bf16.gmra.mxu0 %v1592
      %v2649 = vpop.f32.mrf.mxu0
      %v2650 = vadd.f32 %v2553, %v2649
      %v2651 = vpop.f32.mrf.mxu0
      %v2652 = vpop.f32.mrf.mxu0
      %v2653 = vadd.f32 %v2556, %v2652
      %v2654 = vpop.f32.mrf.mxu0
      %2655 = vmatprep.mubr.bf16.mxu0 0
      %2656 = vmatmul.mubr.bf16.gmra.mxu0 %v1593
      %v2657 = vpop.f32.mrf.mxu0
      %v2658 = vadd.f32 %v2561, %v2657
      %v2659 = vpop.f32.mrf.mxu0
      %v2660 = vpop.f32.mrf.mxu0
      %v2661 = vadd.f32 %v2564, %v2660
      %v2662 = vpop.f32.mrf.mxu0
      %2663 = vmatprep.mubr.bf16.mxu0 0
      %2664 = vmatmul.mubr.bf16.gmra.mxu0 %v1594
      %v2665 = vpop.f32.mrf.mxu0
      %v2666 = vadd.f32 %v2569, %v2665
      %v2667 = vpop.f32.mrf.mxu0
      %v2668 = vpop.f32.mrf.mxu0
      %v2669 = vadd.f32 %v2572, %v2668
      %v2670 = vpop.f32.mrf.mxu0
      %2671 = vmatprep.mubr.bf16.mxu0 0
      %2672 = vmatmul.mubr.bf16.gmra.mxu0 %v1613
      %v2673 = vpop.f32.mrf.mxu0
      %v2674 = vadd.f32 %v2577, %v2673
      %v2675 = vpop.f32.mrf.mxu0
      %v2676 = vpop.f32.mrf.mxu0
      %v2677 = vadd.f32 %v2580, %v2676
      %v2678 = vpop.f32.mrf.mxu0
      %2679 = vmatprep.mubr.bf16.mxu0 0
      %2680 = vmatmul.mubr.bf16.gmra.mxu0 %v1625
      %v2681 = vpop.f32.mrf.mxu0
      %v2682 = vadd.f32 %v2585, %v2681
      %v2683 = vpop.f32.mrf.mxu0
      %v2684 = vpop.f32.mrf.mxu0
      %v2685 = vadd.f32 %v2588, %v2684
      %v2686 = vpop.f32.mrf.mxu0
      %2687 = vdwg.mxu0
      %v2688 = vld [vmem:[%s4] sm:$0x1]
      %v2690 = vlaneseq
      %v2691 = vshrl.u32 %v2690, 7
      %v2692 = vsub.s32 0, %v2691
      %v2693 = vrot.slane %v2688, %v2692
      %v2695 = vmul.f32 %v2626, %v2693
      %v2696 = vmul.f32 %v2629, %v2693
      %v2697 = vmul.f32 %v2634, %v2693
      %v2698 = vmul.f32 %v2637, %v2693
      %v2699 = vmul.f32 %v2642, %v2693
      %v2700 = vmul.f32 %v2645, %v2693
      %v2701 = vmul.f32 %v2650, %v2693
      %v2702 = vmul.f32 %v2653, %v2693
      %v2703 = vmul.f32 %v2658, %v2693
      %v2704 = vmul.f32 %v2661, %v2693
      %v2705 = vmul.f32 %v2666, %v2693
      %v2706 = vmul.f32 %v2669, %v2693
      %v2707 = vmul.f32 %v2674, %v2693
      %v2708 = vmul.f32 %v2677, %v2693
      %v2709 = vmul.f32 %v2682, %v2693
      %v2710 = vmul.f32 %v2685, %v2693
      %v2711 = vld [vmem:[%s5] sm:$0x1]
      %v2713 = vlaneseq
      %v2714 = vshrl.u32 %v2713, 7
      %v2715 = vsub.s32 0, %v2714
      %v2716 = vrot.slane %v2711, %v2715
      %v2718 = vadd.f32 %v2695, %v2716
      %v2719 = vadd.f32 %v2696, %v2716
      %v2720 = vadd.f32 %v2697, %v2716
      %v2721 = vadd.f32 %v2698, %v2716
      %v2722 = vadd.f32 %v2699, %v2716
      %v2723 = vadd.f32 %v2700, %v2716
      %v2724 = vadd.f32 %v2701, %v2716
      %v2725 = vadd.f32 %v2702, %v2716
      %v2726 = vadd.f32 %v2703, %v2716
      %v2727 = vadd.f32 %v2704, %v2716
      %v2728 = vadd.f32 %v2705, %v2716
      %v2729 = vadd.f32 %v2706, %v2716
      %v2730 = vadd.f32 %v2707, %v2716
      %v2731 = vadd.f32 %v2708, %v2716
      %v2732 = vadd.f32 %v2709, %v2716
      %v2733 = vadd.f32 %v2710, %v2716
      %v2734 = vmax.f32 %v2718, 0.0
      %v2735 = vmax.f32 %v2719, 0.0
      %v2736 = vmax.f32 %v2720, 0.0
      %v2737 = vmax.f32 %v2721, 0.0
      %v2738 = vmax.f32 %v2722, 0.0
      %v2739 = vmax.f32 %v2723, 0.0
      %v2740 = vmax.f32 %v2724, 0.0
      %v2741 = vmax.f32 %v2725, 0.0
      %v2742 = vmax.f32 %v2726, 0.0
      %v2743 = vmax.f32 %v2727, 0.0
      %v2744 = vmax.f32 %v2728, 0.0
      %v2745 = vmax.f32 %v2729, 0.0
      %v2746 = vmax.f32 %v2730, 0.0
      %v2747 = vmax.f32 %v2731, 0.0
      %v2748 = vmax.f32 %v2732, 0.0
      %v2749 = vmax.f32 %v2733, 0.0
      %v2750 = vpack.c.bf16 %v2735, %v2734
      %v2751 = vpack.c.bf16 %v2737, %v2736
      %v2752 = vpack.c.bf16 %v2739, %v2738
      %v2753 = vpack.c.bf16 %v2741, %v2740
      %v2754 = vpack.c.bf16 %v2743, %v2742
      %v2755 = vpack.c.bf16 %v2745, %v2744
      %v2756 = vpack.c.bf16 %v2747, %v2746
      %v2757 = vpack.c.bf16 %v2749, %v2748
      %v2766 = vunpack.c.l.b16 %v2750
      %v2767 = vunpack.c.h.b16 %v2750
      %v2768 = vunpack.c.l.b16 %v2751
      %v2769 = vunpack.c.h.b16 %v2751
      %v2770 = vunpack.c.l.b16 %v2752
      %v2771 = vunpack.c.h.b16 %v2752
      %v2772 = vunpack.c.l.b16 %v2753
      %v2773 = vunpack.c.h.b16 %v2753
      %v2774 = vunpack.c.l.b16 %v2754
      %v2775 = vunpack.c.h.b16 %v2754
      %v2776 = vunpack.c.l.b16 %v2755
      %v2777 = vunpack.c.h.b16 %v2755
      %v2778 = vunpack.c.l.b16 %v2756
      %v2779 = vunpack.c.h.b16 %v2756
      %v2780 = vunpack.c.l.b16 %v2757
      %v2781 = vunpack.c.h.b16 %v2757
      %v2782 = vpack.c.b16 %v2766, %v2766
      %v2783 = vpack.c.b16 %v2767, %v2767
      %v2784 = vpack.c.b16 %v2768, %v2768
      %v2785 = vpack.c.b16 %v2769, %v2769
      %v2786 = vpack.c.b16 %v2770, %v2770
      %v2787 = vpack.c.b16 %v2771, %v2771
      %v2788 = vpack.c.b16 %v2772, %v2772
      %v2789 = vpack.c.b16 %v2773, %v2773
      %v2790 = vpack.c.b16 %v2774, %v2774
      %v2791 = vpack.c.b16 %v2775, %v2775
      %v2792 = vpack.c.b16 %v2776, %v2776
      %v2793 = vpack.c.b16 %v2777, %v2777
      %v2794 = vpack.c.b16 %v2778, %v2778
      %v2795 = vpack.c.b16 %v2779, %v2779
      %v2796 = vpack.c.b16 %v2780, %v2780
      %v2797 = vpack.c.b16 %v2781, %v2781
      %2814 = vst [vmem:[%s344] sm:$0xf] %v2782
      %2815 = vst [vmem:[%s344 + $0x4] sm:$0xf] %v2783
      %2816 = vst [vmem:[%s344 + $0x8] sm:$0xf] %v2784
      %2817 = vst [vmem:[%s344 + $0xc] sm:$0xf] %v2785
      %2818 = vst [vmem:[%s344 + $0x10] sm:$0xf] %v2786
      %2819 = vst [vmem:[%s344 + $0x14] sm:$0xf] %v2787
      %2820 = vst [vmem:[%s344 + $0x18] sm:$0xf] %v2788
      %2821 = vst [vmem:[%s344 + $0x1c] sm:$0xf] %v2789
      %2822 = vst [vmem:[%s344 + $0x20] sm:$0xf] %v2790
      %2823 = vst [vmem:[%s344 + $0x24] sm:$0xf] %v2791
      %2824 = vst [vmem:[%s344 + $0x28] sm:$0xf] %v2792
      %2825 = vst [vmem:[%s344 + $0x2c] sm:$0xf] %v2793
      %2826 = vst [vmem:[%s344 + $0x30] sm:$0xf] %v2794
      %2827 = vst [vmem:[%s344 + $0x34] sm:$0xf] %v2795
      %2828 = vst [vmem:[%s344 + $0x38] sm:$0xf] %v2796
      %2829 = vst [vmem:[%s344 + $0x3c] sm:$0xf] %v2797
      %v2830 = vld [vmem:[%s6] sm:$0xf]
      %v2831 = vld [vmem:[%s6 + $0x4] sm:$0xf]
      %v2832 = vld [vmem:[%s6 + $0x8] sm:$0xf]
      %v2833 = vld [vmem:[%s6 + $0xc] sm:$0xf]
      %v2834 = vld [vmem:[%s6 + $0x10] sm:$0xf]
      %v2835 = vld [vmem:[%s6 + $0x14] sm:$0xf]
      %v2836 = vld [vmem:[%s6 + $0x18] sm:$0xf]
      %v2837 = vld [vmem:[%s6 + $0x1c] sm:$0xf]
      %v2838 = vld [vmem:[%s6 + $0x20] sm:$0xf]
      %v2839 = vld [vmem:[%s6 + $0x24] sm:$0xf]
      %v2840 = vld [vmem:[%s6 + $0x28] sm:$0xf]
      %v2841 = vld [vmem:[%s6 + $0x2c] sm:$0xf]
      %v2842 = vld [vmem:[%s6 + $0x30] sm:$0xf]
      %v2843 = vld [vmem:[%s6 + $0x34] sm:$0xf]
      %v2844 = vld [vmem:[%s6 + $0x38] sm:$0xf]
      %v2845 = vld [vmem:[%s6 + $0x3c] sm:$0xf]
      %v2862 = vunpack.c.l.b16 %v2830
      %v2863 = vunpack.c.l.b16 %v2831
      %v2864 = vunpack.c.l.b16 %v2832
      %v2865 = vunpack.c.l.b16 %v2833
      %v2866 = vunpack.c.l.b16 %v2834
      %v2867 = vunpack.c.l.b16 %v2835
      %v2868 = vunpack.c.l.b16 %v2836
      %v2869 = vunpack.c.l.b16 %v2837
      %v2870 = vunpack.c.l.b16 %v2838
      %v2871 = vunpack.c.l.b16 %v2839
      %v2872 = vunpack.c.l.b16 %v2840
      %v2873 = vunpack.c.l.b16 %v2841
      %v2874 = vunpack.c.l.b16 %v2842
      %v2875 = vunpack.c.l.b16 %v2843
      %v2876 = vunpack.c.l.b16 %v2844
      %v2877 = vunpack.c.l.b16 %v2845
      %v2878 = vpack.c.b16 %v2863, %v2862
      %v2879 = vpack.c.b16 %v2865, %v2864
      %v2880 = vpack.c.b16 %v2867, %v2866
      %v2881 = vpack.c.b16 %v2869, %v2868
      %v2882 = vpack.c.b16 %v2871, %v2870
      %v2883 = vpack.c.b16 %v2873, %v2872
      %v2884 = vpack.c.b16 %v2875, %v2874
      %v2885 = vpack.c.b16 %v2877, %v2876
      %2894 = vmatprep.subr.bf16.mxu0 0
      %2895 = vmatpush1.bf16.msra.mxu0 %v2885
      %2896 = vmatprep.subr.bf16.mxu0 0
      %2897 = vmatpush1.bf16.msra.mxu0 %v2884
      %2898 = vmatprep.subr.bf16.mxu0 0
      %2899 = vmatpush1.bf16.msra.mxu0 %v2883
      %2900 = vmatprep.subr.bf16.mxu0 0
      %2901 = vmatpush1.bf16.msra.mxu0 %v2882
      %2902 = vmatprep.subr.bf16.mxu0 0
      %2903 = vmatpush1.bf16.msra.mxu0 %v2881
      %2904 = vmatprep.subr.bf16.mxu0 0
      %2905 = vmatpush1.bf16.msra.mxu0 %v2880
      %2906 = vmatprep.subr.bf16.mxu0 0
      %2907 = vmatpush1.bf16.msra.mxu0 %v2879
      %2908 = vmatprep.subr.bf16.mxu0 0
      %2909 = vmatpush1.bf16.msra.mxu0 %v2878
      %2910 = vmatprep.subr.bf16.mxu0 0
      %2911 = vmatpush2.bf16.msra.mxu0 0
      %2912 = vmatprep.subr.bf16.mxu0 0
      %2913 = vmatpush2.bf16.msra.mxu0 0
      %2914 = vmatprep.subr.bf16.mxu0 0
      %2915 = vmatpush2.bf16.msra.mxu0 0
      %2916 = vmatprep.subr.bf16.mxu0 0
      %2917 = vmatpush2.bf16.msra.mxu0 0
      %2918 = vmatprep.subr.bf16.mxu0 0
      %2919 = vmatpush2.bf16.msra.mxu0 0
      %2920 = vmatprep.subr.bf16.mxu0 0
      %2921 = vmatpush2.bf16.msra.mxu0 0
      %2922 = vmatprep.subr.bf16.mxu0 0
      %2923 = vmatpush2.bf16.msra.mxu0 0
      %2924 = vmatprep.subr.bf16.mxu0 0
      %2925 = vmatpush2.bf16.msra.mxu0 0
      %2926 = vmatprep.mubr.bf16.mxu0 0
      %2927 = vmatmul.mubr.bf16.gmra.mxu0 %v1556
      %v2928 = vpop.f32.mrf.mxu0
      %v2929 = vadd.f32 0.0, %v2928
      %v2930 = vpop.f32.mrf.mxu0
      %v2931 = vpop.f32.mrf.mxu0
      %v2932 = vadd.f32 0.0, %v2931
      %v2933 = vpop.f32.mrf.mxu0
      %2934 = vmatprep.mubr.bf16.mxu0 0
      %2935 = vmatmul.mubr.bf16.gmra.mxu0 %v1557
      %v2936 = vpop.f32.mrf.mxu0
      %v2937 = vadd.f32 0.0, %v2936
      %v2938 = vpop.f32.mrf.mxu0
      %v2939 = vpop.f32.mrf.mxu0
      %v2940 = vadd.f32 0.0, %v2939
      %v2941 = vpop.f32.mrf.mxu0
      %2942 = vmatprep.mubr.bf16.mxu0 0
      %2943 = vmatmul.mubr.bf16.gmra.mxu0 %v1558
      %v2944 = vpop.f32.mrf.mxu0
      %v2945 = vadd.f32 0.0, %v2944
      %v2946 = vpop.f32.mrf.mxu0
      %v2947 = vpop.f32.mrf.mxu0
      %v2948 = vadd.f32 0.0, %v2947
      %v2949 = vpop.f32.mrf.mxu0
      %2950 = vmatprep.mubr.bf16.mxu0 0
      %2951 = vmatmul.mubr.bf16.gmra.mxu0 %v1559
      %v2952 = vpop.f32.mrf.mxu0
      %v2953 = vadd.f32 0.0, %v2952
      %v2954 = vpop.f32.mrf.mxu0
      %v2955 = vpop.f32.mrf.mxu0
      %v2956 = vadd.f32 0.0, %v2955
      %v2957 = vpop.f32.mrf.mxu0
      %2958 = vmatprep.mubr.bf16.mxu0 0
      %2959 = vmatmul.mubr.bf16.gmra.mxu0 %v1560
      %v2960 = vpop.f32.mrf.mxu0
      %v2961 = vadd.f32 0.0, %v2960
      %v2962 = vpop.f32.mrf.mxu0
      %v2963 = vpop.f32.mrf.mxu0
      %v2964 = vadd.f32 0.0, %v2963
      %v2965 = vpop.f32.mrf.mxu0
      %2966 = vmatprep.mubr.bf16.mxu0 0
      %2967 = vmatmul.mubr.bf16.gmra.mxu0 %v1561
      %v2968 = vpop.f32.mrf.mxu0
      %v2969 = vadd.f32 0.0, %v2968
      %v2970 = vpop.f32.mrf.mxu0
      %v2971 = vpop.f32.mrf.mxu0
      %v2972 = vadd.f32 0.0, %v2971
      %v2973 = vpop.f32.mrf.mxu0
      %2974 = vmatprep.mubr.bf16.mxu0 0
      %2975 = vmatmul.mubr.bf16.gmra.mxu0 %v1562
      %v2976 = vpop.f32.mrf.mxu0
      %v2977 = vadd.f32 0.0, %v2976
      %v2978 = vpop.f32.mrf.mxu0
      %v2979 = vpop.f32.mrf.mxu0
      %v2980 = vadd.f32 0.0, %v2979
      %v2981 = vpop.f32.mrf.mxu0
      %2982 = vmatprep.mubr.bf16.mxu0 0
      %2983 = vmatmul.mubr.bf16.gmra.mxu0 %v1609
      %v2984 = vpop.f32.mrf.mxu0
      %v2985 = vadd.f32 0.0, %v2984
      %v2986 = vpop.f32.mrf.mxu0
      %v2987 = vpop.f32.mrf.mxu0
      %v2988 = vadd.f32 0.0, %v2987
      %v2989 = vpop.f32.mrf.mxu0
      %2990 = vdwg.mxu0
      %2991 = vst [vmem:[%s355] sm:$0xff] %v2929
      %2992 = vst [vmem:[%s355 + $0x8] sm:$0xff] %v2932
      %2993 = vst [vmem:[%s355 + $0x10] sm:$0xff] %v2937
      %2994 = vst [vmem:[%s355 + $0x18] sm:$0xff] %v2940
      %2995 = vst [vmem:[%s355 + $0x20] sm:$0xff] %v2945
      %2996 = vst [vmem:[%s355 + $0x28] sm:$0xff] %v2948
      %2997 = vst [vmem:[%s355 + $0x30] sm:$0xff] %v2953
      %2998 = vst [vmem:[%s355 + $0x38] sm:$0xff] %v2956
      %2999 = vst [vmem:[%s355 + $0x40] sm:$0xff] %v2961
      %3000 = vst [vmem:[%s355 + $0x48] sm:$0xff] %v2964
      %3001 = vst [vmem:[%s355 + $0x50] sm:$0xff] %v2969
      %3002 = vst [vmem:[%s355 + $0x58] sm:$0xff] %v2972
      %3003 = vst [vmem:[%s355 + $0x60] sm:$0xff] %v2977
      %3004 = vst [vmem:[%s355 + $0x68] sm:$0xff] %v2980
      %3005 = vst [vmem:[%s355 + $0x70] sm:$0xff] %v2985
      %3006 = vst [vmem:[%s355 + $0x78] sm:$0xff] %v2988
      %s3007 = smul.u32 8, %s25
      %p3008 = scmp.lt.s32.totalorder %s24, 1
      %s3009 = scalar_select %p3008, %s24, 1
      %p3010 = scmp.lt.s32.totalorder %s3007, 15
      %s3011 = scalar_select %p3010, %s3007, 15
      %s3012 = smul.addr %s3011, 2
      %s3013 = smul.addr %s3009, 32
      %s3014 = sadd.s32 %s3012, %s3013
      %s3015 = smul.addr %s3014, 4
      %s3016 = scalar_lea.vmem %s7, %s3015
      %s3017 = smul.u32 8, %s25
      %p3018 = scmp.lt.s32.totalorder %s24, 1
      %s3019 = scalar_select %p3018, %s24, 1
      %p3020 = scmp.lt.s32.totalorder %s3017, 15
      %s3021 = scalar_select %p3020, %s3017, 15
      %s3022 = smul.addr %s3021, 2
      %s3023 = smul.addr %s3019, 32
      %s3024 = sadd.s32 %s3022, %s3023
      %s3025 = smul.addr %s3024, 8
      %s3026 = scalar_lea.vmem %s8, %s3025
      // Predicated region
      $region53: #{basic_block_forward.2} parent=47 // pred_check
        %p3027 = pneg %p204
      $region54: #{basic_block_forward.2} parent=47 // pred_check_branch
        %3029 = sbr.rel (%p3027) target = $region56
      $region55: #{basic_block_forward.2} parent=47 // pred_region
        %s3030 = smul.u32 8, %s25
      $region56: #{basic_block_forward.2} parent=47 // pred_fallthru
        _
      // Predicated region
      $region57: #{basic_block_forward.2} parent=47 // pred_check
        %p3031 = pneg %p232
      $region58: #{basic_block_forward.2} parent=47 // pred_check_branch
        %3033 = sbr.rel (%p3031) target = $region60
      $region59: #{basic_block_forward.2} parent=47 // pred_region
        %s3034 = smul.u32 8, %s25
      $region60: #{basic_block_forward.2} parent=47 // pred_fallthru
        _
    $region48: #{basic_block_forward.2} parent=5 // pred_fallthru
      _
    %p3035 = scmp.le.s32.totalorder 2, %s15
    // Predicated region
    $region61: #{basic_block_forward.2} parent=5 // pred_check
      %p3036 = pneg %p3035
    $region62: #{basic_block_forward.2} parent=5 // pred_check_branch
      %3038 = sbr.rel (%p3036) target = $region64
    $region63: #{basic_block_forward.2} parent=5 // pred_region
      %s3039 = ssub.s32 %s15, 2
      // Predicated region
      $region65: #{basic_block_forward.2} parent=63 // pred_check
        %p3040 = pneg %p210
      $region66: #{basic_block_forward.2} parent=63 // pred_check_branch
        %3042 = sbr.rel (%p3040) target = $region68
      $region67: #{basic_block_forward.2} parent=63 // pred_region
        %s3043 = smul.u32 8, %s27
        %p3044 = scmp.lt.s32.totalorder %s26, 1
        %s3045 = scalar_select %p3044, %s26, 1
        %p3046 = scmp.lt.s32.totalorder %s3043, 15
        %s3047 = scalar_select %p3046, %s3043, 15
        %s3048 = smul.addr %s3047, 2
        %s3049 = smul.addr %s3045, 32
        %s3050 = sadd.s32 %s3048, %s3049
        %s3051 = smul.addr %s3050, 4
        %s3052 = scalar_lea.vmem %s7, %s3051
      $region68: #{basic_block_forward.2} parent=63 // pred_fallthru
        _
      // Predicated region
      $region69: #{basic_block_forward.2} parent=63 // pred_check
        %p3053 = pneg %p238
      $region70: #{basic_block_forward.2} parent=63 // pred_check_branch
        %3055 = sbr.rel (%p3053) target = $region72
      $region71: #{basic_block_forward.2} parent=63 // pred_region
        %s3056 = smul.u32 8, %s27
        %p3057 = scmp.lt.s32.totalorder %s26, 1
        %s3058 = scalar_select %p3057, %s26, 1
        %p3059 = scmp.lt.s32.totalorder %s3056, 15
        %s3060 = scalar_select %p3059, %s3056, 15
        %s3061 = smul.addr %s3060, 2
        %s3062 = smul.addr %s3058, 32
        %s3063 = sadd.s32 %s3061, %s3062
        %s3064 = smul.addr %s3063, 8
        %s3065 = scalar_lea.vmem %s8, %s3064
      $region72: #{basic_block_forward.2} parent=63 // pred_fallthru
        _
    $region64: #{basic_block_forward.2} parent=5 // pred_fallthru
      _
  $region6: #{basic_block_forward.2} parent=0 // loop_footer
    %s19 = sadd.s32 1, %s15
  $region7: #{basic_block_forward.2} parent=0 // loop_footer_branch
    %14 = sbr.rel target = $region3
  $region8: #{basic_block_forward.2} parent=0 // loop_exit
    _

</llo_original>
